<compile_context>
chip_gen: v7x
topology: tpu7x:2x2x1
jax: 0.10.0
libtpu: 0.0.40
codegen_flags: <defaults>
</compile_context>

<pallas_src>
import math

import jax
import jax.numpy as jnp
from jax import lax
from jax.experimental import pallas as pl
from jax.experimental.pallas import tpu as pltpu


def relation_kernel(fa_ref, gate_ref, w_ref, b_ref, out_ref):
    """One grid step = one box-set: all Nr relation units for all N boxes.

    fa_ref   : (N, D)          f32   appearance features (D == Nr*K)
    gate_ref : (Nr, N, N)      f32   log(clamp(relu(WG(pos)), 1e-6)) per relation
    w_ref    : (D, 3*Nr*K)     bf16  fused [WK_0..WK_{Nr-1} | WQ_* | WV_*]
                                     (WK columns pre-scaled by 1/sqrt(K))
    b_ref    : (1, 3*Nr*K)     f32   fused biases (same column ordering, bk scaled)
    out_ref  : (N, Nr*K)       f32   concat(relation outputs) + f_a
    """
    Nr = gate_ref.shape[0]
    N, D = fa_ref.shape
    K = D // Nr

    fa = fa_ref[...]                                   # (N, D) f32 (residual source)

    # One wide MXU matmul for every K/Q/V projection of every relation,
    # f32 accumulation + f32 bias add, then a single bf16 cast.
    proj = jnp.dot(fa.astype(jnp.bfloat16), w_ref[...],
                   preferred_element_type=jnp.float32) + b_ref[...]   # (N, 3*Nr*K) f32
    proj_bf16 = proj.astype(jnp.bfloat16)

    for r in range(Nr):  # static unroll; Nr is small
        wk = proj_bf16[:, r * K:(r + 1) * K]                       # (N, K), already /sqrt(K)
        wq = proj_bf16[:, (Nr + r) * K:(Nr + r + 1) * K]           # (N, K)
        wv = proj_bf16[:, (2 * Nr + r) * K:(2 * Nr + r + 1) * K]   # (N, K)

        # scaled dot product: contract on K, no materialized transpose.
        s = lax.dot_general(
            wk, wq,
            dimension_numbers=(((1,), (1,)), ((), ())),
            preferred_element_type=jnp.float32)                    # (N, N)

        logits = gate_ref[r] + s                                   # (N, N) f32

        # Row softmax (dim=1); exact reciprocal for the denominator.
        m = jnp.max(logits, axis=1, keepdims=True)
        e = jnp.exp(logits - m)
        p = e * pl.reciprocal(jnp.sum(e, axis=1, keepdims=True), approx=False)

        attn = jnp.dot(p.astype(jnp.bfloat16), wv,
                       preferred_element_type=jnp.float32)         # (N, K)

        # residual: relation r owns columns [r*K, (r+1)*K) of f_a.
        out_ref[:, r * K:(r + 1) * K] = attn + fa[:, r * K:(r + 1) * K]


def relation_module(f_a, pos_emb, params):
    """f_a: (N, D) or (B, N, D); pos_emb: (N, N, G) or (B, N, N, G)."""
    squeeze_batch = False
    if f_a.ndim == 2:
        f_a = f_a[None]
        pos_emb = pos_emb[None]
        squeeze_batch = True

    B, N, D = f_a.shape
    Nr, _, K = params["wk"].shape
    G = pos_emb.shape[-1]
    assert Nr * K == D, "appearance dim must equal n_relations * key_dim"

    # ---- wrapper-side prep (layout plumbing) ------------------------------
    # Geometry gate: one (B*N*N, G) @ (G, Nr) matmul for ALL relations, then
    # relu -> clamp(1e-6) -> log, laid out as (B, Nr, N, N).
    wg_mat = params["wg"].reshape(Nr, G).T                          # (G, Nr)
    bg_vec = params["bg"].reshape(1, Nr)                            # (1, Nr)
    g = pos_emb.reshape(-1, G) @ wg_mat + bg_vec                    # (B*N*N, Nr)
    log_gate = jnp.log(jnp.maximum(g, 1e-6))                        # relu+clamp then log
    log_gate = (log_gate.reshape(B, N, N, Nr)
                .transpose(0, 3, 1, 2).astype(jnp.float32))         # (B, Nr, N, N)

    # Fused K/Q/V weights: (D, 3*Nr*K) bf16, biases (1, 3*Nr*K) f32.
    # 1/sqrt(K) is folded into the WK columns and bk.
    inv_sqrt_k = jnp.float32(1.0 / math.sqrt(K))
    w_all = jnp.concatenate(
        [params["wk"] * inv_sqrt_k, params["wq"], params["wv"]], axis=0)   # (3Nr, D, K)
    w_all = jnp.transpose(w_all, (1, 0, 2)).reshape(D, 3 * Nr * K).astype(jnp.bfloat16)
    b_all = jnp.concatenate(
        [params["bk"] * inv_sqrt_k, params["bq"], params["bv"]],
        axis=0).reshape(1, 3 * Nr * K).astype(jnp.float32)

    # Advisory cost estimate so XLA schedules the gate-prep matmul vs the call.
    flops_per = 2 * N * D * (3 * Nr * K) + Nr * 4 * N * N * K
    cost = pl.CostEstimate(
        flops=B * flops_per,
        transcendentals=B * Nr * N * N,
        bytes_accessed=(B * N * D * 4            # f_a
                        + B * Nr * N * N * 4     # log-gate
                        + B * N * D * 4          # out
                        + D * 3 * Nr * K * 2     # fused weights (bf16)
                        + 3 * Nr * K * 4))       # fused biases

    out = pl.pallas_call(
        relation_kernel,
        out_shape=jax.ShapeDtypeStruct((B, N, Nr * K), jnp.float32),
        grid_spec=pltpu.PrefetchScalarGridSpec(
            num_scalar_prefetch=0,
            grid=(B,),  # one step per box-set; weights stay VMEM-resident
            in_specs=[
                pl.BlockSpec((None, N, D), lambda b: (b, 0, 0)),            # f_a
                pl.BlockSpec((None, Nr, N, N), lambda b: (b, 0, 0, 0)),     # log-gate
                pl.BlockSpec((D, 3 * Nr * K), lambda b: (0, 0)),            # fused weights
                pl.BlockSpec((1, 3 * Nr * K), lambda b: (0, 0)),            # fused biases
            ],
            out_specs=pl.BlockSpec((None, N, Nr * K), lambda b: (b, 0, 0)),
        ),
        compiler_params=pltpu.CompilerParams(
            dimension_semantics=("parallel",)),   # shards across TCs on v7x
        cost_estimate=cost,
    )(f_a, log_gate, w_all, b_all)

    return out[0] if squeeze_batch else out


def relation_module_ref(f_a, pos_emb, params):
    """Pure-JAX (f32) reference mirroring the PyTorch forward (unbatched)."""
    N, D = f_a.shape
    Nr, _, K = params["wk"].shape
    outs = []
    for r in range(Nr):
        g = jnp.sum(pos_emb * params["wg"][r], axis=-1) + params["bg"][r, 0, 0]
        g = jnp.maximum(g, 0.0)                       # relu
        g = jnp.log(jnp.maximum(g, 1e-6))             # clamp(min=1e-6) then log
        wk = f_a @ params["wk"][r] + params["bk"][r, 0]
        wq = f_a @ params["wq"][r] + params["bq"][r, 0]
        wv = f_a @ params["wv"][r] + params["bv"][r, 0]
        sd = (wk @ wq.T) / jnp.sqrt(jnp.float32(K))
        w_mn = jax.nn.softmax(g + sd, axis=1)
        outs.append(w_mn @ wv)
    return jnp.concatenate(outs, axis=-1) + f_a


def make_params(key, n_relations, app_dim, key_dim, geo_dim):
    ks = jax.random.split(key, 10)
    s_app = 1.0 / math.sqrt(app_dim)
    s_geo = 1.0 / math.sqrt(geo_dim)
    return {
        # Linear(app_dim, key_dim) weights, pre-transposed to (Nr, D, K)
        "wk": jax.random.uniform(ks[0], (n_relations, app_dim, key_dim),
                                 jnp.float32, -s_app, s_app),
        "bk": jax.random.uniform(ks[1], (n_relations, 1, key_dim),
                                 jnp.float32, -s_app, s_app),
        "wq": jax.random.uniform(ks[2], (n_relations, app_dim, key_dim),
                                 jnp.float32, -s_app, s_app),
        "bq": jax.random.uniform(ks[3], (n_relations, 1, key_dim),
                                 jnp.float32, -s_app, s_app),
        "wv": jax.random.uniform(ks[4], (n_relations, app_dim, key_dim),
                                 jnp.float32, -s_app, s_app),
        "bv": jax.random.uniform(ks[5], (n_relations, 1, key_dim),
                                 jnp.float32, -s_app, s_app),
        # Linear(geo_dim, 1): weight row (Nr, 1, G) and bias (Nr, 1, 1)
        "wg": jax.random.uniform(ks[6], (n_relations, 1, geo_dim),
                                 jnp.float32, -s_geo, s_geo),
        "bg": jax.random.uniform(ks[7], (n_relations, 1, 1),
                                 jnp.float32, -s_geo, s_geo),
    }


if __name__ == "__main__":
    # Small, self-consistent shapes: app_dim = n_relations * key_dim.
    B = 4             # box-sets (images / RoI batches) -> grid axis
    N_BOX = 8         # number of boxes per set
    NR = 4            # n_relations
    KEY = 128         # key_feature_dim (lane-aligned)
    APP = NR * KEY    # appearance_feature_dim = 512
    GEO = 64          # geo_feature_dim

    root = jax.random.PRNGKey(0)
    k_fa, k_pos, k_par = jax.random.split(root, 3)

    f_a = jax.random.normal(k_fa, (B, N_BOX, APP), jnp.float32)
    pos_emb = jax.random.uniform(k_pos, (B, N_BOX, N_BOX, GEO), jnp.float32)
    params = make_params(k_par, NR, APP, KEY, GEO)

    out = jax.block_until_ready(relation_module(f_a, pos_emb, params))

    ref = jnp.stack([relation_module_ref(f_a[b], pos_emb[b], params)
                     for b in range(B)])
    # Kernel uses bf16 MXU inputs (f32 accumulation), so the tolerance vs the
    # pure-f32 reference is loosened accordingly.
    if not jnp.allclose(out, ref, atol=5e-2, rtol=5e-2):
        max_err = float(jnp.max(jnp.abs(out - ref)))
        raise AssertionError(
            f"Pallas kernel output mismatch vs JAX reference (max abs err {max_err})")

    print("KERNEL_OK")
</pallas_src>

<mosaic_0001>
module attributes {stable_mosaic.version = 11 : i64} {
  func.func @relation_kernel(%arg0: i32, %arg1: memref<1x8x512xf32, #tpu.memory_space<vmem>>, %arg2: memref<1x4x8x8xf32, #tpu.memory_space<vmem>>, %arg3: memref<512x1536xbf16, #tpu.memory_space<vmem>>, %arg4: memref<1x1536xf32, #tpu.memory_space<vmem>>, %arg5: memref<1x8x512xf32, #tpu.memory_space<vmem>>) attributes {dimension_semantics = [#tpu.dimension_semantics<parallel>], iteration_bounds = array<i64: 4>, scalar_prefetch = 0 : i64, scratch_operands = 0 : i64, tpu.core_type = #tpu.core_type<tc>, window_params = [{transform_indices = @transform_0, window_bounds = array<i64: 1, 8, 512>}, {transform_indices = @transform_1, window_bounds = array<i64: 1, 4, 8, 8>}, {pipeline_mode = #tpu.pipeline_mode<synchronous>, transform_indices = @transform_2, window_bounds = array<i64: 512, 1536>}, {pipeline_mode = #tpu.pipeline_mode<synchronous>, transform_indices = @transform_3, window_bounds = array<i64: 1, 1536>}, {transform_indices = @transform_4, window_bounds = array<i64: 1, 8, 512>}]} {
    %c0 = arith.constant 0 : index
    %c0_0 = arith.constant 0 : index
    %c0_1 = arith.constant 0 : index
    %0 = vector.load %arg1[%c0, %c0_0, %c0_1] : memref<1x8x512xf32, #tpu.memory_space<vmem>>, vector<1x8x512xf32>
    %1 = vector.shape_cast %0 : vector<1x8x512xf32> to vector<8x512xf32>
    %2 = arith.truncf %1 : vector<8x512xf32> to vector<8x512xbf16>
    %c0_2 = arith.constant 0 : index
    %c0_3 = arith.constant 0 : index
    %3 = vector.load %arg3[%c0_2, %c0_3] : memref<512x1536xbf16, #tpu.memory_space<vmem>>, vector<512x1536xbf16>
    %cst = arith.constant dense<0.000000e+00> : vector<8x1536xf32>
    %4 = tpu.matmul %2, %3, %cst {dimension_numbers = #tpu.dot_dimension_numbers<[1], [0], [0], [1], [0, 0, 1, 1], [], []>} : vector<8x512xbf16>, vector<512x1536xbf16>, vector<8x1536xf32> -> vector<8x1536xf32>
    %c0_4 = arith.constant 0 : index
    %c0_5 = arith.constant 0 : index
    %5 = vector.load %arg4[%c0_4, %c0_5] : memref<1x1536xf32, #tpu.memory_space<vmem>>, vector<1x1536xf32>
    %6 = vector.broadcast %5 : vector<1x1536xf32> to vector<8x1536xf32>
    %7 = arith.addf %4, %6 : vector<8x1536xf32>
    %8 = arith.truncf %7 : vector<8x1536xf32> to vector<8x1536xbf16>
    %9 = vector.extract_strided_slice %8 {offsets = [0, 0], sizes = [8, 128], strides = [1, 1]} : vector<8x1536xbf16> to vector<8x128xbf16>
    %10 = vector.extract_strided_slice %8 {offsets = [0, 512], sizes = [8, 128], strides = [1, 1]} : vector<8x1536xbf16> to vector<8x128xbf16>
    %11 = vector.extract_strided_slice %8 {offsets = [0, 1024], sizes = [8, 128], strides = [1, 1]} : vector<8x1536xbf16> to vector<8x128xbf16>
    %cst_6 = arith.constant dense<0.000000e+00> : vector<8x8xf32>
    %12 = tpu.matmul %9, %10, %cst_6 {dimension_numbers = #tpu.dot_dimension_numbers<[1], [1], [0], [0], [0, 0, 1, 0], [], []>} : vector<8x128xbf16>, vector<8x128xbf16>, vector<8x8xf32> -> vector<8x8xf32>
    %c0_7 = arith.constant 0 : index
    %c0_8 = arith.constant 0 : index
    %c0_9 = arith.constant 0 : index
    %c0_10 = arith.constant 0 : index
    %13 = vector.load %arg2[%c0_7, %c0_8, %c0_9, %c0_10] : memref<1x4x8x8xf32, #tpu.memory_space<vmem>>, vector<1x1x8x8xf32>
    %14 = vector.shape_cast %13 : vector<1x1x8x8xf32> to vector<8x8xf32>
    %15 = arith.addf %14, %12 : vector<8x8xf32>
    %cst_11 = arith.constant dense<0xFF800000> : vector<8xf32>
    %16 = vector.multi_reduction <maximumf>, %15, %cst_11 [1] : vector<8x8xf32> to vector<8xf32>
    %17 = vector.shape_cast %16 : vector<8xf32> to vector<8x1xf32>
    %18 = vector.broadcast %17 : vector<8x1xf32> to vector<8x8xf32>
    %19 = arith.subf %15, %18 : vector<8x8xf32>
    %20 = math.exp %19 : vector<8x8xf32>
    %cst_12 = arith.constant dense<0.000000e+00> : vector<8xf32>
    %21 = vector.multi_reduction <add>, %20, %cst_12 [1] : vector<8x8xf32> to vector<8xf32>
    %22 = vector.shape_cast %21 : vector<8xf32> to vector<8x1xf32>
    %23 = tpu.reciprocal %22 : vector<8x1xf32> -> vector<8x1xf32>
    %24 = vector.broadcast %23 : vector<8x1xf32> to vector<8x8xf32>
    %25 = arith.mulf %20, %24 : vector<8x8xf32>
    %26 = arith.truncf %25 : vector<8x8xf32> to vector<8x8xbf16>
    %cst_13 = arith.constant dense<0.000000e+00> : vector<8x128xf32>
    %27 = tpu.matmul %26, %11, %cst_13 {dimension_numbers = #tpu.dot_dimension_numbers<[1], [0], [0], [1], [0, 0, 1, 1], [], []>} : vector<8x8xbf16>, vector<8x128xbf16>, vector<8x128xf32> -> vector<8x128xf32>
    %28 = vector.extract_strided_slice %1 {offsets = [0, 0], sizes = [8, 128], strides = [1, 1]} : vector<8x512xf32> to vector<8x128xf32>
    %29 = arith.addf %27, %28 : vector<8x128xf32>
    %c0_14 = arith.constant 0 : index
    %c0_15 = arith.constant 0 : index
    %c0_16 = arith.constant 0 : index
    %30 = vector.load %arg5[%c0_14, %c0_15, %c0_16] : memref<1x8x512xf32, #tpu.memory_space<vmem>>, vector<1x8x128xf32>
    %31 = vector.shape_cast %30 : vector<1x8x128xf32> to vector<8x128xf32>
    %32 = vector.shape_cast %29 : vector<8x128xf32> to vector<1x8x128xf32>
    tpu.vector_store %arg5[%c0_14, %c0_15, %c0_16], %32 {strides = array<i32>} : memref<1x8x512xf32, #tpu.memory_space<vmem>>, vector<1x8x128xf32>,
    %33 = vector.extract_strided_slice %8 {offsets = [0, 128], sizes = [8, 128], strides = [1, 1]} : vector<8x1536xbf16> to vector<8x128xbf16>
    %34 = vector.extract_strided_slice %8 {offsets = [0, 640], sizes = [8, 128], strides = [1, 1]} : vector<8x1536xbf16> to vector<8x128xbf16>
    %35 = vector.extract_strided_slice %8 {offsets = [0, 1152], sizes = [8, 128], strides = [1, 1]} : vector<8x1536xbf16> to vector<8x128xbf16>
    %cst_17 = arith.constant dense<0.000000e+00> : vector<8x8xf32>
    %36 = tpu.matmul %33, %34, %cst_17 {dimension_numbers = #tpu.dot_dimension_numbers<[1], [1], [0], [0], [0, 0, 1, 0], [], []>} : vector<8x128xbf16>, vector<8x128xbf16>, vector<8x8xf32> -> vector<8x8xf32>
    %c0_18 = arith.constant 0 : index
    %c1 = arith.constant 1 : index
    %c0_19 = arith.constant 0 : index
    %c0_20 = arith.constant 0 : index
    %37 = vector.load %arg2[%c0_18, %c1, %c0_19, %c0_20] : memref<1x4x8x8xf32, #tpu.memory_space<vmem>>, vector<1x1x8x8xf32>
    %38 = vector.shape_cast %37 : vector<1x1x8x8xf32> to vector<8x8xf32>
    %39 = arith.addf %38, %36 : vector<8x8xf32>
    %cst_21 = arith.constant dense<0xFF800000> : vector<8xf32>
    %40 = vector.multi_reduction <maximumf>, %39, %cst_21 [1] : vector<8x8xf32> to vector<8xf32>
    %41 = vector.shape_cast %40 : vector<8xf32> to vector<8x1xf32>
    %42 = vector.broadcast %41 : vector<8x1xf32> to vector<8x8xf32>
    %43 = arith.subf %39, %42 : vector<8x8xf32>
    %44 = math.exp %43 : vector<8x8xf32>
    %cst_22 = arith.constant dense<0.000000e+00> : vector<8xf32>
    %45 = vector.multi_reduction <add>, %44, %cst_22 [1] : vector<8x8xf32> to vector<8xf32>
    %46 = vector.shape_cast %45 : vector<8xf32> to vector<8x1xf32>
    %47 = tpu.reciprocal %46 : vector<8x1xf32> -> vector<8x1xf32>
    %48 = vector.broadcast %47 : vector<8x1xf32> to vector<8x8xf32>
    %49 = arith.mulf %44, %48 : vector<8x8xf32>
    %50 = arith.truncf %49 : vector<8x8xf32> to vector<8x8xbf16>
    %cst_23 = arith.constant dense<0.000000e+00> : vector<8x128xf32>
    %51 = tpu.matmul %50, %35, %cst_23 {dimension_numbers = #tpu.dot_dimension_numbers<[1], [0], [0], [1], [0, 0, 1, 1], [], []>} : vector<8x8xbf16>, vector<8x128xbf16>, vector<8x128xf32> -> vector<8x128xf32>
    %52 = vector.extract_strided_slice %1 {offsets = [0, 128], sizes = [8, 128], strides = [1, 1]} : vector<8x512xf32> to vector<8x128xf32>
    %53 = arith.addf %51, %52 : vector<8x128xf32>
    %c0_24 = arith.constant 0 : index
    %c0_25 = arith.constant 0 : index
    %c128 = arith.constant 128 : index
    %54 = vector.load %arg5[%c0_24, %c0_25, %c128] : memref<1x8x512xf32, #tpu.memory_space<vmem>>, vector<1x8x128xf32>
    %55 = vector.shape_cast %54 : vector<1x8x128xf32> to vector<8x128xf32>
    %56 = vector.shape_cast %53 : vector<8x128xf32> to vector<1x8x128xf32>
    tpu.vector_store %arg5[%c0_24, %c0_25, %c128], %56 {strides = array<i32>} : memref<1x8x512xf32, #tpu.memory_space<vmem>>, vector<1x8x128xf32>,
    %57 = vector.extract_strided_slice %8 {offsets = [0, 256], sizes = [8, 128], strides = [1, 1]} : vector<8x1536xbf16> to vector<8x128xbf16>
    %58 = vector.extract_strided_slice %8 {offsets = [0, 768], sizes = [8, 128], strides = [1, 1]} : vector<8x1536xbf16> to vector<8x128xbf16>
    %59 = vector.extract_strided_slice %8 {offsets = [0, 1280], sizes = [8, 128], strides = [1, 1]} : vector<8x1536xbf16> to vector<8x128xbf16>
    %cst_26 = arith.constant dense<0.000000e+00> : vector<8x8xf32>
    %60 = tpu.matmul %57, %58, %cst_26 {dimension_numbers = #tpu.dot_dimension_numbers<[1], [1], [0], [0], [0, 0, 1, 0], [], []>} : vector<8x128xbf16>, vector<8x128xbf16>, vector<8x8xf32> -> vector<8x8xf32>
    %c0_27 = arith.constant 0 : index
    %c2 = arith.constant 2 : index
    %c0_28 = arith.constant 0 : index
    %c0_29 = arith.constant 0 : index
    %61 = vector.load %arg2[%c0_27, %c2, %c0_28, %c0_29] : memref<1x4x8x8xf32, #tpu.memory_space<vmem>>, vector<1x1x8x8xf32>
    %62 = vector.shape_cast %61 : vector<1x1x8x8xf32> to vector<8x8xf32>
    %63 = arith.addf %62, %60 : vector<8x8xf32>
    %cst_30 = arith.constant dense<0xFF800000> : vector<8xf32>
    %64 = vector.multi_reduction <maximumf>, %63, %cst_30 [1] : vector<8x8xf32> to vector<8xf32>
    %65 = vector.shape_cast %64 : vector<8xf32> to vector<8x1xf32>
    %66 = vector.broadcast %65 : vector<8x1xf32> to vector<8x8xf32>
    %67 = arith.subf %63, %66 : vector<8x8xf32>
    %68 = math.exp %67 : vector<8x8xf32>
    %cst_31 = arith.constant dense<0.000000e+00> : vector<8xf32>
    %69 = vector.multi_reduction <add>, %68, %cst_31 [1] : vector<8x8xf32> to vector<8xf32>
    %70 = vector.shape_cast %69 : vector<8xf32> to vector<8x1xf32>
    %71 = tpu.reciprocal %70 : vector<8x1xf32> -> vector<8x1xf32>
    %72 = vector.broadcast %71 : vector<8x1xf32> to vector<8x8xf32>
    %73 = arith.mulf %68, %72 : vector<8x8xf32>
    %74 = arith.truncf %73 : vector<8x8xf32> to vector<8x8xbf16>
    %cst_32 = arith.constant dense<0.000000e+00> : vector<8x128xf32>
    %75 = tpu.matmul %74, %59, %cst_32 {dimension_numbers = #tpu.dot_dimension_numbers<[1], [0], [0], [1], [0, 0, 1, 1], [], []>} : vector<8x8xbf16>, vector<8x128xbf16>, vector<8x128xf32> -> vector<8x128xf32>
    %76 = vector.extract_strided_slice %1 {offsets = [0, 256], sizes = [8, 128], strides = [1, 1]} : vector<8x512xf32> to vector<8x128xf32>
    %77 = arith.addf %75, %76 : vector<8x128xf32>
    %c0_33 = arith.constant 0 : index
    %c0_34 = arith.constant 0 : index
    %c256 = arith.constant 256 : index
    %78 = vector.load %arg5[%c0_33, %c0_34, %c256] : memref<1x8x512xf32, #tpu.memory_space<vmem>>, vector<1x8x128xf32>
    %79 = vector.shape_cast %78 : vector<1x8x128xf32> to vector<8x128xf32>
    %80 = vector.shape_cast %77 : vector<8x128xf32> to vector<1x8x128xf32>
    tpu.vector_store %arg5[%c0_33, %c0_34, %c256], %80 {strides = array<i32>} : memref<1x8x512xf32, #tpu.memory_space<vmem>>, vector<1x8x128xf32>,
    %81 = vector.extract_strided_slice %8 {offsets = [0, 384], sizes = [8, 128], strides = [1, 1]} : vector<8x1536xbf16> to vector<8x128xbf16>
    %82 = vector.extract_strided_slice %8 {offsets = [0, 896], sizes = [8, 128], strides = [1, 1]} : vector<8x1536xbf16> to vector<8x128xbf16>
    %83 = vector.extract_strided_slice %8 {offsets = [0, 1408], sizes = [8, 128], strides = [1, 1]} : vector<8x1536xbf16> to vector<8x128xbf16>
    %cst_35 = arith.constant dense<0.000000e+00> : vector<8x8xf32>
    %84 = tpu.matmul %81, %82, %cst_35 {dimension_numbers = #tpu.dot_dimension_numbers<[1], [1], [0], [0], [0, 0, 1, 0], [], []>} : vector<8x128xbf16>, vector<8x128xbf16>, vector<8x8xf32> -> vector<8x8xf32>
    %c0_36 = arith.constant 0 : index
    %c3 = arith.constant 3 : index
    %c0_37 = arith.constant 0 : index
    %c0_38 = arith.constant 0 : index
    %85 = vector.load %arg2[%c0_36, %c3, %c0_37, %c0_38] : memref<1x4x8x8xf32, #tpu.memory_space<vmem>>, vector<1x1x8x8xf32>
    %86 = vector.shape_cast %85 : vector<1x1x8x8xf32> to vector<8x8xf32>
    %87 = arith.addf %86, %84 : vector<8x8xf32>
    %cst_39 = arith.constant dense<0xFF800000> : vector<8xf32>
    %88 = vector.multi_reduction <maximumf>, %87, %cst_39 [1] : vector<8x8xf32> to vector<8xf32>
    %89 = vector.shape_cast %88 : vector<8xf32> to vector<8x1xf32>
    %90 = vector.broadcast %89 : vector<8x1xf32> to vector<8x8xf32>
    %91 = arith.subf %87, %90 : vector<8x8xf32>
    %92 = math.exp %91 : vector<8x8xf32>
    %cst_40 = arith.constant dense<0.000000e+00> : vector<8xf32>
    %93 = vector.multi_reduction <add>, %92, %cst_40 [1] : vector<8x8xf32> to vector<8xf32>
    %94 = vector.shape_cast %93 : vector<8xf32> to vector<8x1xf32>
    %95 = tpu.reciprocal %94 : vector<8x1xf32> -> vector<8x1xf32>
    %96 = vector.broadcast %95 : vector<8x1xf32> to vector<8x8xf32>
    %97 = arith.mulf %92, %96 : vector<8x8xf32>
    %98 = arith.truncf %97 : vector<8x8xf32> to vector<8x8xbf16>
    %cst_41 = arith.constant dense<0.000000e+00> : vector<8x128xf32>
    %99 = tpu.matmul %98, %83, %cst_41 {dimension_numbers = #tpu.dot_dimension_numbers<[1], [0], [0], [1], [0, 0, 1, 1], [], []>} : vector<8x8xbf16>, vector<8x128xbf16>, vector<8x128xf32> -> vector<8x128xf32>
    %100 = vector.extract_strided_slice %1 {offsets = [0, 384], sizes = [8, 128], strides = [1, 1]} : vector<8x512xf32> to vector<8x128xf32>
    %101 = arith.addf %99, %100 : vector<8x128xf32>
    %c0_42 = arith.constant 0 : index
    %c0_43 = arith.constant 0 : index
    %c384 = arith.constant 384 : index
    %102 = vector.load %arg5[%c0_42, %c0_43, %c384] : memref<1x8x512xf32, #tpu.memory_space<vmem>>, vector<1x8x128xf32>
    %103 = vector.shape_cast %102 : vector<1x8x128xf32> to vector<8x128xf32>
    %104 = vector.shape_cast %101 : vector<8x128xf32> to vector<1x8x128xf32>
    tpu.vector_store %arg5[%c0_42, %c0_43, %c384], %104 {strides = array<i32>} : memref<1x8x512xf32, #tpu.memory_space<vmem>>, vector<1x8x128xf32>,
    return
  }
  func.func @transform_0(%arg0: i32) -> (i32, i32, i32) {
    %c0_i32 = arith.constant 0 : i32
    %c0_i32_0 = arith.constant 0 : i32
    %c0_i32_1 = arith.constant 0 : i32
    return %arg0, %c0_i32, %c0_i32_0 : i32, i32, i32
  }
  func.func @transform_1(%arg0: i32) -> (i32, i32, i32, i32) {
    %c0_i32 = arith.constant 0 : i32
    %c0_i32_0 = arith.constant 0 : i32
    %c0_i32_1 = arith.constant 0 : i32
    %c0_i32_2 = arith.constant 0 : i32
    return %arg0, %c0_i32, %c0_i32_0, %c0_i32_1 : i32, i32, i32, i32
  }
  func.func @transform_2(%arg0: i32) -> (i32, i32) {
    %c0_i32 = arith.constant 0 : i32
    %c0_i32_0 = arith.constant 0 : i32
    %c0_i32_1 = arith.constant 0 : i32
    return %c0_i32, %c0_i32_0 : i32, i32
  }
  func.func @transform_3(%arg0: i32) -> (i32, i32) {
    %c0_i32 = arith.constant 0 : i32
    %c0_i32_0 = arith.constant 0 : i32
    %c0_i32_1 = arith.constant 0 : i32
    return %c0_i32, %c0_i32_0 : i32, i32
  }
  func.func @transform_4(%arg0: i32) -> (i32, i32, i32) {
    %c0_i32 = arith.constant 0 : i32
    %c0_i32_0 = arith.constant 0 : i32
    %c0_i32_1 = arith.constant 0 : i32
    return %arg0, %c0_i32, %c0_i32_0 : i32, i32, i32
  }
}

</mosaic_0001>

<llo_original>
// kernel: tpu_custom_call.1
$region0: #{tpu_custom_call.1}
  #allocation0 [shape = 'u32[]', space=smem, size = 0x4, offset = 0x4, fixed_abs, tag = 'smem constant byte address 0x4 - core index']
  #allocation1 [shape = 'u32[144,128]{1,0:T(1,128)}', space=vmem, size = 0x12000, scoped, tag = 'internal scratch']
  %s0 = inlined_call_operand.hbm [shape: f32[4,8,512], index: 0, kind: input, shape index: {}]
  %s1 = inlined_call_operand.hbm [shape: f32[4,4,8,8], index: 1, kind: input, shape index: {}]
  %s2 = inlined_call_operand.hbm [shape: bf16[512,1536], index: 2, kind: input, shape index: {}]
  %s3 = inlined_call_operand.hbm [shape: f32[1,1536], index: 3, kind: input, shape index: {}]
  %s4 = inlined_call_operand.hbm [shape: f32[4,8,512], index: 4, kind: output, shape index: {}]
  %s5 = sld [smem:[#allocation0]]
  $region65: #{tpu_custom_call.1} parent=0
    _
  %s7 = ssub.s32 1, %s5
  %s8 = scalar_select 0, %s7, %s5
  $region1: #{tpu_custom_call.1} parent=0
    #allocation2 [shape = 'u8[32768]{0}', space=vmem, size = 0x8000, scoped, tag = 'input window, operand 0']
    #allocation3 [shape = 's32[2]{0}', space=sflag, size = 0x8, scoped, tag = 'scoped memory for tpu_custom_call.1']
    #allocation4 [shape = 's32[2]{0}', space=sflag, size = 0x8, scoped, tag = 'scoped memory for tpu_custom_call.1']
    #allocation5 [shape = 'u8[32768]{0}', space=vmem, size = 0x8000, scoped, tag = 'input window, operand 1']
    #allocation6 [shape = 's32[2]{0}', space=sflag, size = 0x8, scoped, tag = 'scoped memory for tpu_custom_call.1']
    #allocation7 [shape = 'u8[1572864]{0}', space=vmem, size = 0x180000, scoped, tag = 'input window, operand 2, single buffered']
    #allocation8 [shape = 'u8[6144]{0}', space=vmem, size = 0x1800, scoped, tag = 'input window, operand 3, single buffered']
    #allocation9 [shape = 's32[1]{0}', space=sflag, size = 0x4, scoped, tag = 'scoped memory for tpu_custom_call.1']
    #allocation10 [shape = 'u8[32768]{0}', space=vmem, size = 0x8000, scoped, tag = 'output window, operand 0']
    %9 = vsyncpa [#allocation3], 0
    %s10 = scalar_lea.sflag [#allocation3], 1
    %11 = vsyncpa %s10, 0
    %12 = vsyncpa [#allocation6], 0
    %s13 = scalar_lea.sflag [#allocation6], 1
    %14 = vsyncpa %s13, 0
    %15 = vsyncpa [#allocation9], 0
    %16 = vsyncpa [#allocation4], 0
    %s17 = scalar_lea.sflag [#allocation4], 1
    %18 = vsyncpa %s17, 0
    loop: start=0, step=1, limit=6
    $region2: #{tpu_custom_call.1} parent=1 // loop_pre_header
      _
    $region3: #{tpu_custom_call.1} parent=1 // loop_header
      %s20 = sphi 0, %s24
      %p21 = scmp.ge.s32.totalorder %s20, 6
      %s30 = sphi 0, %s32
      %s33 = sphi 0, %s30
      %s34 = sphi 0, %s33
      %s50 = sphi 0, %s34
      %s56 = sphi 0, %s58
      %s59 = sphi 0, %s56
      %s60 = sphi 0, %s59
      %s76 = sphi 0, %s60
      %s80 = sphi 0, %s80
      %s82 = sphi 0, %s80
      %s83 = sphi 0, %s82
      %s97 = sphi 0, %s83
      %s101 = sphi 0, %s101
      %s103 = sphi 0, %s101
      %s104 = sphi 0, %s103
      %s118 = sphi 0, %s104
      %s124 = sphi 0, %s126
      %s127 = sphi 0, %s124
      %s128 = sphi 0, %s127
      %s144 = sphi 0, %s128
    $region4: #{tpu_custom_call.1} parent=1 // loop_header_branch
      %23 = sbr.rel (%p21) target = $region8
    $region5: #{tpu_custom_call.1} parent=1 // loop_body
      %s25 = ssub.s32 %s20, 1
      %s26 = ssub.s32 %s20, 2
      %s27 = sadd.s32 %s20, 1
      %s28 = ssub.s32 %s20, %s27
      %p29 = scmp.eq.s32.totalorder %s28, 0
      %s31 = sadd.s32 %s30, 1
      %s32 = scalar_select %p29, %s30, %s31
      %p35 = pneg %p29
      %p36 = scmp.eq.s32.totalorder %s20, 3
      %p37 = por %p35, %p36
      %p38 = scmp.ne.s32.totalorder %s30, %s33
      %p39 = scmp.eq.s32.totalorder %s20, 0
      %p40 = por %p38, %p39
      %p41 = scmp.ne.s32.totalorder %s30, %s33
      %p42 = scmp.eq.s32.totalorder %s25, 3
      %p43 = por %p41, %p42
      %p44 = scmp.ne.s32.totalorder %s33, %s34
      %p45 = scmp.eq.s32.totalorder %s25, 0
      %p46 = por %p44, %p45
      %p47 = scmp.ne.s32.totalorder %s33, %s34
      %p48 = scmp.eq.s32.totalorder %s26, 3
      %p49 = por %p47, %p48
      %p51 = scmp.ne.s32.totalorder %s34, %s50
      %p52 = scmp.eq.s32.totalorder %s26, 0
      %p53 = por %p51, %p52
      %s54 = ssub.s32 %s20, %s27
      %p55 = scmp.eq.s32.totalorder %s54, 0
      %s57 = sadd.s32 %s56, 1
      %s58 = scalar_select %p55, %s56, %s57
      %p61 = pneg %p55
      %p62 = scmp.eq.s32.totalorder %s20, 3
      %p63 = por %p61, %p62
      %p64 = scmp.ne.s32.totalorder %s56, %s59
      %p65 = scmp.eq.s32.totalorder %s20, 0
      %p66 = por %p64, %p65
      %p67 = scmp.ne.s32.totalorder %s56, %s59
      %p68 = scmp.eq.s32.totalorder %s25, 3
      %p69 = por %p67, %p68
      %p70 = scmp.ne.s32.totalorder %s59, %s60
      %p71 = scmp.eq.s32.totalorder %s25, 0
      %p72 = por %p70, %p71
      %p73 = scmp.ne.s32.totalorder %s59, %s60
      %p74 = scmp.eq.s32.totalorder %s26, 3
      %p75 = por %p73, %p74
      %p77 = scmp.ne.s32.totalorder %s60, %s76
      %p78 = scmp.eq.s32.totalorder %s26, 0
      %p79 = por %p77, %p78
      %s81 = sadd.s32 %s80, 1
      %p84 = scmp.eq.s32.totalorder %s20, 3
      %p85 = scmp.ne.s32.totalorder %s80, %s82
      %p86 = scmp.eq.s32.totalorder %s20, 0
      %p87 = por %p85, %p86
      %p88 = scmp.ne.s32.totalorder %s80, %s82
      %p89 = scmp.eq.s32.totalorder %s25, 3
      %p90 = por %p88, %p89
      %p91 = scmp.ne.s32.totalorder %s82, %s83
      %p92 = scmp.eq.s32.totalorder %s25, 0
      %p93 = por %p91, %p92
      %p94 = scmp.ne.s32.totalorder %s82, %s83
      %p95 = scmp.eq.s32.totalorder %s26, 3
      %p96 = por %p94, %p95
      %p98 = scmp.ne.s32.totalorder %s83, %s97
      %p99 = scmp.eq.s32.totalorder %s26, 0
      %p100 = por %p98, %p99
      %s102 = sadd.s32 %s101, 1
      %p105 = scmp.eq.s32.totalorder %s20, 3
      %p106 = scmp.ne.s32.totalorder %s101, %s103
      %p107 = scmp.eq.s32.totalorder %s20, 0
      %p108 = por %p106, %p107
      %p109 = scmp.ne.s32.totalorder %s101, %s103
      %p110 = scmp.eq.s32.totalorder %s25, 3
      %p111 = por %p109, %p110
      %p112 = scmp.ne.s32.totalorder %s103, %s104
      %p113 = scmp.eq.s32.totalorder %s25, 0
      %p114 = por %p112, %p113
      %p115 = scmp.ne.s32.totalorder %s103, %s104
      %p116 = scmp.eq.s32.totalorder %s26, 3
      %p117 = por %p115, %p116
      %p119 = scmp.ne.s32.totalorder %s104, %s118
      %p120 = scmp.eq.s32.totalorder %s26, 0
      %p121 = por %p119, %p120
      %s122 = ssub.s32 %s20, %s27
      %p123 = scmp.eq.s32.totalorder %s122, 0
      %s125 = sadd.s32 %s124, 1
      %s126 = scalar_select %p123, %s124, %s125
      %p129 = pneg %p123
      %p130 = scmp.eq.s32.totalorder %s20, 3
      %p131 = por %p129, %p130
      %p132 = scmp.ne.s32.totalorder %s124, %s127
      %p133 = scmp.eq.s32.totalorder %s20, 0
      %p134 = por %p132, %p133
      %p135 = scmp.ne.s32.totalorder %s124, %s127
      %p136 = scmp.eq.s32.totalorder %s25, 3
      %p137 = por %p135, %p136
      %p138 = scmp.ne.s32.totalorder %s127, %s128
      %p139 = scmp.eq.s32.totalorder %s25, 0
      %p140 = por %p138, %p139
      %p141 = scmp.ne.s32.totalorder %s127, %s128
      %p142 = scmp.eq.s32.totalorder %s26, 3
      %p143 = por %p141, %p142
      %p145 = scmp.ne.s32.totalorder %s128, %s144
      %p146 = scmp.eq.s32.totalorder %s26, 0
      %p147 = por %p145, %p146
      %p148 = scmp.le.s32.totalorder 1, %s20
      %p149 = scmp.lt.s32.totalorder %s20, 5
      %p150 = pnand %p148, %p149
      %p151 = pneg %p150
      // Predicated region
      $region9: #{tpu_custom_call.1} parent=5 // pred_check
        _
      $region10: #{tpu_custom_call.1} parent=5 // pred_check_branch
        %153 = sbr.rel (%p150) target = $region12
      $region11: #{tpu_custom_call.1} parent=5 // pred_region
        %s154 = ssub.s32 %s20, 1
        // Predicated region
        $region13: #{tpu_custom_call.1} parent=11 // pred_check
          %p155 = pneg %p93
        $region14: #{tpu_custom_call.1} parent=11 // pred_check_branch
          %157 = sbr.rel (%p155) target = $region16
        $region15: #{tpu_custom_call.1} parent=11 // pred_region
          %s159 = ssub.s32 49152, 49152
          %160 = vsyncadd [#allocation6], %s159
          %s161 = sshll.u32 [#allocation7], 4
          %s162 = int_to_ptr.vmem [resolvable:$true] %s161
          %167 = dma.hbm_to_vmem [thread:$0]  %s2, 49152, %s162, [#allocation6], 768, 768, 48
        $region16: #{tpu_custom_call.1} parent=11 // pred_fallthru
          _
        // Predicated region
        $region17: #{tpu_custom_call.1} parent=11 // pred_check
          %p168 = pneg %p114
        $region18: #{tpu_custom_call.1} parent=11 // pred_check_branch
          %170 = sbr.rel (%p168) target = $region20
        $region19: #{tpu_custom_call.1} parent=11 // pred_region
          %s172 = ssub.s32 192, 192
          %173 = vsyncadd [#allocation9], %s172
          %s175 = sshll.u32 [#allocation8], 4
          %s176 = int_to_ptr.vmem [resolvable:$true] %s175
          %178 = dma.hbm_to_vmem [thread:$0]  %s3, 192, %s176, [#allocation9]
        $region20: #{tpu_custom_call.1} parent=11 // pred_fallthru
          _
      $region12: #{tpu_custom_call.1} parent=5 // pred_fallthru
        _
      %p179 = scmp.lt.s32.totalorder %s20, 4
      // Predicated region
      $region21: #{tpu_custom_call.1} parent=5 // pred_check
        %p180 = pneg %p179
      $region22: #{tpu_custom_call.1} parent=5 // pred_check_branch
        %182 = sbr.rel (%p180) target = $region24
      $region23: #{tpu_custom_call.1} parent=5 // pred_region
        // Predicated region
        $region25: #{tpu_custom_call.1} parent=23 // pred_check
          %p183 = pneg %p40
        $region26: #{tpu_custom_call.1} parent=23 // pred_check_branch
          %185 = sbr.rel (%p183) target = $region28
        $region27: #{tpu_custom_call.1} parent=23 // pred_region
          %s186 = sand.u32 %s30, 1
          %s187 = scalar_lea.sflag [#allocation3], %s186
          %s188 = sand.u32 %s30, 1
          %s189 = smul.addr %s188, 32
          %s190 = scalar_lea.vmem [#allocation2], %s189
          %s192 = ssub.s32 512, 512
          %193 = vsyncadd %s187, %s192
          %s194 = smul.addr %s20, 4
          %s195 = smul.addr %s194, 128
          %s196 = scalar_lea.hbm %s0, %s195
          %s198 = sshll.u32 %s190, 4
          %s199 = int_to_ptr.vmem [resolvable:$true] %s198
          %201 = dma.hbm_to_vmem [thread:$0]  %s196, 512, %s199, %s187
        $region28: #{tpu_custom_call.1} parent=23 // pred_fallthru
          _
        // Predicated region
        $region29: #{tpu_custom_call.1} parent=23 // pred_check
          %p202 = pneg %p66
        $region30: #{tpu_custom_call.1} parent=23 // pred_check_branch
          %204 = sbr.rel (%p202) target = $region32
        $region31: #{tpu_custom_call.1} parent=23 // pred_region
          %s205 = sand.u32 %s20, 1
          %s206 = scalar_lea.sflag [#allocation6], %s205
          %s207 = sand.u32 %s56, 1
          %s208 = smul.addr %s207, 32
          %s209 = scalar_lea.vmem [#allocation5], %s208
          %s211 = ssub.s32 512, 512
          %212 = vsyncadd %s206, %s211
          %s213 = smul.addr %s20, 4
          %s214 = smul.addr %s213, 128
          %s215 = scalar_lea.hbm %s1, %s214
          %s216 = sshll.u32 %s209, 4
          %s217 = int_to_ptr.vmem [resolvable:$true] %s216
          %222 = dma.hbm_to_vmem [thread:$0]  %s215, 512, %s217, %s206, 128, 128, 8
        $region32: #{tpu_custom_call.1} parent=23 // pred_fallthru
          _
      $region24: #{tpu_custom_call.1} parent=5 // pred_fallthru
        _
      %p223 = scmp.le.s32.totalorder 1, %s20
      %p224 = scmp.lt.s32.totalorder %s20, 5
      %p225 = pnand %p223, %p224
      %p226 = pneg %p225
      // Predicated region
      $region33: #{tpu_custom_call.1} parent=5 // pred_check
        _
      $region34: #{tpu_custom_call.1} parent=5 // pred_check_branch
        %228 = sbr.rel (%p225) target = $region36
      $region35: #{tpu_custom_call.1} parent=5 // pred_region
        %s229 = ssub.s32 %s20, 1
        %s230 = sand.u32 %s33, 1
        %s231 = scalar_lea.sflag [#allocation3], %s230
        %s232 = sand.u32 %s33, 1
        %s233 = smul.addr %s232, 32
        %s234 = scalar_lea.vmem [#allocation2], %s233
        // Predicated region
        $region37: #{tpu_custom_call.1} parent=35 // pred_check
          %p235 = pneg %p46
        $region38: #{tpu_custom_call.1} parent=35 // pred_check_branch
          %237 = sbr.rel (%p235) target = $region40
        $region39: #{tpu_custom_call.1} parent=35 // pred_region
          %238 = dma.done %s231, 512
        $region40: #{tpu_custom_call.1} parent=35 // pred_fallthru
          _
        %s239 = sand.u32 %s25, 1
        %s240 = scalar_lea.sflag [#allocation6], %s239
        %s241 = sand.u32 %s59, 1
        %s242 = smul.addr %s241, 32
        %s243 = scalar_lea.vmem [#allocation5], %s242
        // Predicated region
        $region41: #{tpu_custom_call.1} parent=35 // pred_check
          %p244 = pneg %p72
        $region42: #{tpu_custom_call.1} parent=35 // pred_check_branch
          %246 = sbr.rel (%p244) target = $region44
        $region43: #{tpu_custom_call.1} parent=35 // pred_region
          %247 = dma.done %s240, 512
        $region44: #{tpu_custom_call.1} parent=35 // pred_fallthru
          _
        // Predicated region
        $region45: #{tpu_custom_call.1} parent=35 // pred_check
          %p248 = pneg %p93
        $region46: #{tpu_custom_call.1} parent=35 // pred_check_branch
          %250 = sbr.rel (%p248) target = $region48
        $region47: #{tpu_custom_call.1} parent=35 // pred_region
          %251 = dma.done [#allocation6], 49152
        $region48: #{tpu_custom_call.1} parent=35 // pred_fallthru
          _
        // Predicated region
        $region49: #{tpu_custom_call.1} parent=35 // pred_check
          %p252 = pneg %p114
        $region50: #{tpu_custom_call.1} parent=35 // pred_check_branch
          %254 = sbr.rel (%p252) target = $region52
        $region51: #{tpu_custom_call.1} parent=35 // pred_region
          %255 = dma.done [#allocation9], 192
        $region52: #{tpu_custom_call.1} parent=35 // pred_fallthru
          _
        %s256 = sand.u32 %s33, 1
        %s257 = scalar_lea.sflag [#allocation3], %s256
        %s258 = sand.u32 %s33, 1
        %s259 = smul.addr %s258, 32
        %s260 = scalar_lea.vmem [#allocation2], %s259
        %p261 = pneg %p46
        %p262 = pneg %p43
        %s263 = sand.u32 %s25, 1
        %s264 = scalar_lea.sflag [#allocation6], %s263
        %s265 = sand.u32 %s59, 1
        %s266 = smul.addr %s265, 32
        %s267 = scalar_lea.vmem [#allocation5], %s266
        %p268 = pneg %p72
        %p269 = pneg %p69
        %p270 = pneg %p93
        %p271 = pneg %p90
        %p272 = pneg %p114
        %p273 = pneg %p111
        %p274 = pneg %p140
        %p275 = pneg %p137
        %s276 = sand.u32 %s127, 1
        %s277 = scalar_lea.sflag [#allocation4], %s276
        %s278 = sand.u32 %s127, 1
        %s279 = smul.addr %s278, 32
        %s280 = scalar_lea.vmem [#allocation10], %s279
        %v282 = vld [vmem:[%s234] sm:$0xff]
        %v283 = vld [vmem:[%s234 + $0x8] sm:$0xff]
        %v284 = vld [vmem:[%s234 + $0x10] sm:$0xff]
        %v285 = vld [vmem:[%s234 + $0x18] sm:$0xff]
        %v286 = vpack.c.bf16 %v282, %v282
        %v287 = vpack.c.bf16 %v283, %v283
        %v288 = vpack.c.bf16 %v284, %v284
        %v289 = vpack.c.bf16 %v285, %v285
        %v290 = vld [vmem:[#allocation7] sm:$0xff]
        %v291 = vld [vmem:[#allocation7 + $0x8] sm:$0xff]
        %v292 = vld [vmem:[#allocation7 + $0x10] sm:$0xff]
        %v293 = vld [vmem:[#allocation7 + $0x18] sm:$0xff]
        %v294 = vld [vmem:[#allocation7 + $0x20] sm:$0xff]
        %v295 = vld [vmem:[#allocation7 + $0x28] sm:$0xff]
        %v296 = vld [vmem:[#allocation7 + $0x30] sm:$0xff]
        %v297 = vld [vmem:[#allocation7 + $0x38] sm:$0xff]
        %v298 = vld [vmem:[#allocation7 + $0x40] sm:$0xff]
        %v299 = vld [vmem:[#allocation7 + $0x48] sm:$0xff]
        %v300 = vld [vmem:[#allocation7 + $0x50] sm:$0xff]
        %v301 = vld [vmem:[#allocation7 + $0x58] sm:$0xff]
        %v302 = vld [vmem:[#allocation7 + $0x60] sm:$0xff]
        %v303 = vld [vmem:[#allocation7 + $0x68] sm:$0xff]
        %v304 = vld [vmem:[#allocation7 + $0x70] sm:$0xff]
        %v305 = vld [vmem:[#allocation7 + $0x78] sm:$0xff]
        %v306 = vld [vmem:[#allocation7 + $0x80] sm:$0xff]
        %v307 = vld [vmem:[#allocation7 + $0x88] sm:$0xff]
        %v308 = vld [vmem:[#allocation7 + $0x90] sm:$0xff]
        %v309 = vld [vmem:[#allocation7 + $0x98] sm:$0xff]
        %v310 = vld [vmem:[#allocation7 + $0xa0] sm:$0xff]
        %v311 = vld [vmem:[#allocation7 + $0xa8] sm:$0xff]
        %v312 = vld [vmem:[#allocation7 + $0xb0] sm:$0xff]
        %v313 = vld [vmem:[#allocation7 + $0xb8] sm:$0xff]
        %v314 = vld [vmem:[#allocation7 + $0xc0] sm:$0xff]
        %v315 = vld [vmem:[#allocation7 + $0xc8] sm:$0xff]
        %v316 = vld [vmem:[#allocation7 + $0xd0] sm:$0xff]
        %v317 = vld [vmem:[#allocation7 + $0xd8] sm:$0xff]
        %v318 = vld [vmem:[#allocation7 + $0xe0] sm:$0xff]
        %v319 = vld [vmem:[#allocation7 + $0xe8] sm:$0xff]
        %v320 = vld [vmem:[#allocation7 + $0xf0] sm:$0xff]
        %v321 = vld [vmem:[#allocation7 + $0xf8] sm:$0xff]
        %v322 = vld [vmem:[#allocation7 + $0x100] sm:$0xff]
        %v323 = vld [vmem:[#allocation7 + $0x108] sm:$0xff]
        %v324 = vld [vmem:[#allocation7 + $0x110] sm:$0xff]
        %v325 = vld [vmem:[#allocation7 + $0x118] sm:$0xff]
        %v326 = vld [vmem:[#allocation7 + $0x120] sm:$0xff]
        %v327 = vld [vmem:[#allocation7 + $0x128] sm:$0xff]
        %v328 = vld [vmem:[#allocation7 + $0x130] sm:$0xff]
        %v329 = vld [vmem:[#allocation7 + $0x138] sm:$0xff]
        %v330 = vld [vmem:[#allocation7 + $0x140] sm:$0xff]
        %v331 = vld [vmem:[#allocation7 + $0x148] sm:$0xff]
        %v332 = vld [vmem:[#allocation7 + $0x150] sm:$0xff]
        %v333 = vld [vmem:[#allocation7 + $0x158] sm:$0xff]
        %v334 = vld [vmem:[#allocation7 + $0x160] sm:$0xff]
        %v335 = vld [vmem:[#allocation7 + $0x168] sm:$0xff]
        %v336 = vld [vmem:[#allocation7 + $0x170] sm:$0xff]
        %v337 = vld [vmem:[#allocation7 + $0x178] sm:$0xff]
        %v338 = vld [vmem:[#allocation7 + $0x180] sm:$0xff]
        %v339 = vld [vmem:[#allocation7 + $0x188] sm:$0xff]
        %v340 = vld [vmem:[#allocation7 + $0x190] sm:$0xff]
        %v341 = vld [vmem:[#allocation7 + $0x198] sm:$0xff]
        %v342 = vld [vmem:[#allocation7 + $0x1a0] sm:$0xff]
        %v343 = vld [vmem:[#allocation7 + $0x1a8] sm:$0xff]
        %v344 = vld [vmem:[#allocation7 + $0x1b0] sm:$0xff]
        %v345 = vld [vmem:[#allocation7 + $0x1b8] sm:$0xff]
        %v346 = vld [vmem:[#allocation7 + $0x1c0] sm:$0xff]
        %v347 = vld [vmem:[#allocation7 + $0x1c8] sm:$0xff]
        %v348 = vld [vmem:[#allocation7 + $0x1d0] sm:$0xff]
        %v349 = vld [vmem:[#allocation7 + $0x1d8] sm:$0xff]
        %v350 = vld [vmem:[#allocation7 + $0x1e0] sm:$0xff]
        %v351 = vld [vmem:[#allocation7 + $0x1e8] sm:$0xff]
        %v352 = vld [vmem:[#allocation7 + $0x1f0] sm:$0xff]
        %v353 = vld [vmem:[#allocation7 + $0x1f8] sm:$0xff]
        %v354 = vld [vmem:[#allocation7 + $0x200] sm:$0xff]
        %v355 = vld [vmem:[#allocation7 + $0x208] sm:$0xff]
        %v356 = vld [vmem:[#allocation7 + $0x210] sm:$0xff]
        %v357 = vld [vmem:[#allocation7 + $0x218] sm:$0xff]
        %v358 = vld [vmem:[#allocation7 + $0x220] sm:$0xff]
        %v359 = vld [vmem:[#allocation7 + $0x228] sm:$0xff]
        %v360 = vld [vmem:[#allocation7 + $0x230] sm:$0xff]
        %v361 = vld [vmem:[#allocation7 + $0x238] sm:$0xff]
        %v362 = vld [vmem:[#allocation7 + $0x240] sm:$0xff]
        %v363 = vld [vmem:[#allocation7 + $0x248] sm:$0xff]
        %v364 = vld [vmem:[#allocation7 + $0x250] sm:$0xff]
        %v365 = vld [vmem:[#allocation7 + $0x258] sm:$0xff]
        %v366 = vld [vmem:[#allocation7 + $0x260] sm:$0xff]
        %v367 = vld [vmem:[#allocation7 + $0x268] sm:$0xff]
        %v368 = vld [vmem:[#allocation7 + $0x270] sm:$0xff]
        %v369 = vld [vmem:[#allocation7 + $0x278] sm:$0xff]
        %v370 = vld [vmem:[#allocation7 + $0x280] sm:$0xff]
        %v371 = vld [vmem:[#allocation7 + $0x288] sm:$0xff]
        %v372 = vld [vmem:[#allocation7 + $0x290] sm:$0xff]
        %v373 = vld [vmem:[#allocation7 + $0x298] sm:$0xff]
        %v374 = vld [vmem:[#allocation7 + $0x2a0] sm:$0xff]
        %v375 = vld [vmem:[#allocation7 + $0x2a8] sm:$0xff]
        %v376 = vld [vmem:[#allocation7 + $0x2b0] sm:$0xff]
        %v377 = vld [vmem:[#allocation7 + $0x2b8] sm:$0xff]
        %v378 = vld [vmem:[#allocation7 + $0x2c0] sm:$0xff]
        %v379 = vld [vmem:[#allocation7 + $0x2c8] sm:$0xff]
        %v380 = vld [vmem:[#allocation7 + $0x2d0] sm:$0xff]
        %v381 = vld [vmem:[#allocation7 + $0x2d8] sm:$0xff]
        %v382 = vld [vmem:[#allocation7 + $0x2e0] sm:$0xff]
        %v383 = vld [vmem:[#allocation7 + $0x2e8] sm:$0xff]
        %v384 = vld [vmem:[#allocation7 + $0x2f0] sm:$0xff]
        %v385 = vld [vmem:[#allocation7 + $0x2f8] sm:$0xff]
        %v386 = vld [vmem:[#allocation7 + $0x300] sm:$0xff]
        %v387 = vld [vmem:[#allocation7 + $0x308] sm:$0xff]
        %v388 = vld [vmem:[#allocation7 + $0x310] sm:$0xff]
        %v389 = vld [vmem:[#allocation7 + $0x318] sm:$0xff]
        %v390 = vld [vmem:[#allocation7 + $0x320] sm:$0xff]
        %v391 = vld [vmem:[#allocation7 + $0x328] sm:$0xff]
        %v392 = vld [vmem:[#allocation7 + $0x330] sm:$0xff]
        %v393 = vld [vmem:[#allocation7 + $0x338] sm:$0xff]
        %v394 = vld [vmem:[#allocation7 + $0x340] sm:$0xff]
        %v395 = vld [vmem:[#allocation7 + $0x348] sm:$0xff]
        %v396 = vld [vmem:[#allocation7 + $0x350] sm:$0xff]
        %v397 = vld [vmem:[#allocation7 + $0x358] sm:$0xff]
        %v398 = vld [vmem:[#allocation7 + $0x360] sm:$0xff]
        %v399 = vld [vmem:[#allocation7 + $0x368] sm:$0xff]
        %v400 = vld [vmem:[#allocation7 + $0x370] sm:$0xff]
        %v401 = vld [vmem:[#allocation7 + $0x378] sm:$0xff]
        %v402 = vld [vmem:[#allocation7 + $0x380] sm:$0xff]
        %v403 = vld [vmem:[#allocation7 + $0x388] sm:$0xff]
        %v404 = vld [vmem:[#allocation7 + $0x390] sm:$0xff]
        %v405 = vld [vmem:[#allocation7 + $0x398] sm:$0xff]
        %v406 = vld [vmem:[#allocation7 + $0x3a0] sm:$0xff]
        %v407 = vld [vmem:[#allocation7 + $0x3a8] sm:$0xff]
        %v408 = vld [vmem:[#allocation7 + $0x3b0] sm:$0xff]
        %v409 = vld [vmem:[#allocation7 + $0x3b8] sm:$0xff]
        %v410 = vld [vmem:[#allocation7 + $0x3c0] sm:$0xff]
        %v411 = vld [vmem:[#allocation7 + $0x3c8] sm:$0xff]
        %v412 = vld [vmem:[#allocation7 + $0x3d0] sm:$0xff]
        %v413 = vld [vmem:[#allocation7 + $0x3d8] sm:$0xff]
        %v414 = vld [vmem:[#allocation7 + $0x3e0] sm:$0xff]
        %v415 = vld [vmem:[#allocation7 + $0x3e8] sm:$0xff]
        %v416 = vld [vmem:[#allocation7 + $0x3f0] sm:$0xff]
        %v417 = vld [vmem:[#allocation7 + $0x3f8] sm:$0xff]
        %v418 = vld [vmem:[#allocation7 + $0x400] sm:$0xff]
        %v419 = vld [vmem:[#allocation7 + $0x408] sm:$0xff]
        %v420 = vld [vmem:[#allocation7 + $0x410] sm:$0xff]
        %v421 = vld [vmem:[#allocation7 + $0x418] sm:$0xff]
        %v422 = vld [vmem:[#allocation7 + $0x420] sm:$0xff]
        %v423 = vld [vmem:[#allocation7 + $0x428] sm:$0xff]
        %v424 = vld [vmem:[#allocation7 + $0x430] sm:$0xff]
        %v425 = vld [vmem:[#allocation7 + $0x438] sm:$0xff]
        %v426 = vld [vmem:[#allocation7 + $0x440] sm:$0xff]
        %v427 = vld [vmem:[#allocation7 + $0x448] sm:$0xff]
        %v428 = vld [vmem:[#allocation7 + $0x450] sm:$0xff]
        %v429 = vld [vmem:[#allocation7 + $0x458] sm:$0xff]
        %v430 = vld [vmem:[#allocation7 + $0x460] sm:$0xff]
        %v431 = vld [vmem:[#allocation7 + $0x468] sm:$0xff]
        %v432 = vld [vmem:[#allocation7 + $0x470] sm:$0xff]
        %v433 = vld [vmem:[#allocation7 + $0x478] sm:$0xff]
        %v434 = vld [vmem:[#allocation7 + $0x480] sm:$0xff]
        %v435 = vld [vmem:[#allocation7 + $0x488] sm:$0xff]
        %v436 = vld [vmem:[#allocation7 + $0x490] sm:$0xff]
        %v437 = vld [vmem:[#allocation7 + $0x498] sm:$0xff]
        %v438 = vld [vmem:[#allocation7 + $0x4a0] sm:$0xff]
        %v439 = vld [vmem:[#allocation7 + $0x4a8] sm:$0xff]
        %v440 = vld [vmem:[#allocation7 + $0x4b0] sm:$0xff]
        %v441 = vld [vmem:[#allocation7 + $0x4b8] sm:$0xff]
        %v442 = vld [vmem:[#allocation7 + $0x4c0] sm:$0xff]
        %v443 = vld [vmem:[#allocation7 + $0x4c8] sm:$0xff]
        %v444 = vld [vmem:[#allocation7 + $0x4d0] sm:$0xff]
        %v445 = vld [vmem:[#allocation7 + $0x4d8] sm:$0xff]
        %v446 = vld [vmem:[#allocation7 + $0x4e0] sm:$0xff]
        %v447 = vld [vmem:[#allocation7 + $0x4e8] sm:$0xff]
        %v448 = vld [vmem:[#allocation7 + $0x4f0] sm:$0xff]
        %v449 = vld [vmem:[#allocation7 + $0x4f8] sm:$0xff]
        %v450 = vld [vmem:[#allocation7 + $0x500] sm:$0xff]
        %v451 = vld [vmem:[#allocation7 + $0x508] sm:$0xff]
        %v452 = vld [vmem:[#allocation7 + $0x510] sm:$0xff]
        %v453 = vld [vmem:[#allocation7 + $0x518] sm:$0xff]
        %v454 = vld [vmem:[#allocation7 + $0x520] sm:$0xff]
        %v455 = vld [vmem:[#allocation7 + $0x528] sm:$0xff]
        %v456 = vld [vmem:[#allocation7 + $0x530] sm:$0xff]
        %v457 = vld [vmem:[#allocation7 + $0x538] sm:$0xff]
        %v458 = vld [vmem:[#allocation7 + $0x540] sm:$0xff]
        %v459 = vld [vmem:[#allocation7 + $0x548] sm:$0xff]
        %v460 = vld [vmem:[#allocation7 + $0x550] sm:$0xff]
        %v461 = vld [vmem:[#allocation7 + $0x558] sm:$0xff]
        %v462 = vld [vmem:[#allocation7 + $0x560] sm:$0xff]
        %v463 = vld [vmem:[#allocation7 + $0x568] sm:$0xff]
        %v464 = vld [vmem:[#allocation7 + $0x570] sm:$0xff]
        %v465 = vld [vmem:[#allocation7 + $0x578] sm:$0xff]
        %v466 = vld [vmem:[#allocation7 + $0x580] sm:$0xff]
        %v467 = vld [vmem:[#allocation7 + $0x588] sm:$0xff]
        %v468 = vld [vmem:[#allocation7 + $0x590] sm:$0xff]
        %v469 = vld [vmem:[#allocation7 + $0x598] sm:$0xff]
        %v470 = vld [vmem:[#allocation7 + $0x5a0] sm:$0xff]
        %v471 = vld [vmem:[#allocation7 + $0x5a8] sm:$0xff]
        %v472 = vld [vmem:[#allocation7 + $0x5b0] sm:$0xff]
        %v473 = vld [vmem:[#allocation7 + $0x5b8] sm:$0xff]
        %v474 = vld [vmem:[#allocation7 + $0x5c0] sm:$0xff]
        %v475 = vld [vmem:[#allocation7 + $0x5c8] sm:$0xff]
        %v476 = vld [vmem:[#allocation7 + $0x5d0] sm:$0xff]
        %v477 = vld [vmem:[#allocation7 + $0x5d8] sm:$0xff]
        %v478 = vld [vmem:[#allocation7 + $0x5e0] sm:$0xff]
        %v479 = vld [vmem:[#allocation7 + $0x5e8] sm:$0xff]
        %v480 = vld [vmem:[#allocation7 + $0x5f0] sm:$0xff]
        %v481 = vld [vmem:[#allocation7 + $0x5f8] sm:$0xff]
        %v482 = vld [vmem:[#allocation7 + $0x600] sm:$0xff]
        %v483 = vld [vmem:[#allocation7 + $0x608] sm:$0xff]
        %v484 = vld [vmem:[#allocation7 + $0x610] sm:$0xff]
        %v485 = vld [vmem:[#allocation7 + $0x618] sm:$0xff]
        %v486 = vld [vmem:[#allocation7 + $0x620] sm:$0xff]
        %v487 = vld [vmem:[#allocation7 + $0x628] sm:$0xff]
        %v488 = vld [vmem:[#allocation7 + $0x630] sm:$0xff]
        %v489 = vld [vmem:[#allocation7 + $0x638] sm:$0xff]
        %v490 = vld [vmem:[#allocation7 + $0x640] sm:$0xff]
        %v491 = vld [vmem:[#allocation7 + $0x648] sm:$0xff]
        %v492 = vld [vmem:[#allocation7 + $0x650] sm:$0xff]
        %v493 = vld [vmem:[#allocation7 + $0x658] sm:$0xff]
        %v494 = vld [vmem:[#allocation7 + $0x660] sm:$0xff]
        %v495 = vld [vmem:[#allocation7 + $0x668] sm:$0xff]
        %v496 = vld [vmem:[#allocation7 + $0x670] sm:$0xff]
        %v497 = vld [vmem:[#allocation7 + $0x678] sm:$0xff]
        %v498 = vld [vmem:[#allocation7 + $0x680] sm:$0xff]
        %v499 = vld [vmem:[#allocation7 + $0x688] sm:$0xff]
        %v500 = vld [vmem:[#allocation7 + $0x690] sm:$0xff]
        %v501 = vld [vmem:[#allocation7 + $0x698] sm:$0xff]
        %v502 = vld [vmem:[#allocation7 + $0x6a0] sm:$0xff]
        %v503 = vld [vmem:[#allocation7 + $0x6a8] sm:$0xff]
        %v504 = vld [vmem:[#allocation7 + $0x6b0] sm:$0xff]
        %v505 = vld [vmem:[#allocation7 + $0x6b8] sm:$0xff]
        %v506 = vld [vmem:[#allocation7 + $0x6c0] sm:$0xff]
        %v507 = vld [vmem:[#allocation7 + $0x6c8] sm:$0xff]
        %v508 = vld [vmem:[#allocation7 + $0x6d0] sm:$0xff]
        %v509 = vld [vmem:[#allocation7 + $0x6d8] sm:$0xff]
        %v510 = vld [vmem:[#allocation7 + $0x6e0] sm:$0xff]
        %v511 = vld [vmem:[#allocation7 + $0x6e8] sm:$0xff]
        %v512 = vld [vmem:[#allocation7 + $0x6f0] sm:$0xff]
        %v513 = vld [vmem:[#allocation7 + $0x6f8] sm:$0xff]
        %v514 = vld [vmem:[#allocation7 + $0x700] sm:$0xff]
        %v515 = vld [vmem:[#allocation7 + $0x708] sm:$0xff]
        %v516 = vld [vmem:[#allocation7 + $0x710] sm:$0xff]
        %v517 = vld [vmem:[#allocation7 + $0x718] sm:$0xff]
        %v518 = vld [vmem:[#allocation7 + $0x720] sm:$0xff]
        %v519 = vld [vmem:[#allocation7 + $0x728] sm:$0xff]
        %v520 = vld [vmem:[#allocation7 + $0x730] sm:$0xff]
        %v521 = vld [vmem:[#allocation7 + $0x738] sm:$0xff]
        %v522 = vld [vmem:[#allocation7 + $0x740] sm:$0xff]
        %v523 = vld [vmem:[#allocation7 + $0x748] sm:$0xff]
        %v524 = vld [vmem:[#allocation7 + $0x750] sm:$0xff]
        %v525 = vld [vmem:[#allocation7 + $0x758] sm:$0xff]
        %v526 = vld [vmem:[#allocation7 + $0x760] sm:$0xff]
        %v527 = vld [vmem:[#allocation7 + $0x768] sm:$0xff]
        %v528 = vld [vmem:[#allocation7 + $0x770] sm:$0xff]
        %v529 = vld [vmem:[#allocation7 + $0x778] sm:$0xff]
        %v530 = vld [vmem:[#allocation7 + $0x780] sm:$0xff]
        %v531 = vld [vmem:[#allocation7 + $0x788] sm:$0xff]
        %v532 = vld [vmem:[#allocation7 + $0x790] sm:$0xff]
        %v533 = vld [vmem:[#allocation7 + $0x798] sm:$0xff]
        %v534 = vld [vmem:[#allocation7 + $0x7a0] sm:$0xff]
        %v535 = vld [vmem:[#allocation7 + $0x7a8] sm:$0xff]
        %v536 = vld [vmem:[#allocation7 + $0x7b0] sm:$0xff]
        %v537 = vld [vmem:[#allocation7 + $0x7b8] sm:$0xff]
        %v538 = vld [vmem:[#allocation7 + $0x7c0] sm:$0xff]
        %v539 = vld [vmem:[#allocation7 + $0x7c8] sm:$0xff]
        %v540 = vld [vmem:[#allocation7 + $0x7d0] sm:$0xff]
        %v541 = vld [vmem:[#allocation7 + $0x7d8] sm:$0xff]
        %v542 = vld [vmem:[#allocation7 + $0x7e0] sm:$0xff]
        %v543 = vld [vmem:[#allocation7 + $0x7e8] sm:$0xff]
        %v544 = vld [vmem:[#allocation7 + $0x7f0] sm:$0xff]
        %v545 = vld [vmem:[#allocation7 + $0x7f8] sm:$0xff]
        %v546 = vld [vmem:[#allocation7 + $0x800] sm:$0xff]
        %v547 = vld [vmem:[#allocation7 + $0x808] sm:$0xff]
        %v548 = vld [vmem:[#allocation7 + $0x810] sm:$0xff]
        %v549 = vld [vmem:[#allocation7 + $0x818] sm:$0xff]
        %v550 = vld [vmem:[#allocation7 + $0x820] sm:$0xff]
        %v551 = vld [vmem:[#allocation7 + $0x828] sm:$0xff]
        %v552 = vld [vmem:[#allocation7 + $0x830] sm:$0xff]
        %v553 = vld [vmem:[#allocation7 + $0x838] sm:$0xff]
        %v554 = vld [vmem:[#allocation7 + $0x840] sm:$0xff]
        %v555 = vld [vmem:[#allocation7 + $0x848] sm:$0xff]
        %v556 = vld [vmem:[#allocation7 + $0x850] sm:$0xff]
        %v557 = vld [vmem:[#allocation7 + $0x858] sm:$0xff]
        %v558 = vld [vmem:[#allocation7 + $0x860] sm:$0xff]
        %v559 = vld [vmem:[#allocation7 + $0x868] sm:$0xff]
        %v560 = vld [vmem:[#allocation7 + $0x870] sm:$0xff]
        %v561 = vld [vmem:[#allocation7 + $0x878] sm:$0xff]
        %v562 = vld [vmem:[#allocation7 + $0x880] sm:$0xff]
        %v563 = vld [vmem:[#allocation7 + $0x888] sm:$0xff]
        %v564 = vld [vmem:[#allocation7 + $0x890] sm:$0xff]
        %v565 = vld [vmem:[#allocation7 + $0x898] sm:$0xff]
        %v566 = vld [vmem:[#allocation7 + $0x8a0] sm:$0xff]
        %v567 = vld [vmem:[#allocation7 + $0x8a8] sm:$0xff]
        %v568 = vld [vmem:[#allocation7 + $0x8b0] sm:$0xff]
        %v569 = vld [vmem:[#allocation7 + $0x8b8] sm:$0xff]
        %v570 = vld [vmem:[#allocation7 + $0x8c0] sm:$0xff]
        %v571 = vld [vmem:[#allocation7 + $0x8c8] sm:$0xff]
        %v572 = vld [vmem:[#allocation7 + $0x8d0] sm:$0xff]
        %v573 = vld [vmem:[#allocation7 + $0x8d8] sm:$0xff]
        %v574 = vld [vmem:[#allocation7 + $0x8e0] sm:$0xff]
        %v575 = vld [vmem:[#allocation7 + $0x8e8] sm:$0xff]
        %v576 = vld [vmem:[#allocation7 + $0x8f0] sm:$0xff]
        %v577 = vld [vmem:[#allocation7 + $0x8f8] sm:$0xff]
        %v578 = vld [vmem:[#allocation7 + $0x900] sm:$0xff]
        %v579 = vld [vmem:[#allocation7 + $0x908] sm:$0xff]
        %v580 = vld [vmem:[#allocation7 + $0x910] sm:$0xff]
        %v581 = vld [vmem:[#allocation7 + $0x918] sm:$0xff]
        %v582 = vld [vmem:[#allocation7 + $0x920] sm:$0xff]
        %v583 = vld [vmem:[#allocation7 + $0x928] sm:$0xff]
        %v584 = vld [vmem:[#allocation7 + $0x930] sm:$0xff]
        %v585 = vld [vmem:[#allocation7 + $0x938] sm:$0xff]
        %v586 = vld [vmem:[#allocation7 + $0x940] sm:$0xff]
        %v587 = vld [vmem:[#allocation7 + $0x948] sm:$0xff]
        %v588 = vld [vmem:[#allocation7 + $0x950] sm:$0xff]
        %v589 = vld [vmem:[#allocation7 + $0x958] sm:$0xff]
        %v590 = vld [vmem:[#allocation7 + $0x960] sm:$0xff]
        %v591 = vld [vmem:[#allocation7 + $0x968] sm:$0xff]
        %v592 = vld [vmem:[#allocation7 + $0x970] sm:$0xff]
        %v593 = vld [vmem:[#allocation7 + $0x978] sm:$0xff]
        %v594 = vld [vmem:[#allocation7 + $0x980] sm:$0xff]
        %v595 = vld [vmem:[#allocation7 + $0x988] sm:$0xff]
        %v596 = vld [vmem:[#allocation7 + $0x990] sm:$0xff]
        %v597 = vld [vmem:[#allocation7 + $0x998] sm:$0xff]
        %v598 = vld [vmem:[#allocation7 + $0x9a0] sm:$0xff]
        %v599 = vld [vmem:[#allocation7 + $0x9a8] sm:$0xff]
        %v600 = vld [vmem:[#allocation7 + $0x9b0] sm:$0xff]
        %v601 = vld [vmem:[#allocation7 + $0x9b8] sm:$0xff]
        %v602 = vld [vmem:[#allocation7 + $0x9c0] sm:$0xff]
        %v603 = vld [vmem:[#allocation7 + $0x9c8] sm:$0xff]
        %v604 = vld [vmem:[#allocation7 + $0x9d0] sm:$0xff]
        %v605 = vld [vmem:[#allocation7 + $0x9d8] sm:$0xff]
        %v606 = vld [vmem:[#allocation7 + $0x9e0] sm:$0xff]
        %v607 = vld [vmem:[#allocation7 + $0x9e8] sm:$0xff]
        %v608 = vld [vmem:[#allocation7 + $0x9f0] sm:$0xff]
        %v609 = vld [vmem:[#allocation7 + $0x9f8] sm:$0xff]
        %v610 = vld [vmem:[#allocation7 + $0xa00] sm:$0xff]
        %v611 = vld [vmem:[#allocation7 + $0xa08] sm:$0xff]
        %v612 = vld [vmem:[#allocation7 + $0xa10] sm:$0xff]
        %v613 = vld [vmem:[#allocation7 + $0xa18] sm:$0xff]
        %v614 = vld [vmem:[#allocation7 + $0xa20] sm:$0xff]
        %v615 = vld [vmem:[#allocation7 + $0xa28] sm:$0xff]
        %v616 = vld [vmem:[#allocation7 + $0xa30] sm:$0xff]
        %v617 = vld [vmem:[#allocation7 + $0xa38] sm:$0xff]
        %v618 = vld [vmem:[#allocation7 + $0xa40] sm:$0xff]
        %v619 = vld [vmem:[#allocation7 + $0xa48] sm:$0xff]
        %v620 = vld [vmem:[#allocation7 + $0xa50] sm:$0xff]
        %v621 = vld [vmem:[#allocation7 + $0xa58] sm:$0xff]
        %v622 = vld [vmem:[#allocation7 + $0xa60] sm:$0xff]
        %v623 = vld [vmem:[#allocation7 + $0xa68] sm:$0xff]
        %v624 = vld [vmem:[#allocation7 + $0xa70] sm:$0xff]
        %v625 = vld [vmem:[#allocation7 + $0xa78] sm:$0xff]
        %v626 = vld [vmem:[#allocation7 + $0xa80] sm:$0xff]
        %v627 = vld [vmem:[#allocation7 + $0xa88] sm:$0xff]
        %v628 = vld [vmem:[#allocation7 + $0xa90] sm:$0xff]
        %v629 = vld [vmem:[#allocation7 + $0xa98] sm:$0xff]
        %v630 = vld [vmem:[#allocation7 + $0xaa0] sm:$0xff]
        %v631 = vld [vmem:[#allocation7 + $0xaa8] sm:$0xff]
        %v632 = vld [vmem:[#allocation7 + $0xab0] sm:$0xff]
        %v633 = vld [vmem:[#allocation7 + $0xab8] sm:$0xff]
        %v634 = vld [vmem:[#allocation7 + $0xac0] sm:$0xff]
        %v635 = vld [vmem:[#allocation7 + $0xac8] sm:$0xff]
        %v636 = vld [vmem:[#allocation7 + $0xad0] sm:$0xff]
        %v637 = vld [vmem:[#allocation7 + $0xad8] sm:$0xff]
        %v638 = vld [vmem:[#allocation7 + $0xae0] sm:$0xff]
        %v639 = vld [vmem:[#allocation7 + $0xae8] sm:$0xff]
        %v640 = vld [vmem:[#allocation7 + $0xaf0] sm:$0xff]
        %v641 = vld [vmem:[#allocation7 + $0xaf8] sm:$0xff]
        %v642 = vld [vmem:[#allocation7 + $0xb00] sm:$0xff]
        %v643 = vld [vmem:[#allocation7 + $0xb08] sm:$0xff]
        %v644 = vld [vmem:[#allocation7 + $0xb10] sm:$0xff]
        %v645 = vld [vmem:[#allocation7 + $0xb18] sm:$0xff]
        %v646 = vld [vmem:[#allocation7 + $0xb20] sm:$0xff]
        %v647 = vld [vmem:[#allocation7 + $0xb28] sm:$0xff]
        %v648 = vld [vmem:[#allocation7 + $0xb30] sm:$0xff]
        %v649 = vld [vmem:[#allocation7 + $0xb38] sm:$0xff]
        %v650 = vld [vmem:[#allocation7 + $0xb40] sm:$0xff]
        %v651 = vld [vmem:[#allocation7 + $0xb48] sm:$0xff]
        %v652 = vld [vmem:[#allocation7 + $0xb50] sm:$0xff]
        %v653 = vld [vmem:[#allocation7 + $0xb58] sm:$0xff]
        %v654 = vld [vmem:[#allocation7 + $0xb60] sm:$0xff]
        %v655 = vld [vmem:[#allocation7 + $0xb68] sm:$0xff]
        %v656 = vld [vmem:[#allocation7 + $0xb70] sm:$0xff]
        %v657 = vld [vmem:[#allocation7 + $0xb78] sm:$0xff]
        %v658 = vld [vmem:[#allocation7 + $0xb80] sm:$0xff]
        %v659 = vld [vmem:[#allocation7 + $0xb88] sm:$0xff]
        %v660 = vld [vmem:[#allocation7 + $0xb90] sm:$0xff]
        %v661 = vld [vmem:[#allocation7 + $0xb98] sm:$0xff]
        %v662 = vld [vmem:[#allocation7 + $0xba0] sm:$0xff]
        %v663 = vld [vmem:[#allocation7 + $0xba8] sm:$0xff]
        %v664 = vld [vmem:[#allocation7 + $0xbb0] sm:$0xff]
        %v665 = vld [vmem:[#allocation7 + $0xbb8] sm:$0xff]
        %v666 = vld [vmem:[#allocation7 + $0xbc0] sm:$0xff]
        %v667 = vld [vmem:[#allocation7 + $0xbc8] sm:$0xff]
        %v668 = vld [vmem:[#allocation7 + $0xbd0] sm:$0xff]
        %v669 = vld [vmem:[#allocation7 + $0xbd8] sm:$0xff]
        %v670 = vld [vmem:[#allocation7 + $0xbe0] sm:$0xff]
        %v671 = vld [vmem:[#allocation7 + $0xbe8] sm:$0xff]
        %v672 = vld [vmem:[#allocation7 + $0xbf0] sm:$0xff]
        %v673 = vld [vmem:[#allocation7 + $0xbf8] sm:$0xff]
        %v674 = vld [vmem:[#allocation8] sm:$0xff]
        %v675 = vld [vmem:[#allocation8 + $0x8] sm:$0xf]
        %v678 = vlaneseq
        %v679 = vshrl.u32 %v678, 7
        %v680 = vsub.s32 0, %v679
        %v681 = vrot.slane %v674, %v680
        %v682 = vlaneseq
        %v683 = vshrl.u32 %v682, 7
        %v684 = vsub.s32 1, %v683
        %v685 = vrot.slane %v674, %v684
        %v686 = vlaneseq
        %v687 = vshrl.u32 %v686, 7
        %v688 = vsub.s32 2, %v687
        %v689 = vrot.slane %v674, %v688
        %v690 = vlaneseq
        %v691 = vshrl.u32 %v690, 7
        %v692 = vsub.s32 3, %v691
        %v693 = vrot.slane %v674, %v692
        %v694 = vlaneseq
        %v695 = vshrl.u32 %v694, 7
        %v696 = vsub.s32 4, %v695
        %v697 = vrot.slane %v674, %v696
        %v698 = vlaneseq
        %v699 = vshrl.u32 %v698, 7
        %v700 = vsub.s32 5, %v699
        %v701 = vrot.slane %v674, %v700
        %v702 = vlaneseq
        %v703 = vshrl.u32 %v702, 7
        %v704 = vsub.s32 6, %v703
        %v705 = vrot.slane %v674, %v704
        %v706 = vlaneseq
        %v707 = vshrl.u32 %v706, 7
        %v708 = vsub.s32 7, %v707
        %v709 = vrot.slane %v674, %v708
        %v710 = vlaneseq
        %v711 = vshrl.u32 %v710, 7
        %v712 = vsub.s32 0, %v711
        %v713 = vrot.slane %v675, %v712
        %v714 = vlaneseq
        %v715 = vshrl.u32 %v714, 7
        %v716 = vsub.s32 1, %v715
        %v717 = vrot.slane %v675, %v716
        %v718 = vlaneseq
        %v719 = vshrl.u32 %v718, 7
        %v720 = vsub.s32 2, %v719
        %v721 = vrot.slane %v675, %v720
        %v722 = vlaneseq
        %v723 = vshrl.u32 %v722, 7
        %v724 = vsub.s32 3, %v723
        %v725 = vrot.slane %v675, %v724
        %v1122 = vunpack.c.l.b16 %v290
        %v1123 = vunpack.c.h.b16 %v290
        %v1124 = vunpack.c.l.b16 %v291
        %v1125 = vunpack.c.h.b16 %v291
        %v1126 = vunpack.c.l.b16 %v292
        %v1127 = vunpack.c.h.b16 %v292
        %v1128 = vunpack.c.l.b16 %v293
        %v1129 = vunpack.c.h.b16 %v293
        %v1130 = vunpack.c.l.b16 %v294
        %v1131 = vunpack.c.h.b16 %v294
        %v1132 = vunpack.c.l.b16 %v295
        %v1133 = vunpack.c.h.b16 %v295
        %v1134 = vunpack.c.l.b16 %v296
        %v1135 = vunpack.c.h.b16 %v296
        %v1136 = vunpack.c.l.b16 %v297
        %v1137 = vunpack.c.h.b16 %v297
        %v1138 = vunpack.c.l.b16 %v298
        %v1139 = vunpack.c.h.b16 %v298
        %v1140 = vunpack.c.l.b16 %v299
        %v1141 = vunpack.c.h.b16 %v299
        %v1142 = vunpack.c.l.b16 %v300
        %v1143 = vunpack.c.h.b16 %v300
        %v1144 = vunpack.c.l.b16 %v301
        %v1145 = vunpack.c.h.b16 %v301
        %v1146 = vunpack.c.l.b16 %v302
        %v1147 = vunpack.c.h.b16 %v302
        %v1148 = vunpack.c.l.b16 %v303
        %v1149 = vunpack.c.h.b16 %v303
        %v1150 = vunpack.c.l.b16 %v304
        %v1151 = vunpack.c.h.b16 %v304
        %v1152 = vunpack.c.l.b16 %v305
        %v1153 = vunpack.c.h.b16 %v305
        %v1154 = vunpack.c.l.b16 %v306
        %v1155 = vunpack.c.h.b16 %v306
        %v1156 = vunpack.c.l.b16 %v307
        %v1157 = vunpack.c.h.b16 %v307
        %v1158 = vunpack.c.l.b16 %v308
        %v1159 = vunpack.c.h.b16 %v308
        %v1160 = vunpack.c.l.b16 %v309
        %v1161 = vunpack.c.h.b16 %v309
        %v1162 = vunpack.c.l.b16 %v310
        %v1163 = vunpack.c.h.b16 %v310
        %v1164 = vunpack.c.l.b16 %v311
        %v1165 = vunpack.c.h.b16 %v311
        %v1166 = vunpack.c.l.b16 %v312
        %v1167 = vunpack.c.h.b16 %v312
        %v1168 = vunpack.c.l.b16 %v313
        %v1169 = vunpack.c.h.b16 %v313
        %v1170 = vunpack.c.l.b16 %v314
        %v1171 = vunpack.c.h.b16 %v314
        %v1172 = vunpack.c.l.b16 %v315
        %v1173 = vunpack.c.h.b16 %v315
        %v1174 = vunpack.c.l.b16 %v316
        %v1175 = vunpack.c.h.b16 %v316
        %v1176 = vunpack.c.l.b16 %v317
        %v1177 = vunpack.c.h.b16 %v317
        %v1178 = vunpack.c.l.b16 %v318
        %v1179 = vunpack.c.h.b16 %v318
        %v1180 = vunpack.c.l.b16 %v319
        %v1181 = vunpack.c.h.b16 %v319
        %v1182 = vunpack.c.l.b16 %v320
        %v1183 = vunpack.c.h.b16 %v320
        %v1184 = vunpack.c.l.b16 %v321
        %v1185 = vunpack.c.h.b16 %v321
        %v1186 = vunpack.c.l.b16 %v322
        %v1187 = vunpack.c.h.b16 %v322
        %v1188 = vunpack.c.l.b16 %v323
        %v1189 = vunpack.c.h.b16 %v323
        %v1190 = vunpack.c.l.b16 %v324
        %v1191 = vunpack.c.h.b16 %v324
        %v1192 = vunpack.c.l.b16 %v325
        %v1193 = vunpack.c.h.b16 %v325
        %v1194 = vunpack.c.l.b16 %v326
        %v1195 = vunpack.c.h.b16 %v326
        %v1196 = vunpack.c.l.b16 %v327
        %v1197 = vunpack.c.h.b16 %v327
        %v1198 = vunpack.c.l.b16 %v328
        %v1199 = vunpack.c.h.b16 %v328
        %v1200 = vunpack.c.l.b16 %v329
        %v1201 = vunpack.c.h.b16 %v329
        %v1202 = vunpack.c.l.b16 %v330
        %v1203 = vunpack.c.h.b16 %v330
        %v1204 = vunpack.c.l.b16 %v331
        %v1205 = vunpack.c.h.b16 %v331
        %v1206 = vunpack.c.l.b16 %v332
        %v1207 = vunpack.c.h.b16 %v332
        %v1208 = vunpack.c.l.b16 %v333
        %v1209 = vunpack.c.h.b16 %v333
        %v1210 = vunpack.c.l.b16 %v334
        %v1211 = vunpack.c.h.b16 %v334
        %v1212 = vunpack.c.l.b16 %v335
        %v1213 = vunpack.c.h.b16 %v335
        %v1214 = vunpack.c.l.b16 %v336
        %v1215 = vunpack.c.h.b16 %v336
        %v1216 = vunpack.c.l.b16 %v337
        %v1217 = vunpack.c.h.b16 %v337
        %v1218 = vunpack.c.l.b16 %v338
        %v1219 = vunpack.c.h.b16 %v338
        %v1220 = vunpack.c.l.b16 %v339
        %v1221 = vunpack.c.h.b16 %v339
        %v1222 = vunpack.c.l.b16 %v340
        %v1223 = vunpack.c.h.b16 %v340
        %v1224 = vunpack.c.l.b16 %v341
        %v1225 = vunpack.c.h.b16 %v341
        %v1226 = vunpack.c.l.b16 %v342
        %v1227 = vunpack.c.h.b16 %v342
        %v1228 = vunpack.c.l.b16 %v343
        %v1229 = vunpack.c.h.b16 %v343
        %v1230 = vunpack.c.l.b16 %v344
        %v1231 = vunpack.c.h.b16 %v344
        %v1232 = vunpack.c.l.b16 %v345
        %v1233 = vunpack.c.h.b16 %v345
        %v1234 = vunpack.c.l.b16 %v346
        %v1235 = vunpack.c.h.b16 %v346
        %v1236 = vunpack.c.l.b16 %v347
        %v1237 = vunpack.c.h.b16 %v347
        %v1238 = vunpack.c.l.b16 %v348
        %v1239 = vunpack.c.h.b16 %v348
        %v1240 = vunpack.c.l.b16 %v349
        %v1241 = vunpack.c.h.b16 %v349
        %v1242 = vunpack.c.l.b16 %v350
        %v1243 = vunpack.c.h.b16 %v350
        %v1244 = vunpack.c.l.b16 %v351
        %v1245 = vunpack.c.h.b16 %v351
        %v1246 = vunpack.c.l.b16 %v352
        %v1247 = vunpack.c.h.b16 %v352
        %v1248 = vunpack.c.l.b16 %v353
        %v1249 = vunpack.c.h.b16 %v353
        %v1250 = vunpack.c.l.b16 %v354
        %v1251 = vunpack.c.h.b16 %v354
        %v1252 = vunpack.c.l.b16 %v355
        %v1253 = vunpack.c.h.b16 %v355
        %v1254 = vunpack.c.l.b16 %v356
        %v1255 = vunpack.c.h.b16 %v356
        %v1256 = vunpack.c.l.b16 %v357
        %v1257 = vunpack.c.h.b16 %v357
        %v1258 = vunpack.c.l.b16 %v358
        %v1259 = vunpack.c.h.b16 %v358
        %v1260 = vunpack.c.l.b16 %v359
        %v1261 = vunpack.c.h.b16 %v359
        %v1262 = vunpack.c.l.b16 %v360
        %v1263 = vunpack.c.h.b16 %v360
        %v1264 = vunpack.c.l.b16 %v361
        %v1265 = vunpack.c.h.b16 %v361
        %v1266 = vunpack.c.l.b16 %v362
        %v1267 = vunpack.c.h.b16 %v362
        %v1268 = vunpack.c.l.b16 %v363
        %v1269 = vunpack.c.h.b16 %v363
        %v1270 = vunpack.c.l.b16 %v364
        %v1271 = vunpack.c.h.b16 %v364
        %v1272 = vunpack.c.l.b16 %v365
        %v1273 = vunpack.c.h.b16 %v365
        %v1274 = vunpack.c.l.b16 %v366
        %v1275 = vunpack.c.h.b16 %v366
        %v1276 = vunpack.c.l.b16 %v367
        %v1277 = vunpack.c.h.b16 %v367
        %v1278 = vunpack.c.l.b16 %v368
        %v1279 = vunpack.c.h.b16 %v368
        %v1280 = vunpack.c.l.b16 %v369
        %v1281 = vunpack.c.h.b16 %v369
        %v1282 = vunpack.c.l.b16 %v370
        %v1283 = vunpack.c.h.b16 %v370
        %v1284 = vunpack.c.l.b16 %v371
        %v1285 = vunpack.c.h.b16 %v371
        %v1286 = vunpack.c.l.b16 %v372
        %v1287 = vunpack.c.h.b16 %v372
        %v1288 = vunpack.c.l.b16 %v373
        %v1289 = vunpack.c.h.b16 %v373
        %v1290 = vunpack.c.l.b16 %v374
        %v1291 = vunpack.c.h.b16 %v374
        %v1292 = vunpack.c.l.b16 %v375
        %v1293 = vunpack.c.h.b16 %v375
        %v1294 = vunpack.c.l.b16 %v376
        %v1295 = vunpack.c.h.b16 %v376
        %v1296 = vunpack.c.l.b16 %v377
        %v1297 = vunpack.c.h.b16 %v377
        %v1298 = vunpack.c.l.b16 %v378
        %v1299 = vunpack.c.h.b16 %v378
        %v1300 = vunpack.c.l.b16 %v379
        %v1301 = vunpack.c.h.b16 %v379
        %v1302 = vunpack.c.l.b16 %v380
        %v1303 = vunpack.c.h.b16 %v380
        %v1304 = vunpack.c.l.b16 %v381
        %v1305 = vunpack.c.h.b16 %v381
        %v1306 = vunpack.c.l.b16 %v382
        %v1307 = vunpack.c.h.b16 %v382
        %v1308 = vunpack.c.l.b16 %v383
        %v1309 = vunpack.c.h.b16 %v383
        %v1310 = vunpack.c.l.b16 %v384
        %v1311 = vunpack.c.h.b16 %v384
        %v1312 = vunpack.c.l.b16 %v385
        %v1313 = vunpack.c.h.b16 %v385
        %v1314 = vunpack.c.l.b16 %v386
        %v1315 = vunpack.c.h.b16 %v386
        %v1316 = vunpack.c.l.b16 %v387
        %v1317 = vunpack.c.h.b16 %v387
        %v1318 = vunpack.c.l.b16 %v388
        %v1319 = vunpack.c.h.b16 %v388
        %v1320 = vunpack.c.l.b16 %v389
        %v1321 = vunpack.c.h.b16 %v389
        %v1322 = vunpack.c.l.b16 %v390
        %v1323 = vunpack.c.h.b16 %v390
        %v1324 = vunpack.c.l.b16 %v391
        %v1325 = vunpack.c.h.b16 %v391
        %v1326 = vunpack.c.l.b16 %v392
        %v1327 = vunpack.c.h.b16 %v392
        %v1328 = vunpack.c.l.b16 %v393
        %v1329 = vunpack.c.h.b16 %v393
        %v1330 = vunpack.c.l.b16 %v394
        %v1331 = vunpack.c.h.b16 %v394
        %v1332 = vunpack.c.l.b16 %v395
        %v1333 = vunpack.c.h.b16 %v395
        %v1334 = vunpack.c.l.b16 %v396
        %v1335 = vunpack.c.h.b16 %v396
        %v1336 = vunpack.c.l.b16 %v397
        %v1337 = vunpack.c.h.b16 %v397
        %v1338 = vunpack.c.l.b16 %v398
        %v1339 = vunpack.c.h.b16 %v398
        %v1340 = vunpack.c.l.b16 %v399
        %v1341 = vunpack.c.h.b16 %v399
        %v1342 = vunpack.c.l.b16 %v400
        %v1343 = vunpack.c.h.b16 %v400
        %v1344 = vunpack.c.l.b16 %v401
        %v1345 = vunpack.c.h.b16 %v401
        %v1346 = vunpack.c.l.b16 %v402
        %v1347 = vunpack.c.h.b16 %v402
        %v1348 = vunpack.c.l.b16 %v403
        %v1349 = vunpack.c.h.b16 %v403
        %v1350 = vunpack.c.l.b16 %v404
        %v1351 = vunpack.c.h.b16 %v404
        %v1352 = vunpack.c.l.b16 %v405
        %v1353 = vunpack.c.h.b16 %v405
        %v1354 = vunpack.c.l.b16 %v406
        %v1355 = vunpack.c.h.b16 %v406
        %v1356 = vunpack.c.l.b16 %v407
        %v1357 = vunpack.c.h.b16 %v407
        %v1358 = vunpack.c.l.b16 %v408
        %v1359 = vunpack.c.h.b16 %v408
        %v1360 = vunpack.c.l.b16 %v409
        %v1361 = vunpack.c.h.b16 %v409
        %v1362 = vunpack.c.l.b16 %v410
        %v1363 = vunpack.c.h.b16 %v410
        %v1364 = vunpack.c.l.b16 %v411
        %v1365 = vunpack.c.h.b16 %v411
        %v1366 = vunpack.c.l.b16 %v412
        %v1367 = vunpack.c.h.b16 %v412
        %v1368 = vunpack.c.l.b16 %v413
        %v1369 = vunpack.c.h.b16 %v413
        %v1370 = vunpack.c.l.b16 %v414
        %v1371 = vunpack.c.h.b16 %v414
        %v1372 = vunpack.c.l.b16 %v415
        %v1373 = vunpack.c.h.b16 %v415
        %v1374 = vunpack.c.l.b16 %v416
        %v1375 = vunpack.c.h.b16 %v416
        %v1376 = vunpack.c.l.b16 %v417
        %v1377 = vunpack.c.h.b16 %v417
        %v1378 = vunpack.c.l.b16 %v418
        %v1379 = vunpack.c.h.b16 %v418
        %v1380 = vunpack.c.l.b16 %v419
        %v1381 = vunpack.c.h.b16 %v419
        %v1382 = vunpack.c.l.b16 %v420
        %v1383 = vunpack.c.h.b16 %v420
        %v1384 = vunpack.c.l.b16 %v421
        %v1385 = vunpack.c.h.b16 %v421
        %v1386 = vunpack.c.l.b16 %v422
        %v1387 = vunpack.c.h.b16 %v422
        %v1388 = vunpack.c.l.b16 %v423
        %v1389 = vunpack.c.h.b16 %v423
        %v1390 = vunpack.c.l.b16 %v424
        %v1391 = vunpack.c.h.b16 %v424
        %v1392 = vunpack.c.l.b16 %v425
        %v1393 = vunpack.c.h.b16 %v425
        %v1394 = vunpack.c.l.b16 %v426
        %v1395 = vunpack.c.h.b16 %v426
        %v1396 = vunpack.c.l.b16 %v427
        %v1397 = vunpack.c.h.b16 %v427
        %v1398 = vunpack.c.l.b16 %v428
        %v1399 = vunpack.c.h.b16 %v428
        %v1400 = vunpack.c.l.b16 %v429
        %v1401 = vunpack.c.h.b16 %v429
        %v1402 = vunpack.c.l.b16 %v430
        %v1403 = vunpack.c.h.b16 %v430
        %v1404 = vunpack.c.l.b16 %v431
        %v1405 = vunpack.c.h.b16 %v431
        %v1406 = vunpack.c.l.b16 %v432
        %v1407 = vunpack.c.h.b16 %v432
        %v1408 = vunpack.c.l.b16 %v433
        %v1409 = vunpack.c.h.b16 %v433
        %v1410 = vunpack.c.l.b16 %v434
        %v1411 = vunpack.c.h.b16 %v434
        %v1412 = vunpack.c.l.b16 %v435
        %v1413 = vunpack.c.h.b16 %v435
        %v1414 = vunpack.c.l.b16 %v436
        %v1415 = vunpack.c.h.b16 %v436
        %v1416 = vunpack.c.l.b16 %v437
        %v1417 = vunpack.c.h.b16 %v437
        %v1418 = vunpack.c.l.b16 %v438
        %v1419 = vunpack.c.h.b16 %v438
        %v1420 = vunpack.c.l.b16 %v439
        %v1421 = vunpack.c.h.b16 %v439
        %v1422 = vunpack.c.l.b16 %v440
        %v1423 = vunpack.c.h.b16 %v440
        %v1424 = vunpack.c.l.b16 %v441
        %v1425 = vunpack.c.h.b16 %v441
        %v1426 = vunpack.c.l.b16 %v442
        %v1427 = vunpack.c.h.b16 %v442
        %v1428 = vunpack.c.l.b16 %v443
        %v1429 = vunpack.c.h.b16 %v443
        %v1430 = vunpack.c.l.b16 %v444
        %v1431 = vunpack.c.h.b16 %v444
        %v1432 = vunpack.c.l.b16 %v445
        %v1433 = vunpack.c.h.b16 %v445
        %v1434 = vunpack.c.l.b16 %v446
        %v1435 = vunpack.c.h.b16 %v446
        %v1436 = vunpack.c.l.b16 %v447
        %v1437 = vunpack.c.h.b16 %v447
        %v1438 = vunpack.c.l.b16 %v448
        %v1439 = vunpack.c.h.b16 %v448
        %v1440 = vunpack.c.l.b16 %v449
        %v1441 = vunpack.c.h.b16 %v449
        %v1442 = vunpack.c.l.b16 %v450
        %v1443 = vunpack.c.h.b16 %v450
        %v1444 = vunpack.c.l.b16 %v451
        %v1445 = vunpack.c.h.b16 %v451
        %v1446 = vunpack.c.l.b16 %v452
        %v1447 = vunpack.c.h.b16 %v452
        %v1448 = vunpack.c.l.b16 %v453
        %v1449 = vunpack.c.h.b16 %v453
        %v1450 = vunpack.c.l.b16 %v454
        %v1451 = vunpack.c.h.b16 %v454
        %v1452 = vunpack.c.l.b16 %v455
        %v1453 = vunpack.c.h.b16 %v455
        %v1454 = vunpack.c.l.b16 %v456
        %v1455 = vunpack.c.h.b16 %v456
        %v1456 = vunpack.c.l.b16 %v457
        %v1457 = vunpack.c.h.b16 %v457
        %v1458 = vunpack.c.l.b16 %v458
        %v1459 = vunpack.c.h.b16 %v458
        %v1460 = vunpack.c.l.b16 %v459
        %v1461 = vunpack.c.h.b16 %v459
        %v1462 = vunpack.c.l.b16 %v460
        %v1463 = vunpack.c.h.b16 %v460
        %v1464 = vunpack.c.l.b16 %v461
        %v1465 = vunpack.c.h.b16 %v461
        %v1466 = vunpack.c.l.b16 %v462
        %v1467 = vunpack.c.h.b16 %v462
        %v1468 = vunpack.c.l.b16 %v463
        %v1469 = vunpack.c.h.b16 %v463
        %v1470 = vunpack.c.l.b16 %v464
        %v1471 = vunpack.c.h.b16 %v464
        %v1472 = vunpack.c.l.b16 %v465
        %v1473 = vunpack.c.h.b16 %v465
        %v1474 = vunpack.c.l.b16 %v466
        %v1475 = vunpack.c.h.b16 %v466
        %v1476 = vunpack.c.l.b16 %v467
        %v1477 = vunpack.c.h.b16 %v467
        %v1478 = vunpack.c.l.b16 %v468
        %v1479 = vunpack.c.h.b16 %v468
        %v1480 = vunpack.c.l.b16 %v469
        %v1481 = vunpack.c.h.b16 %v469
        %v1482 = vunpack.c.l.b16 %v470
        %v1483 = vunpack.c.h.b16 %v470
        %v1484 = vunpack.c.l.b16 %v471
        %v1485 = vunpack.c.h.b16 %v471
        %v1486 = vunpack.c.l.b16 %v472
        %v1487 = vunpack.c.h.b16 %v472
        %v1488 = vunpack.c.l.b16 %v473
        %v1489 = vunpack.c.h.b16 %v473
        %v1490 = vunpack.c.l.b16 %v474
        %v1491 = vunpack.c.h.b16 %v474
        %v1492 = vunpack.c.l.b16 %v475
        %v1493 = vunpack.c.h.b16 %v475
        %v1494 = vunpack.c.l.b16 %v476
        %v1495 = vunpack.c.h.b16 %v476
        %v1496 = vunpack.c.l.b16 %v477
        %v1497 = vunpack.c.h.b16 %v477
        %v1498 = vunpack.c.l.b16 %v478
        %v1499 = vunpack.c.h.b16 %v478
        %v1500 = vunpack.c.l.b16 %v479
        %v1501 = vunpack.c.h.b16 %v479
        %v1502 = vunpack.c.l.b16 %v480
        %v1503 = vunpack.c.h.b16 %v480
        %v1504 = vunpack.c.l.b16 %v481
        %v1505 = vunpack.c.h.b16 %v481
        %v1506 = vunpack.c.l.b16 %v482
        %v1507 = vunpack.c.h.b16 %v482
        %v1508 = vunpack.c.l.b16 %v483
        %v1509 = vunpack.c.h.b16 %v483
        %v1510 = vunpack.c.l.b16 %v484
        %v1511 = vunpack.c.h.b16 %v484
        %v1512 = vunpack.c.l.b16 %v485
        %v1513 = vunpack.c.h.b16 %v485
        %v1514 = vunpack.c.l.b16 %v486
        %v1515 = vunpack.c.h.b16 %v486
        %v1516 = vunpack.c.l.b16 %v487
        %v1517 = vunpack.c.h.b16 %v487
        %v1518 = vunpack.c.l.b16 %v488
        %v1519 = vunpack.c.h.b16 %v488
        %v1520 = vunpack.c.l.b16 %v489
        %v1521 = vunpack.c.h.b16 %v489
        %v1522 = vunpack.c.l.b16 %v490
        %v1523 = vunpack.c.h.b16 %v490
        %v1524 = vunpack.c.l.b16 %v491
        %v1525 = vunpack.c.h.b16 %v491
        %v1526 = vunpack.c.l.b16 %v492
        %v1527 = vunpack.c.h.b16 %v492
        %v1528 = vunpack.c.l.b16 %v493
        %v1529 = vunpack.c.h.b16 %v493
        %v1530 = vunpack.c.l.b16 %v494
        %v1531 = vunpack.c.h.b16 %v494
        %v1532 = vunpack.c.l.b16 %v495
        %v1533 = vunpack.c.h.b16 %v495
        %v1534 = vunpack.c.l.b16 %v496
        %v1535 = vunpack.c.h.b16 %v496
        %v1536 = vunpack.c.l.b16 %v497
        %v1537 = vunpack.c.h.b16 %v497
        %v1538 = vunpack.c.l.b16 %v498
        %v1539 = vunpack.c.h.b16 %v498
        %v1540 = vunpack.c.l.b16 %v499
        %v1541 = vunpack.c.h.b16 %v499
        %v1542 = vunpack.c.l.b16 %v500
        %v1543 = vunpack.c.h.b16 %v500
        %v1544 = vunpack.c.l.b16 %v501
        %v1545 = vunpack.c.h.b16 %v501
        %v1546 = vunpack.c.l.b16 %v502
        %v1547 = vunpack.c.h.b16 %v502
        %v1548 = vunpack.c.l.b16 %v503
        %v1549 = vunpack.c.h.b16 %v503
        %v1550 = vunpack.c.l.b16 %v504
        %v1551 = vunpack.c.h.b16 %v504
        %v1552 = vunpack.c.l.b16 %v505
        %v1553 = vunpack.c.h.b16 %v505
        %v1554 = vunpack.c.l.b16 %v506
        %v1555 = vunpack.c.h.b16 %v506
        %v1556 = vunpack.c.l.b16 %v507
        %v1557 = vunpack.c.h.b16 %v507
        %v1558 = vunpack.c.l.b16 %v508
        %v1559 = vunpack.c.h.b16 %v508
        %v1560 = vunpack.c.l.b16 %v509
        %v1561 = vunpack.c.h.b16 %v509
        %v1562 = vunpack.c.l.b16 %v510
        %v1563 = vunpack.c.h.b16 %v510
        %v1564 = vunpack.c.l.b16 %v511
        %v1565 = vunpack.c.h.b16 %v511
        %v1566 = vunpack.c.l.b16 %v512
        %v1567 = vunpack.c.h.b16 %v512
        %v1568 = vunpack.c.l.b16 %v513
        %v1569 = vunpack.c.h.b16 %v513
        %v1570 = vunpack.c.l.b16 %v514
        %v1571 = vunpack.c.h.b16 %v514
        %v1572 = vunpack.c.l.b16 %v515
        %v1573 = vunpack.c.h.b16 %v515
        %v1574 = vunpack.c.l.b16 %v516
        %v1575 = vunpack.c.h.b16 %v516
        %v1576 = vunpack.c.l.b16 %v517
        %v1577 = vunpack.c.h.b16 %v517
        %v1578 = vunpack.c.l.b16 %v518
        %v1579 = vunpack.c.h.b16 %v518
        %v1580 = vunpack.c.l.b16 %v519
        %v1581 = vunpack.c.h.b16 %v519
        %v1582 = vunpack.c.l.b16 %v520
        %v1583 = vunpack.c.h.b16 %v520
        %v1584 = vunpack.c.l.b16 %v521
        %v1585 = vunpack.c.h.b16 %v521
        %v1586 = vunpack.c.l.b16 %v522
        %v1587 = vunpack.c.h.b16 %v522
        %v1588 = vunpack.c.l.b16 %v523
        %v1589 = vunpack.c.h.b16 %v523
        %v1590 = vunpack.c.l.b16 %v524
        %v1591 = vunpack.c.h.b16 %v524
        %v1592 = vunpack.c.l.b16 %v525
        %v1593 = vunpack.c.h.b16 %v525
        %v1594 = vunpack.c.l.b16 %v526
        %v1595 = vunpack.c.h.b16 %v526
        %v1596 = vunpack.c.l.b16 %v527
        %v1597 = vunpack.c.h.b16 %v527
        %v1598 = vunpack.c.l.b16 %v528
        %v1599 = vunpack.c.h.b16 %v528
        %v1600 = vunpack.c.l.b16 %v529
        %v1601 = vunpack.c.h.b16 %v529
        %v1602 = vunpack.c.l.b16 %v530
        %v1603 = vunpack.c.h.b16 %v530
        %v1604 = vunpack.c.l.b16 %v531
        %v1605 = vunpack.c.h.b16 %v531
        %v1606 = vunpack.c.l.b16 %v532
        %v1607 = vunpack.c.h.b16 %v532
        %v1608 = vunpack.c.l.b16 %v533
        %v1609 = vunpack.c.h.b16 %v533
        %v1610 = vunpack.c.l.b16 %v534
        %v1611 = vunpack.c.h.b16 %v534
        %v1612 = vunpack.c.l.b16 %v535
        %v1613 = vunpack.c.h.b16 %v535
        %v1614 = vunpack.c.l.b16 %v536
        %v1615 = vunpack.c.h.b16 %v536
        %v1616 = vunpack.c.l.b16 %v537
        %v1617 = vunpack.c.h.b16 %v537
        %v1618 = vunpack.c.l.b16 %v538
        %v1619 = vunpack.c.h.b16 %v538
        %v1620 = vunpack.c.l.b16 %v539
        %v1621 = vunpack.c.h.b16 %v539
        %v1622 = vunpack.c.l.b16 %v540
        %v1623 = vunpack.c.h.b16 %v540
        %v1624 = vunpack.c.l.b16 %v541
        %v1625 = vunpack.c.h.b16 %v541
        %v1626 = vunpack.c.l.b16 %v542
        %v1627 = vunpack.c.h.b16 %v542
        %v1628 = vunpack.c.l.b16 %v543
        %v1629 = vunpack.c.h.b16 %v543
        %v1630 = vunpack.c.l.b16 %v544
        %v1631 = vunpack.c.h.b16 %v544
        %v1632 = vunpack.c.l.b16 %v545
        %v1633 = vunpack.c.h.b16 %v545
        %v1634 = vunpack.c.l.b16 %v546
        %v1635 = vunpack.c.h.b16 %v546
        %v1636 = vunpack.c.l.b16 %v547
        %v1637 = vunpack.c.h.b16 %v547
        %v1638 = vunpack.c.l.b16 %v548
        %v1639 = vunpack.c.h.b16 %v548
        %v1640 = vunpack.c.l.b16 %v549
        %v1641 = vunpack.c.h.b16 %v549
        %v1642 = vunpack.c.l.b16 %v550
        %v1643 = vunpack.c.h.b16 %v550
        %v1644 = vunpack.c.l.b16 %v551
        %v1645 = vunpack.c.h.b16 %v551
        %v1646 = vunpack.c.l.b16 %v552
        %v1647 = vunpack.c.h.b16 %v552
        %v1648 = vunpack.c.l.b16 %v553
        %v1649 = vunpack.c.h.b16 %v553
        %v1650 = vunpack.c.l.b16 %v554
        %v1651 = vunpack.c.h.b16 %v554
        %v1652 = vunpack.c.l.b16 %v555
        %v1653 = vunpack.c.h.b16 %v555
        %v1654 = vunpack.c.l.b16 %v556
        %v1655 = vunpack.c.h.b16 %v556
        %v1656 = vunpack.c.l.b16 %v557
        %v1657 = vunpack.c.h.b16 %v557
        %v1658 = vunpack.c.l.b16 %v558
        %v1659 = vunpack.c.h.b16 %v558
        %v1660 = vunpack.c.l.b16 %v559
        %v1661 = vunpack.c.h.b16 %v559
        %v1662 = vunpack.c.l.b16 %v560
        %v1663 = vunpack.c.h.b16 %v560
        %v1664 = vunpack.c.l.b16 %v561
        %v1665 = vunpack.c.h.b16 %v561
        %v1666 = vunpack.c.l.b16 %v562
        %v1667 = vunpack.c.h.b16 %v562
        %v1668 = vunpack.c.l.b16 %v563
        %v1669 = vunpack.c.h.b16 %v563
        %v1670 = vunpack.c.l.b16 %v564
        %v1671 = vunpack.c.h.b16 %v564
        %v1672 = vunpack.c.l.b16 %v565
        %v1673 = vunpack.c.h.b16 %v565
        %v1674 = vunpack.c.l.b16 %v566
        %v1675 = vunpack.c.h.b16 %v566
        %v1676 = vunpack.c.l.b16 %v567
        %v1677 = vunpack.c.h.b16 %v567
        %v1678 = vunpack.c.l.b16 %v568
        %v1679 = vunpack.c.h.b16 %v568
        %v1680 = vunpack.c.l.b16 %v569
        %v1681 = vunpack.c.h.b16 %v569
        %v1682 = vunpack.c.l.b16 %v570
        %v1683 = vunpack.c.h.b16 %v570
        %v1684 = vunpack.c.l.b16 %v571
        %v1685 = vunpack.c.h.b16 %v571
        %v1686 = vunpack.c.l.b16 %v572
        %v1687 = vunpack.c.h.b16 %v572
        %v1688 = vunpack.c.l.b16 %v573
        %v1689 = vunpack.c.h.b16 %v573
        %v1690 = vunpack.c.l.b16 %v574
        %v1691 = vunpack.c.h.b16 %v574
        %v1692 = vunpack.c.l.b16 %v575
        %v1693 = vunpack.c.h.b16 %v575
        %v1694 = vunpack.c.l.b16 %v576
        %v1695 = vunpack.c.h.b16 %v576
        %v1696 = vunpack.c.l.b16 %v577
        %v1697 = vunpack.c.h.b16 %v577
        %v1698 = vunpack.c.l.b16 %v578
        %v1699 = vunpack.c.h.b16 %v578
        %v1700 = vunpack.c.l.b16 %v579
        %v1701 = vunpack.c.h.b16 %v579
        %v1702 = vunpack.c.l.b16 %v580
        %v1703 = vunpack.c.h.b16 %v580
        %v1704 = vunpack.c.l.b16 %v581
        %v1705 = vunpack.c.h.b16 %v581
        %v1706 = vunpack.c.l.b16 %v582
        %v1707 = vunpack.c.h.b16 %v582
        %v1708 = vunpack.c.l.b16 %v583
        %v1709 = vunpack.c.h.b16 %v583
        %v1710 = vunpack.c.l.b16 %v584
        %v1711 = vunpack.c.h.b16 %v584
        %v1712 = vunpack.c.l.b16 %v585
        %v1713 = vunpack.c.h.b16 %v585
        %v1714 = vunpack.c.l.b16 %v586
        %v1715 = vunpack.c.h.b16 %v586
        %v1716 = vunpack.c.l.b16 %v587
        %v1717 = vunpack.c.h.b16 %v587
        %v1718 = vunpack.c.l.b16 %v588
        %v1719 = vunpack.c.h.b16 %v588
        %v1720 = vunpack.c.l.b16 %v589
        %v1721 = vunpack.c.h.b16 %v589
        %v1722 = vunpack.c.l.b16 %v590
        %v1723 = vunpack.c.h.b16 %v590
        %v1724 = vunpack.c.l.b16 %v591
        %v1725 = vunpack.c.h.b16 %v591
        %v1726 = vunpack.c.l.b16 %v592
        %v1727 = vunpack.c.h.b16 %v592
        %v1728 = vunpack.c.l.b16 %v593
        %v1729 = vunpack.c.h.b16 %v593
        %v1730 = vunpack.c.l.b16 %v594
        %v1731 = vunpack.c.h.b16 %v594
        %v1732 = vunpack.c.l.b16 %v595
        %v1733 = vunpack.c.h.b16 %v595
        %v1734 = vunpack.c.l.b16 %v596
        %v1735 = vunpack.c.h.b16 %v596
        %v1736 = vunpack.c.l.b16 %v597
        %v1737 = vunpack.c.h.b16 %v597
        %v1738 = vunpack.c.l.b16 %v598
        %v1739 = vunpack.c.h.b16 %v598
        %v1740 = vunpack.c.l.b16 %v599
        %v1741 = vunpack.c.h.b16 %v599
        %v1742 = vunpack.c.l.b16 %v600
        %v1743 = vunpack.c.h.b16 %v600
        %v1744 = vunpack.c.l.b16 %v601
        %v1745 = vunpack.c.h.b16 %v601
        %v1746 = vunpack.c.l.b16 %v602
        %v1747 = vunpack.c.h.b16 %v602
        %v1748 = vunpack.c.l.b16 %v603
        %v1749 = vunpack.c.h.b16 %v603
        %v1750 = vunpack.c.l.b16 %v604
        %v1751 = vunpack.c.h.b16 %v604
        %v1752 = vunpack.c.l.b16 %v605
        %v1753 = vunpack.c.h.b16 %v605
        %v1754 = vunpack.c.l.b16 %v606
        %v1755 = vunpack.c.h.b16 %v606
        %v1756 = vunpack.c.l.b16 %v607
        %v1757 = vunpack.c.h.b16 %v607
        %v1758 = vunpack.c.l.b16 %v608
        %v1759 = vunpack.c.h.b16 %v608
        %v1760 = vunpack.c.l.b16 %v609
        %v1761 = vunpack.c.h.b16 %v609
        %v1762 = vunpack.c.l.b16 %v610
        %v1763 = vunpack.c.h.b16 %v610
        %v1764 = vunpack.c.l.b16 %v611
        %v1765 = vunpack.c.h.b16 %v611
        %v1766 = vunpack.c.l.b16 %v612
        %v1767 = vunpack.c.h.b16 %v612
        %v1768 = vunpack.c.l.b16 %v613
        %v1769 = vunpack.c.h.b16 %v613
        %v1770 = vunpack.c.l.b16 %v614
        %v1771 = vunpack.c.h.b16 %v614
        %v1772 = vunpack.c.l.b16 %v615
        %v1773 = vunpack.c.h.b16 %v615
        %v1774 = vunpack.c.l.b16 %v616
        %v1775 = vunpack.c.h.b16 %v616
        %v1776 = vunpack.c.l.b16 %v617
        %v1777 = vunpack.c.h.b16 %v617
        %v1778 = vunpack.c.l.b16 %v618
        %v1779 = vunpack.c.h.b16 %v618
        %v1780 = vunpack.c.l.b16 %v619
        %v1781 = vunpack.c.h.b16 %v619
        %v1782 = vunpack.c.l.b16 %v620
        %v1783 = vunpack.c.h.b16 %v620
        %v1784 = vunpack.c.l.b16 %v621
        %v1785 = vunpack.c.h.b16 %v621
        %v1786 = vunpack.c.l.b16 %v622
        %v1787 = vunpack.c.h.b16 %v622
        %v1788 = vunpack.c.l.b16 %v623
        %v1789 = vunpack.c.h.b16 %v623
        %v1790 = vunpack.c.l.b16 %v624
        %v1791 = vunpack.c.h.b16 %v624
        %v1792 = vunpack.c.l.b16 %v625
        %v1793 = vunpack.c.h.b16 %v625
        %v1794 = vunpack.c.l.b16 %v626
        %v1795 = vunpack.c.h.b16 %v626
        %v1796 = vunpack.c.l.b16 %v627
        %v1797 = vunpack.c.h.b16 %v627
        %v1798 = vunpack.c.l.b16 %v628
        %v1799 = vunpack.c.h.b16 %v628
        %v1800 = vunpack.c.l.b16 %v629
        %v1801 = vunpack.c.h.b16 %v629
        %v1802 = vunpack.c.l.b16 %v630
        %v1803 = vunpack.c.h.b16 %v630
        %v1804 = vunpack.c.l.b16 %v631
        %v1805 = vunpack.c.h.b16 %v631
        %v1806 = vunpack.c.l.b16 %v632
        %v1807 = vunpack.c.h.b16 %v632
        %v1808 = vunpack.c.l.b16 %v633
        %v1809 = vunpack.c.h.b16 %v633
        %v1810 = vunpack.c.l.b16 %v634
        %v1811 = vunpack.c.h.b16 %v634
        %v1812 = vunpack.c.l.b16 %v635
        %v1813 = vunpack.c.h.b16 %v635
        %v1814 = vunpack.c.l.b16 %v636
        %v1815 = vunpack.c.h.b16 %v636
        %v1816 = vunpack.c.l.b16 %v637
        %v1817 = vunpack.c.h.b16 %v637
        %v1818 = vunpack.c.l.b16 %v638
        %v1819 = vunpack.c.h.b16 %v638
        %v1820 = vunpack.c.l.b16 %v639
        %v1821 = vunpack.c.h.b16 %v639
        %v1822 = vunpack.c.l.b16 %v640
        %v1823 = vunpack.c.h.b16 %v640
        %v1824 = vunpack.c.l.b16 %v641
        %v1825 = vunpack.c.h.b16 %v641
        %v1826 = vunpack.c.l.b16 %v642
        %v1827 = vunpack.c.h.b16 %v642
        %v1828 = vunpack.c.l.b16 %v643
        %v1829 = vunpack.c.h.b16 %v643
        %v1830 = vunpack.c.l.b16 %v644
        %v1831 = vunpack.c.h.b16 %v644
        %v1832 = vunpack.c.l.b16 %v645
        %v1833 = vunpack.c.h.b16 %v645
        %v1834 = vunpack.c.l.b16 %v646
        %v1835 = vunpack.c.h.b16 %v646
        %v1836 = vunpack.c.l.b16 %v647
        %v1837 = vunpack.c.h.b16 %v647
        %v1838 = vunpack.c.l.b16 %v648
        %v1839 = vunpack.c.h.b16 %v648
        %v1840 = vunpack.c.l.b16 %v649
        %v1841 = vunpack.c.h.b16 %v649
        %v1842 = vunpack.c.l.b16 %v650
        %v1843 = vunpack.c.h.b16 %v650
        %v1844 = vunpack.c.l.b16 %v651
        %v1845 = vunpack.c.h.b16 %v651
        %v1846 = vunpack.c.l.b16 %v652
        %v1847 = vunpack.c.h.b16 %v652
        %v1848 = vunpack.c.l.b16 %v653
        %v1849 = vunpack.c.h.b16 %v653
        %v1850 = vunpack.c.l.b16 %v654
        %v1851 = vunpack.c.h.b16 %v654
        %v1852 = vunpack.c.l.b16 %v655
        %v1853 = vunpack.c.h.b16 %v655
        %v1854 = vunpack.c.l.b16 %v656
        %v1855 = vunpack.c.h.b16 %v656
        %v1856 = vunpack.c.l.b16 %v657
        %v1857 = vunpack.c.h.b16 %v657
        %v1858 = vunpack.c.l.b16 %v658
        %v1859 = vunpack.c.h.b16 %v658
        %v1860 = vunpack.c.l.b16 %v659
        %v1861 = vunpack.c.h.b16 %v659
        %v1862 = vunpack.c.l.b16 %v660
        %v1863 = vunpack.c.h.b16 %v660
        %v1864 = vunpack.c.l.b16 %v661
        %v1865 = vunpack.c.h.b16 %v661
        %v1866 = vunpack.c.l.b16 %v662
        %v1867 = vunpack.c.h.b16 %v662
        %v1868 = vunpack.c.l.b16 %v663
        %v1869 = vunpack.c.h.b16 %v663
        %v1870 = vunpack.c.l.b16 %v664
        %v1871 = vunpack.c.h.b16 %v664
        %v1872 = vunpack.c.l.b16 %v665
        %v1873 = vunpack.c.h.b16 %v665
        %v1874 = vunpack.c.l.b16 %v666
        %v1875 = vunpack.c.h.b16 %v666
        %v1876 = vunpack.c.l.b16 %v667
        %v1877 = vunpack.c.h.b16 %v667
        %v1878 = vunpack.c.l.b16 %v668
        %v1879 = vunpack.c.h.b16 %v668
        %v1880 = vunpack.c.l.b16 %v669
        %v1881 = vunpack.c.h.b16 %v669
        %v1882 = vunpack.c.l.b16 %v670
        %v1883 = vunpack.c.h.b16 %v670
        %v1884 = vunpack.c.l.b16 %v671
        %v1885 = vunpack.c.h.b16 %v671
        %v1886 = vunpack.c.l.b16 %v672
        %v1887 = vunpack.c.h.b16 %v672
        %v1888 = vunpack.c.l.b16 %v673
        %v1889 = vunpack.c.h.b16 %v673
        %v1890 = vpack.c.b16 %v1134, %v1122
        %v1891 = vpack.c.b16 %v1135, %v1123
        %v1892 = vpack.c.b16 %v1136, %v1124
        %v1893 = vpack.c.b16 %v1137, %v1125
        %v1894 = vpack.c.b16 %v1138, %v1126
        %v1895 = vpack.c.b16 %v1139, %v1127
        %v1896 = vpack.c.b16 %v1140, %v1128
        %v1897 = vpack.c.b16 %v1141, %v1129
        %v1898 = vpack.c.b16 %v1142, %v1130
        %v1899 = vpack.c.b16 %v1143, %v1131
        %v1900 = vpack.c.b16 %v1144, %v1132
        %v1901 = vpack.c.b16 %v1145, %v1133
        %v1902 = vpack.c.b16 %v1158, %v1146
        %v1903 = vpack.c.b16 %v1159, %v1147
        %v1904 = vpack.c.b16 %v1160, %v1148
        %v1905 = vpack.c.b16 %v1161, %v1149
        %v1906 = vpack.c.b16 %v1162, %v1150
        %v1907 = vpack.c.b16 %v1163, %v1151
        %v1908 = vpack.c.b16 %v1164, %v1152
        %v1909 = vpack.c.b16 %v1165, %v1153
        %v1910 = vpack.c.b16 %v1166, %v1154
        %v1911 = vpack.c.b16 %v1167, %v1155
        %v1912 = vpack.c.b16 %v1168, %v1156
        %v1913 = vpack.c.b16 %v1169, %v1157
        %v1914 = vpack.c.b16 %v1182, %v1170
        %v1915 = vpack.c.b16 %v1183, %v1171
        %v1916 = vpack.c.b16 %v1184, %v1172
        %v1917 = vpack.c.b16 %v1185, %v1173
        %v1918 = vpack.c.b16 %v1186, %v1174
        %v1919 = vpack.c.b16 %v1187, %v1175
        %v1920 = vpack.c.b16 %v1188, %v1176
        %v1921 = vpack.c.b16 %v1189, %v1177
        %v1922 = vpack.c.b16 %v1190, %v1178
        %v1923 = vpack.c.b16 %v1191, %v1179
        %v1924 = vpack.c.b16 %v1192, %v1180
        %v1925 = vpack.c.b16 %v1193, %v1181
        %v1926 = vpack.c.b16 %v1206, %v1194
        %v1927 = vpack.c.b16 %v1207, %v1195
        %v1928 = vpack.c.b16 %v1208, %v1196
        %v1929 = vpack.c.b16 %v1209, %v1197
        %v1930 = vpack.c.b16 %v1210, %v1198
        %v1931 = vpack.c.b16 %v1211, %v1199
        %v1932 = vpack.c.b16 %v1212, %v1200
        %v1933 = vpack.c.b16 %v1213, %v1201
        %v1934 = vpack.c.b16 %v1214, %v1202
        %v1935 = vpack.c.b16 %v1215, %v1203
        %v1936 = vpack.c.b16 %v1216, %v1204
        %v1937 = vpack.c.b16 %v1217, %v1205
        %v1938 = vpack.c.b16 %v1230, %v1218
        %v1939 = vpack.c.b16 %v1231, %v1219
        %v1940 = vpack.c.b16 %v1232, %v1220
        %v1941 = vpack.c.b16 %v1233, %v1221
        %v1942 = vpack.c.b16 %v1234, %v1222
        %v1943 = vpack.c.b16 %v1235, %v1223
        %v1944 = vpack.c.b16 %v1236, %v1224
        %v1945 = vpack.c.b16 %v1237, %v1225
        %v1946 = vpack.c.b16 %v1238, %v1226
        %v1947 = vpack.c.b16 %v1239, %v1227
        %v1948 = vpack.c.b16 %v1240, %v1228
        %v1949 = vpack.c.b16 %v1241, %v1229
        %v1950 = vpack.c.b16 %v1254, %v1242
        %v1951 = vpack.c.b16 %v1255, %v1243
        %v1952 = vpack.c.b16 %v1256, %v1244
        %v1953 = vpack.c.b16 %v1257, %v1245
        %v1954 = vpack.c.b16 %v1258, %v1246
        %v1955 = vpack.c.b16 %v1259, %v1247
        %v1956 = vpack.c.b16 %v1260, %v1248
        %v1957 = vpack.c.b16 %v1261, %v1249
        %v1958 = vpack.c.b16 %v1262, %v1250
        %v1959 = vpack.c.b16 %v1263, %v1251
        %v1960 = vpack.c.b16 %v1264, %v1252
        %v1961 = vpack.c.b16 %v1265, %v1253
        %v1962 = vpack.c.b16 %v1278, %v1266
        %v1963 = vpack.c.b16 %v1279, %v1267
        %v1964 = vpack.c.b16 %v1280, %v1268
        %v1965 = vpack.c.b16 %v1281, %v1269
        %v1966 = vpack.c.b16 %v1282, %v1270
        %v1967 = vpack.c.b16 %v1283, %v1271
        %v1968 = vpack.c.b16 %v1284, %v1272
        %v1969 = vpack.c.b16 %v1285, %v1273
        %v1970 = vpack.c.b16 %v1286, %v1274
        %v1971 = vpack.c.b16 %v1287, %v1275
        %v1972 = vpack.c.b16 %v1288, %v1276
        %v1973 = vpack.c.b16 %v1289, %v1277
        %v1974 = vpack.c.b16 %v1302, %v1290
        %v1975 = vpack.c.b16 %v1303, %v1291
        %v1976 = vpack.c.b16 %v1304, %v1292
        %v1977 = vpack.c.b16 %v1305, %v1293
        %v1978 = vpack.c.b16 %v1306, %v1294
        %v1979 = vpack.c.b16 %v1307, %v1295
        %v1980 = vpack.c.b16 %v1308, %v1296
        %v1981 = vpack.c.b16 %v1309, %v1297
        %v1982 = vpack.c.b16 %v1310, %v1298
        %v1983 = vpack.c.b16 %v1311, %v1299
        %v1984 = vpack.c.b16 %v1312, %v1300
        %v1985 = vpack.c.b16 %v1313, %v1301
        %v1986 = vpack.c.b16 %v1326, %v1314
        %v1987 = vpack.c.b16 %v1327, %v1315
        %v1988 = vpack.c.b16 %v1328, %v1316
        %v1989 = vpack.c.b16 %v1329, %v1317
        %v1990 = vpack.c.b16 %v1330, %v1318
        %v1991 = vpack.c.b16 %v1331, %v1319
        %v1992 = vpack.c.b16 %v1332, %v1320
        %v1993 = vpack.c.b16 %v1333, %v1321
        %v1994 = vpack.c.b16 %v1334, %v1322
        %v1995 = vpack.c.b16 %v1335, %v1323
        %v1996 = vpack.c.b16 %v1336, %v1324
        %v1997 = vpack.c.b16 %v1337, %v1325
        %v1998 = vpack.c.b16 %v1350, %v1338
        %v1999 = vpack.c.b16 %v1351, %v1339
        %v2000 = vpack.c.b16 %v1352, %v1340
        %v2001 = vpack.c.b16 %v1353, %v1341
        %v2002 = vpack.c.b16 %v1354, %v1342
        %v2003 = vpack.c.b16 %v1355, %v1343
        %v2004 = vpack.c.b16 %v1356, %v1344
        %v2005 = vpack.c.b16 %v1357, %v1345
        %v2006 = vpack.c.b16 %v1358, %v1346
        %v2007 = vpack.c.b16 %v1359, %v1347
        %v2008 = vpack.c.b16 %v1360, %v1348
        %v2009 = vpack.c.b16 %v1361, %v1349
        %v2010 = vpack.c.b16 %v1374, %v1362
        %v2011 = vpack.c.b16 %v1375, %v1363
        %v2012 = vpack.c.b16 %v1376, %v1364
        %v2013 = vpack.c.b16 %v1377, %v1365
        %v2014 = vpack.c.b16 %v1378, %v1366
        %v2015 = vpack.c.b16 %v1379, %v1367
        %v2016 = vpack.c.b16 %v1380, %v1368
        %v2017 = vpack.c.b16 %v1381, %v1369
        %v2018 = vpack.c.b16 %v1382, %v1370
        %v2019 = vpack.c.b16 %v1383, %v1371
        %v2020 = vpack.c.b16 %v1384, %v1372
        %v2021 = vpack.c.b16 %v1385, %v1373
        %v2022 = vpack.c.b16 %v1398, %v1386
        %v2023 = vpack.c.b16 %v1399, %v1387
        %v2024 = vpack.c.b16 %v1400, %v1388
        %v2025 = vpack.c.b16 %v1401, %v1389
        %v2026 = vpack.c.b16 %v1402, %v1390
        %v2027 = vpack.c.b16 %v1403, %v1391
        %v2028 = vpack.c.b16 %v1404, %v1392
        %v2029 = vpack.c.b16 %v1405, %v1393
        %v2030 = vpack.c.b16 %v1406, %v1394
        %v2031 = vpack.c.b16 %v1407, %v1395
        %v2032 = vpack.c.b16 %v1408, %v1396
        %v2033 = vpack.c.b16 %v1409, %v1397
        %v2034 = vpack.c.b16 %v1422, %v1410
        %v2035 = vpack.c.b16 %v1423, %v1411
        %v2036 = vpack.c.b16 %v1424, %v1412
        %v2037 = vpack.c.b16 %v1425, %v1413
        %v2038 = vpack.c.b16 %v1426, %v1414
        %v2039 = vpack.c.b16 %v1427, %v1415
        %v2040 = vpack.c.b16 %v1428, %v1416
        %v2041 = vpack.c.b16 %v1429, %v1417
        %v2042 = vpack.c.b16 %v1430, %v1418
        %v2043 = vpack.c.b16 %v1431, %v1419
        %v2044 = vpack.c.b16 %v1432, %v1420
        %v2045 = vpack.c.b16 %v1433, %v1421
        %v2046 = vpack.c.b16 %v1446, %v1434
        %v2047 = vpack.c.b16 %v1447, %v1435
        %v2048 = vpack.c.b16 %v1448, %v1436
        %v2049 = vpack.c.b16 %v1449, %v1437
        %v2050 = vpack.c.b16 %v1450, %v1438
        %v2051 = vpack.c.b16 %v1451, %v1439
        %v2052 = vpack.c.b16 %v1452, %v1440
        %v2053 = vpack.c.b16 %v1453, %v1441
        %v2054 = vpack.c.b16 %v1454, %v1442
        %v2055 = vpack.c.b16 %v1455, %v1443
        %v2056 = vpack.c.b16 %v1456, %v1444
        %v2057 = vpack.c.b16 %v1457, %v1445
        %v2058 = vpack.c.b16 %v1470, %v1458
        %v2059 = vpack.c.b16 %v1471, %v1459
        %v2060 = vpack.c.b16 %v1472, %v1460
        %v2061 = vpack.c.b16 %v1473, %v1461
        %v2062 = vpack.c.b16 %v1474, %v1462
        %v2063 = vpack.c.b16 %v1475, %v1463
        %v2064 = vpack.c.b16 %v1476, %v1464
        %v2065 = vpack.c.b16 %v1477, %v1465
        %v2066 = vpack.c.b16 %v1478, %v1466
        %v2067 = vpack.c.b16 %v1479, %v1467
        %v2068 = vpack.c.b16 %v1480, %v1468
        %v2069 = vpack.c.b16 %v1481, %v1469
        %v2070 = vpack.c.b16 %v1494, %v1482
        %v2071 = vpack.c.b16 %v1495, %v1483
        %v2072 = vpack.c.b16 %v1496, %v1484
        %v2073 = vpack.c.b16 %v1497, %v1485
        %v2074 = vpack.c.b16 %v1498, %v1486
        %v2075 = vpack.c.b16 %v1499, %v1487
        %v2076 = vpack.c.b16 %v1500, %v1488
        %v2077 = vpack.c.b16 %v1501, %v1489
        %v2078 = vpack.c.b16 %v1502, %v1490
        %v2079 = vpack.c.b16 %v1503, %v1491
        %v2080 = vpack.c.b16 %v1504, %v1492
        %v2081 = vpack.c.b16 %v1505, %v1493
        %v2082 = vpack.c.b16 %v1518, %v1506
        %v2083 = vpack.c.b16 %v1519, %v1507
        %v2084 = vpack.c.b16 %v1520, %v1508
        %v2085 = vpack.c.b16 %v1521, %v1509
        %v2086 = vpack.c.b16 %v1522, %v1510
        %v2087 = vpack.c.b16 %v1523, %v1511
        %v2088 = vpack.c.b16 %v1524, %v1512
        %v2089 = vpack.c.b16 %v1525, %v1513
        %v2090 = vpack.c.b16 %v1526, %v1514
        %v2091 = vpack.c.b16 %v1527, %v1515
        %v2092 = vpack.c.b16 %v1528, %v1516
        %v2093 = vpack.c.b16 %v1529, %v1517
        %v2094 = vpack.c.b16 %v1542, %v1530
        %v2095 = vpack.c.b16 %v1543, %v1531
        %v2096 = vpack.c.b16 %v1544, %v1532
        %v2097 = vpack.c.b16 %v1545, %v1533
        %v2098 = vpack.c.b16 %v1546, %v1534
        %v2099 = vpack.c.b16 %v1547, %v1535
        %v2100 = vpack.c.b16 %v1548, %v1536
        %v2101 = vpack.c.b16 %v1549, %v1537
        %v2102 = vpack.c.b16 %v1550, %v1538
        %v2103 = vpack.c.b16 %v1551, %v1539
        %v2104 = vpack.c.b16 %v1552, %v1540
        %v2105 = vpack.c.b16 %v1553, %v1541
        %v2106 = vpack.c.b16 %v1566, %v1554
        %v2107 = vpack.c.b16 %v1567, %v1555
        %v2108 = vpack.c.b16 %v1568, %v1556
        %v2109 = vpack.c.b16 %v1569, %v1557
        %v2110 = vpack.c.b16 %v1570, %v1558
        %v2111 = vpack.c.b16 %v1571, %v1559
        %v2112 = vpack.c.b16 %v1572, %v1560
        %v2113 = vpack.c.b16 %v1573, %v1561
        %v2114 = vpack.c.b16 %v1574, %v1562
        %v2115 = vpack.c.b16 %v1575, %v1563
        %v2116 = vpack.c.b16 %v1576, %v1564
        %v2117 = vpack.c.b16 %v1577, %v1565
        %v2118 = vpack.c.b16 %v1590, %v1578
        %v2119 = vpack.c.b16 %v1591, %v1579
        %v2120 = vpack.c.b16 %v1592, %v1580
        %v2121 = vpack.c.b16 %v1593, %v1581
        %v2122 = vpack.c.b16 %v1594, %v1582
        %v2123 = vpack.c.b16 %v1595, %v1583
        %v2124 = vpack.c.b16 %v1596, %v1584
        %v2125 = vpack.c.b16 %v1597, %v1585
        %v2126 = vpack.c.b16 %v1598, %v1586
        %v2127 = vpack.c.b16 %v1599, %v1587
        %v2128 = vpack.c.b16 %v1600, %v1588
        %v2129 = vpack.c.b16 %v1601, %v1589
        %v2130 = vpack.c.b16 %v1614, %v1602
        %v2131 = vpack.c.b16 %v1615, %v1603
        %v2132 = vpack.c.b16 %v1616, %v1604
        %v2133 = vpack.c.b16 %v1617, %v1605
        %v2134 = vpack.c.b16 %v1618, %v1606
        %v2135 = vpack.c.b16 %v1619, %v1607
        %v2136 = vpack.c.b16 %v1620, %v1608
        %v2137 = vpack.c.b16 %v1621, %v1609
        %v2138 = vpack.c.b16 %v1622, %v1610
        %v2139 = vpack.c.b16 %v1623, %v1611
        %v2140 = vpack.c.b16 %v1624, %v1612
        %v2141 = vpack.c.b16 %v1625, %v1613
        %v2142 = vpack.c.b16 %v1638, %v1626
        %v2143 = vpack.c.b16 %v1639, %v1627
        %v2144 = vpack.c.b16 %v1640, %v1628
        %v2145 = vpack.c.b16 %v1641, %v1629
        %v2146 = vpack.c.b16 %v1642, %v1630
        %v2147 = vpack.c.b16 %v1643, %v1631
        %v2148 = vpack.c.b16 %v1644, %v1632
        %v2149 = vpack.c.b16 %v1645, %v1633
        %v2150 = vpack.c.b16 %v1646, %v1634
        %v2151 = vpack.c.b16 %v1647, %v1635
        %v2152 = vpack.c.b16 %v1648, %v1636
        %v2153 = vpack.c.b16 %v1649, %v1637
        %v2154 = vpack.c.b16 %v1662, %v1650
        %v2155 = vpack.c.b16 %v1663, %v1651
        %v2156 = vpack.c.b16 %v1664, %v1652
        %v2157 = vpack.c.b16 %v1665, %v1653
        %v2158 = vpack.c.b16 %v1666, %v1654
        %v2159 = vpack.c.b16 %v1667, %v1655
        %v2160 = vpack.c.b16 %v1668, %v1656
        %v2161 = vpack.c.b16 %v1669, %v1657
        %v2162 = vpack.c.b16 %v1670, %v1658
        %v2163 = vpack.c.b16 %v1671, %v1659
        %v2164 = vpack.c.b16 %v1672, %v1660
        %v2165 = vpack.c.b16 %v1673, %v1661
        %v2166 = vpack.c.b16 %v1686, %v1674
        %v2167 = vpack.c.b16 %v1687, %v1675
        %v2168 = vpack.c.b16 %v1688, %v1676
        %v2169 = vpack.c.b16 %v1689, %v1677
        %v2170 = vpack.c.b16 %v1690, %v1678
        %v2171 = vpack.c.b16 %v1691, %v1679
        %v2172 = vpack.c.b16 %v1692, %v1680
        %v2173 = vpack.c.b16 %v1693, %v1681
        %v2174 = vpack.c.b16 %v1694, %v1682
        %v2175 = vpack.c.b16 %v1695, %v1683
        %v2176 = vpack.c.b16 %v1696, %v1684
        %v2177 = vpack.c.b16 %v1697, %v1685
        %v2178 = vpack.c.b16 %v1710, %v1698
        %v2179 = vpack.c.b16 %v1711, %v1699
        %v2180 = vpack.c.b16 %v1712, %v1700
        %v2181 = vpack.c.b16 %v1713, %v1701
        %v2182 = vpack.c.b16 %v1714, %v1702
        %v2183 = vpack.c.b16 %v1715, %v1703
        %v2184 = vpack.c.b16 %v1716, %v1704
        %v2185 = vpack.c.b16 %v1717, %v1705
        %v2186 = vpack.c.b16 %v1718, %v1706
        %v2187 = vpack.c.b16 %v1719, %v1707
        %v2188 = vpack.c.b16 %v1720, %v1708
        %v2189 = vpack.c.b16 %v1721, %v1709
        %v2190 = vpack.c.b16 %v1734, %v1722
        %v2191 = vpack.c.b16 %v1735, %v1723
        %v2192 = vpack.c.b16 %v1736, %v1724
        %v2193 = vpack.c.b16 %v1737, %v1725
        %v2194 = vpack.c.b16 %v1738, %v1726
        %v2195 = vpack.c.b16 %v1739, %v1727
        %v2196 = vpack.c.b16 %v1740, %v1728
        %v2197 = vpack.c.b16 %v1741, %v1729
        %v2198 = vpack.c.b16 %v1742, %v1730
        %v2199 = vpack.c.b16 %v1743, %v1731
        %v2200 = vpack.c.b16 %v1744, %v1732
        %v2201 = vpack.c.b16 %v1745, %v1733
        %v2202 = vpack.c.b16 %v1758, %v1746
        %v2203 = vpack.c.b16 %v1759, %v1747
        %v2204 = vpack.c.b16 %v1760, %v1748
        %v2205 = vpack.c.b16 %v1761, %v1749
        %v2206 = vpack.c.b16 %v1762, %v1750
        %v2207 = vpack.c.b16 %v1763, %v1751
        %v2208 = vpack.c.b16 %v1764, %v1752
        %v2209 = vpack.c.b16 %v1765, %v1753
        %v2210 = vpack.c.b16 %v1766, %v1754
        %v2211 = vpack.c.b16 %v1767, %v1755
        %v2212 = vpack.c.b16 %v1768, %v1756
        %v2213 = vpack.c.b16 %v1769, %v1757
        %v2214 = vpack.c.b16 %v1782, %v1770
        %v2215 = vpack.c.b16 %v1783, %v1771
        %v2216 = vpack.c.b16 %v1784, %v1772
        %v2217 = vpack.c.b16 %v1785, %v1773
        %v2218 = vpack.c.b16 %v1786, %v1774
        %v2219 = vpack.c.b16 %v1787, %v1775
        %v2220 = vpack.c.b16 %v1788, %v1776
        %v2221 = vpack.c.b16 %v1789, %v1777
        %v2222 = vpack.c.b16 %v1790, %v1778
        %v2223 = vpack.c.b16 %v1791, %v1779
        %v2224 = vpack.c.b16 %v1792, %v1780
        %v2225 = vpack.c.b16 %v1793, %v1781
        %v2226 = vpack.c.b16 %v1806, %v1794
        %v2227 = vpack.c.b16 %v1807, %v1795
        %v2228 = vpack.c.b16 %v1808, %v1796
        %v2229 = vpack.c.b16 %v1809, %v1797
        %v2230 = vpack.c.b16 %v1810, %v1798
        %v2231 = vpack.c.b16 %v1811, %v1799
        %v2232 = vpack.c.b16 %v1812, %v1800
        %v2233 = vpack.c.b16 %v1813, %v1801
        %v2234 = vpack.c.b16 %v1814, %v1802
        %v2235 = vpack.c.b16 %v1815, %v1803
        %v2236 = vpack.c.b16 %v1816, %v1804
        %v2237 = vpack.c.b16 %v1817, %v1805
        %v2238 = vpack.c.b16 %v1830, %v1818
        %v2239 = vpack.c.b16 %v1831, %v1819
        %v2240 = vpack.c.b16 %v1832, %v1820
        %v2241 = vpack.c.b16 %v1833, %v1821
        %v2242 = vpack.c.b16 %v1834, %v1822
        %v2243 = vpack.c.b16 %v1835, %v1823
        %v2244 = vpack.c.b16 %v1836, %v1824
        %v2245 = vpack.c.b16 %v1837, %v1825
        %v2246 = vpack.c.b16 %v1838, %v1826
        %v2247 = vpack.c.b16 %v1839, %v1827
        %v2248 = vpack.c.b16 %v1840, %v1828
        %v2249 = vpack.c.b16 %v1841, %v1829
        %v2250 = vpack.c.b16 %v1854, %v1842
        %v2251 = vpack.c.b16 %v1855, %v1843
        %v2252 = vpack.c.b16 %v1856, %v1844
        %v2253 = vpack.c.b16 %v1857, %v1845
        %v2254 = vpack.c.b16 %v1858, %v1846
        %v2255 = vpack.c.b16 %v1859, %v1847
        %v2256 = vpack.c.b16 %v1860, %v1848
        %v2257 = vpack.c.b16 %v1861, %v1849
        %v2258 = vpack.c.b16 %v1862, %v1850
        %v2259 = vpack.c.b16 %v1863, %v1851
        %v2260 = vpack.c.b16 %v1864, %v1852
        %v2261 = vpack.c.b16 %v1865, %v1853
        %v2262 = vpack.c.b16 %v1878, %v1866
        %v2263 = vpack.c.b16 %v1879, %v1867
        %v2264 = vpack.c.b16 %v1880, %v1868
        %v2265 = vpack.c.b16 %v1881, %v1869
        %v2266 = vpack.c.b16 %v1882, %v1870
        %v2267 = vpack.c.b16 %v1883, %v1871
        %v2268 = vpack.c.b16 %v1884, %v1872
        %v2269 = vpack.c.b16 %v1885, %v1873
        %v2270 = vpack.c.b16 %v1886, %v1874
        %v2271 = vpack.c.b16 %v1887, %v1875
        %v2272 = vpack.c.b16 %v1888, %v1876
        %v2273 = vpack.c.b16 %v1889, %v1877
        %2658 = vmatprep.subr.bf16.mxu0 %v1891
        %2659 = vmatpush1.bf16.msra.mxu0 %v1890
        %2660 = vmatprep.subr.bf16.mxu0 %v1903
        %2661 = vmatpush1.bf16.msra.mxu0 %v1902
        %2662 = vmatprep.subr.bf16.mxu0 %v1915
        %2663 = vmatpush1.bf16.msra.mxu0 %v1914
        %2664 = vmatprep.subr.bf16.mxu0 %v1927
        %2665 = vmatpush1.bf16.msra.mxu0 %v1926
        %2666 = vmatprep.subr.bf16.mxu0 %v1939
        %2667 = vmatpush1.bf16.msra.mxu0 %v1938
        %2668 = vmatprep.subr.bf16.mxu0 %v1951
        %2669 = vmatpush1.bf16.msra.mxu0 %v1950
        %2670 = vmatprep.subr.bf16.mxu0 %v1963
        %2671 = vmatpush1.bf16.msra.mxu0 %v1962
        %2672 = vmatprep.subr.bf16.mxu0 %v1975
        %2673 = vmatpush1.bf16.msra.mxu0 %v1974
        %2674 = vmatprep.subr.bf16.mxu0 %v1987
        %2675 = vmatpush1.bf16.msra.mxu0 %v1986
        %2676 = vmatprep.subr.bf16.mxu0 %v1999
        %2677 = vmatpush1.bf16.msra.mxu0 %v1998
        %2678 = vmatprep.subr.bf16.mxu0 %v2011
        %2679 = vmatpush1.bf16.msra.mxu0 %v2010
        %2680 = vmatprep.subr.bf16.mxu0 %v2023
        %2681 = vmatpush1.bf16.msra.mxu0 %v2022
        %2682 = vmatprep.subr.bf16.mxu0 %v2035
        %2683 = vmatpush1.bf16.msra.mxu0 %v2034
        %2684 = vmatprep.subr.bf16.mxu0 %v2047
        %2685 = vmatpush1.bf16.msra.mxu0 %v2046
        %2686 = vmatprep.subr.bf16.mxu0 %v2059
        %2687 = vmatpush1.bf16.msra.mxu0 %v2058
        %2688 = vmatprep.subr.bf16.mxu0 %v2071
        %2689 = vmatpush1.bf16.msra.mxu0 %v2070
        %2690 = vmatprep.mubr.bf16.mxu0 %v287
        %2691 = vmatmul.mubr.bf16.gmra.mrb[0].mxu0 %v286
        %v2692 = vpop.f32.mrb[0].mxu0
        %v2693 = vadd.f32 %v681, %v2692
        %v2694 = vpop.f32.mrb[0].mxu0
        %v2695 = vadd.f32 %v685, %v2694
        %v2696 = vpop.f32.mrb[0].mxu0
        %v2697 = vpop.f32.mrb[0].mxu0
        %2698 = vdwg.mxu0
        %2699 = vmatprep.subr.bf16.mxu0 %v2083
        %2700 = vmatpush1.bf16.msra.mxu0 %v2082
        %2701 = vmatprep.subr.bf16.mxu0 %v2095
        %2702 = vmatpush1.bf16.msra.mxu0 %v2094
        %2703 = vmatprep.subr.bf16.mxu0 %v2107
        %2704 = vmatpush1.bf16.msra.mxu0 %v2106
        %2705 = vmatprep.subr.bf16.mxu0 %v2119
        %2706 = vmatpush1.bf16.msra.mxu0 %v2118
        %2707 = vmatprep.subr.bf16.mxu0 %v2131
        %2708 = vmatpush1.bf16.msra.mxu0 %v2130
        %2709 = vmatprep.subr.bf16.mxu0 %v2143
        %2710 = vmatpush1.bf16.msra.mxu0 %v2142
        %2711 = vmatprep.subr.bf16.mxu0 %v2155
        %2712 = vmatpush1.bf16.msra.mxu0 %v2154
        %2713 = vmatprep.subr.bf16.mxu0 %v2167
        %2714 = vmatpush1.bf16.msra.mxu0 %v2166
        %2715 = vmatprep.subr.bf16.mxu0 %v2179
        %2716 = vmatpush1.bf16.msra.mxu0 %v2178
        %2717 = vmatprep.subr.bf16.mxu0 %v2191
        %2718 = vmatpush1.bf16.msra.mxu0 %v2190
        %2719 = vmatprep.subr.bf16.mxu0 %v2203
        %2720 = vmatpush1.bf16.msra.mxu0 %v2202
        %2721 = vmatprep.subr.bf16.mxu0 %v2215
        %2722 = vmatpush1.bf16.msra.mxu0 %v2214
        %2723 = vmatprep.subr.bf16.mxu0 %v2227
        %2724 = vmatpush1.bf16.msra.mxu0 %v2226
        %2725 = vmatprep.subr.bf16.mxu0 %v2239
        %2726 = vmatpush1.bf16.msra.mxu0 %v2238
        %2727 = vmatprep.subr.bf16.mxu0 %v2251
        %2728 = vmatpush1.bf16.msra.mxu0 %v2250
        %2729 = vmatprep.subr.bf16.mxu0 %v2263
        %2730 = vmatpush1.bf16.msra.mxu0 %v2262
        %2731 = vmatprep.mubr.bf16.mxu0 %v289
        %2732 = vmatmul.mubr.bf16.gmra.mrb[0].mxu0 %v288
        %v2733 = vpop.f32.mrb[0].mxu0
        %v2734 = vadd.f32 %v2693, %v2733
        %v2735 = vpop.f32.mrb[0].mxu0
        %v2736 = vadd.f32 %v2695, %v2735
        %v2737 = vpop.f32.mrb[0].mxu0
        %v2738 = vpop.f32.mrb[0].mxu0
        %2739 = vdwg.mxu0
        %2740 = vmatprep.subr.bf16.mxu0 %v1893
        %2741 = vmatpush1.bf16.msra.mxu0 %v1892
        %2742 = vmatprep.subr.bf16.mxu0 %v1905
        %2743 = vmatpush1.bf16.msra.mxu0 %v1904
        %2744 = vmatprep.subr.bf16.mxu0 %v1917
        %2745 = vmatpush1.bf16.msra.mxu0 %v1916
        %2746 = vmatprep.subr.bf16.mxu0 %v1929
        %2747 = vmatpush1.bf16.msra.mxu0 %v1928
        %2748 = vmatprep.subr.bf16.mxu0 %v1941
        %2749 = vmatpush1.bf16.msra.mxu0 %v1940
        %2750 = vmatprep.subr.bf16.mxu0 %v1953
        %2751 = vmatpush1.bf16.msra.mxu0 %v1952
        %2752 = vmatprep.subr.bf16.mxu0 %v1965
        %2753 = vmatpush1.bf16.msra.mxu0 %v1964
        %2754 = vmatprep.subr.bf16.mxu0 %v1977
        %2755 = vmatpush1.bf16.msra.mxu0 %v1976
        %2756 = vmatprep.subr.bf16.mxu0 %v1989
        %2757 = vmatpush1.bf16.msra.mxu0 %v1988
        %2758 = vmatprep.subr.bf16.mxu0 %v2001
        %2759 = vmatpush1.bf16.msra.mxu0 %v2000
        %2760 = vmatprep.subr.bf16.mxu0 %v2013
        %2761 = vmatpush1.bf16.msra.mxu0 %v2012
        %2762 = vmatprep.subr.bf16.mxu0 %v2025
        %2763 = vmatpush1.bf16.msra.mxu0 %v2024
        %2764 = vmatprep.subr.bf16.mxu0 %v2037
        %2765 = vmatpush1.bf16.msra.mxu0 %v2036
        %2766 = vmatprep.subr.bf16.mxu0 %v2049
        %2767 = vmatpush1.bf16.msra.mxu0 %v2048
        %2768 = vmatprep.subr.bf16.mxu0 %v2061
        %2769 = vmatpush1.bf16.msra.mxu0 %v2060
        %2770 = vmatprep.subr.bf16.mxu0 %v2073
        %2771 = vmatpush1.bf16.msra.mxu0 %v2072
        %2772 = vmatprep.mubr.bf16.mxu0 %v287
        %2773 = vmatmul.mubr.bf16.gmra.mrb[0].mxu0 %v286
        %v2774 = vpop.f32.mrb[0].mxu0
        %v2775 = vadd.f32 %v689, %v2774
        %v2776 = vpop.f32.mrb[0].mxu0
        %v2777 = vadd.f32 %v693, %v2776
        %v2778 = vpop.f32.mrb[0].mxu0
        %v2779 = vpop.f32.mrb[0].mxu0
        %2780 = vdwg.mxu0
        %2781 = vmatprep.subr.bf16.mxu0 %v2085
        %2782 = vmatpush1.bf16.msra.mxu0 %v2084
        %2783 = vmatprep.subr.bf16.mxu0 %v2097
        %2784 = vmatpush1.bf16.msra.mxu0 %v2096
        %2785 = vmatprep.subr.bf16.mxu0 %v2109
        %2786 = vmatpush1.bf16.msra.mxu0 %v2108
        %2787 = vmatprep.subr.bf16.mxu0 %v2121
        %2788 = vmatpush1.bf16.msra.mxu0 %v2120
        %2789 = vmatprep.subr.bf16.mxu0 %v2133
        %2790 = vmatpush1.bf16.msra.mxu0 %v2132
        %2791 = vmatprep.subr.bf16.mxu0 %v2145
        %2792 = vmatpush1.bf16.msra.mxu0 %v2144
        %2793 = vmatprep.subr.bf16.mxu0 %v2157
        %2794 = vmatpush1.bf16.msra.mxu0 %v2156
        %2795 = vmatprep.subr.bf16.mxu0 %v2169
        %2796 = vmatpush1.bf16.msra.mxu0 %v2168
        %2797 = vmatprep.subr.bf16.mxu0 %v2181
        %2798 = vmatpush1.bf16.msra.mxu0 %v2180
        %2799 = vmatprep.subr.bf16.mxu0 %v2193
        %2800 = vmatpush1.bf16.msra.mxu0 %v2192
        %2801 = vmatprep.subr.bf16.mxu0 %v2205
        %2802 = vmatpush1.bf16.msra.mxu0 %v2204
        %2803 = vmatprep.subr.bf16.mxu0 %v2217
        %2804 = vmatpush1.bf16.msra.mxu0 %v2216
        %2805 = vmatprep.subr.bf16.mxu0 %v2229
        %2806 = vmatpush1.bf16.msra.mxu0 %v2228
        %2807 = vmatprep.subr.bf16.mxu0 %v2241
        %2808 = vmatpush1.bf16.msra.mxu0 %v2240
        %2809 = vmatprep.subr.bf16.mxu0 %v2253
        %2810 = vmatpush1.bf16.msra.mxu0 %v2252
        %2811 = vmatprep.subr.bf16.mxu0 %v2265
        %2812 = vmatpush1.bf16.msra.mxu0 %v2264
        %2813 = vmatprep.mubr.bf16.mxu0 %v289
        %2814 = vmatmul.mubr.bf16.gmra.mrb[0].mxu0 %v288
        %v2815 = vpop.f32.mrb[0].mxu0
        %v2816 = vadd.f32 %v2775, %v2815
        %v2817 = vpop.f32.mrb[0].mxu0
        %v2818 = vadd.f32 %v2777, %v2817
        %v2819 = vpop.f32.mrb[0].mxu0
        %v2820 = vpop.f32.mrb[0].mxu0
        %2821 = vdwg.mxu0
        %2822 = vmatprep.subr.bf16.mxu0 %v1895
        %2823 = vmatpush1.bf16.msra.mxu0 %v1894
        %2824 = vmatprep.subr.bf16.mxu0 %v1907
        %2825 = vmatpush1.bf16.msra.mxu0 %v1906
        %2826 = vmatprep.subr.bf16.mxu0 %v1919
        %2827 = vmatpush1.bf16.msra.mxu0 %v1918
        %2828 = vmatprep.subr.bf16.mxu0 %v1931
        %2829 = vmatpush1.bf16.msra.mxu0 %v1930
        %2830 = vmatprep.subr.bf16.mxu0 %v1943
        %2831 = vmatpush1.bf16.msra.mxu0 %v1942
        %2832 = vmatprep.subr.bf16.mxu0 %v1955
        %2833 = vmatpush1.bf16.msra.mxu0 %v1954
        %2834 = vmatprep.subr.bf16.mxu0 %v1967
        %2835 = vmatpush1.bf16.msra.mxu0 %v1966
        %2836 = vmatprep.subr.bf16.mxu0 %v1979
        %2837 = vmatpush1.bf16.msra.mxu0 %v1978
        %2838 = vmatprep.subr.bf16.mxu0 %v1991
        %2839 = vmatpush1.bf16.msra.mxu0 %v1990
        %2840 = vmatprep.subr.bf16.mxu0 %v2003
        %2841 = vmatpush1.bf16.msra.mxu0 %v2002
        %2842 = vmatprep.subr.bf16.mxu0 %v2015
        %2843 = vmatpush1.bf16.msra.mxu0 %v2014
        %2844 = vmatprep.subr.bf16.mxu0 %v2027
        %2845 = vmatpush1.bf16.msra.mxu0 %v2026
        %2846 = vmatprep.subr.bf16.mxu0 %v2039
        %2847 = vmatpush1.bf16.msra.mxu0 %v2038
        %2848 = vmatprep.subr.bf16.mxu0 %v2051
        %2849 = vmatpush1.bf16.msra.mxu0 %v2050
        %2850 = vmatprep.subr.bf16.mxu0 %v2063
        %2851 = vmatpush1.bf16.msra.mxu0 %v2062
        %2852 = vmatprep.subr.bf16.mxu0 %v2075
        %2853 = vmatpush1.bf16.msra.mxu0 %v2074
        %2854 = vmatprep.mubr.bf16.mxu0 %v287
        %2855 = vmatmul.mubr.bf16.gmra.mrb[0].mxu0 %v286
        %v2856 = vpop.f32.mrb[0].mxu0
        %v2857 = vadd.f32 %v697, %v2856
        %v2858 = vpop.f32.mrb[0].mxu0
        %v2859 = vadd.f32 %v701, %v2858
        %v2860 = vpop.f32.mrb[0].mxu0
        %v2861 = vpop.f32.mrb[0].mxu0
        %2862 = vdwg.mxu0
        %2863 = vmatprep.subr.bf16.mxu0 %v2087
        %2864 = vmatpush1.bf16.msra.mxu0 %v2086
        %2865 = vmatprep.subr.bf16.mxu0 %v2099
        %2866 = vmatpush1.bf16.msra.mxu0 %v2098
        %2867 = vmatprep.subr.bf16.mxu0 %v2111
        %2868 = vmatpush1.bf16.msra.mxu0 %v2110
        %2869 = vmatprep.subr.bf16.mxu0 %v2123
        %2870 = vmatpush1.bf16.msra.mxu0 %v2122
        %2871 = vmatprep.subr.bf16.mxu0 %v2135
        %2872 = vmatpush1.bf16.msra.mxu0 %v2134
        %2873 = vmatprep.subr.bf16.mxu0 %v2147
        %2874 = vmatpush1.bf16.msra.mxu0 %v2146
        %2875 = vmatprep.subr.bf16.mxu0 %v2159
        %2876 = vmatpush1.bf16.msra.mxu0 %v2158
        %2877 = vmatprep.subr.bf16.mxu0 %v2171
        %2878 = vmatpush1.bf16.msra.mxu0 %v2170
        %2879 = vmatprep.subr.bf16.mxu0 %v2183
        %2880 = vmatpush1.bf16.msra.mxu0 %v2182
        %2881 = vmatprep.subr.bf16.mxu0 %v2195
        %2882 = vmatpush1.bf16.msra.mxu0 %v2194
        %2883 = vmatprep.subr.bf16.mxu0 %v2207
        %2884 = vmatpush1.bf16.msra.mxu0 %v2206
        %2885 = vmatprep.subr.bf16.mxu0 %v2219
        %2886 = vmatpush1.bf16.msra.mxu0 %v2218
        %2887 = vmatprep.subr.bf16.mxu0 %v2231
        %2888 = vmatpush1.bf16.msra.mxu0 %v2230
        %2889 = vmatprep.subr.bf16.mxu0 %v2243
        %2890 = vmatpush1.bf16.msra.mxu0 %v2242
        %2891 = vmatprep.subr.bf16.mxu0 %v2255
        %2892 = vmatpush1.bf16.msra.mxu0 %v2254
        %2893 = vmatprep.subr.bf16.mxu0 %v2267
        %2894 = vmatpush1.bf16.msra.mxu0 %v2266
        %2895 = vmatprep.mubr.bf16.mxu0 %v289
        %2896 = vmatmul.mubr.bf16.gmra.mrb[0].mxu0 %v288
        %v2897 = vpop.f32.mrb[0].mxu0
        %v2898 = vadd.f32 %v2857, %v2897
        %v2899 = vpop.f32.mrb[0].mxu0
        %v2900 = vadd.f32 %v2859, %v2899
        %v2901 = vpop.f32.mrb[0].mxu0
        %v2902 = vpop.f32.mrb[0].mxu0
        %2903 = vdwg.mxu0
        %2904 = vmatprep.subr.bf16.mxu0 %v1897
        %2905 = vmatpush1.bf16.msra.mxu0 %v1896
        %2906 = vmatprep.subr.bf16.mxu0 %v1909
        %2907 = vmatpush1.bf16.msra.mxu0 %v1908
        %2908 = vmatprep.subr.bf16.mxu0 %v1921
        %2909 = vmatpush1.bf16.msra.mxu0 %v1920
        %2910 = vmatprep.subr.bf16.mxu0 %v1933
        %2911 = vmatpush1.bf16.msra.mxu0 %v1932
        %2912 = vmatprep.subr.bf16.mxu0 %v1945
        %2913 = vmatpush1.bf16.msra.mxu0 %v1944
        %2914 = vmatprep.subr.bf16.mxu0 %v1957
        %2915 = vmatpush1.bf16.msra.mxu0 %v1956
        %2916 = vmatprep.subr.bf16.mxu0 %v1969
        %2917 = vmatpush1.bf16.msra.mxu0 %v1968
        %2918 = vmatprep.subr.bf16.mxu0 %v1981
        %2919 = vmatpush1.bf16.msra.mxu0 %v1980
        %2920 = vmatprep.subr.bf16.mxu0 %v1993
        %2921 = vmatpush1.bf16.msra.mxu0 %v1992
        %2922 = vmatprep.subr.bf16.mxu0 %v2005
        %2923 = vmatpush1.bf16.msra.mxu0 %v2004
        %2924 = vmatprep.subr.bf16.mxu0 %v2017
        %2925 = vmatpush1.bf16.msra.mxu0 %v2016
        %2926 = vmatprep.subr.bf16.mxu0 %v2029
        %2927 = vmatpush1.bf16.msra.mxu0 %v2028
        %2928 = vmatprep.subr.bf16.mxu0 %v2041
        %2929 = vmatpush1.bf16.msra.mxu0 %v2040
        %2930 = vmatprep.subr.bf16.mxu0 %v2053
        %2931 = vmatpush1.bf16.msra.mxu0 %v2052
        %2932 = vmatprep.subr.bf16.mxu0 %v2065
        %2933 = vmatpush1.bf16.msra.mxu0 %v2064
        %2934 = vmatprep.subr.bf16.mxu0 %v2077
        %2935 = vmatpush1.bf16.msra.mxu0 %v2076
        %2936 = vmatprep.mubr.bf16.mxu0 %v287
        %2937 = vmatmul.mubr.bf16.gmra.mrb[0].mxu0 %v286
        %v2938 = vpop.f32.mrb[0].mxu0
        %v2939 = vadd.f32 %v705, %v2938
        %v2940 = vpop.f32.mrb[0].mxu0
        %v2941 = vadd.f32 %v709, %v2940
        %v2942 = vpop.f32.mrb[0].mxu0
        %v2943 = vpop.f32.mrb[0].mxu0
        %2944 = vdwg.mxu0
        %2945 = vmatprep.subr.bf16.mxu0 %v2089
        %2946 = vmatpush1.bf16.msra.mxu0 %v2088
        %2947 = vmatprep.subr.bf16.mxu0 %v2101
        %2948 = vmatpush1.bf16.msra.mxu0 %v2100
        %2949 = vmatprep.subr.bf16.mxu0 %v2113
        %2950 = vmatpush1.bf16.msra.mxu0 %v2112
        %2951 = vmatprep.subr.bf16.mxu0 %v2125
        %2952 = vmatpush1.bf16.msra.mxu0 %v2124
        %2953 = vmatprep.subr.bf16.mxu0 %v2137
        %2954 = vmatpush1.bf16.msra.mxu0 %v2136
        %2955 = vmatprep.subr.bf16.mxu0 %v2149
        %2956 = vmatpush1.bf16.msra.mxu0 %v2148
        %2957 = vmatprep.subr.bf16.mxu0 %v2161
        %2958 = vmatpush1.bf16.msra.mxu0 %v2160
        %2959 = vmatprep.subr.bf16.mxu0 %v2173
        %2960 = vmatpush1.bf16.msra.mxu0 %v2172
        %2961 = vmatprep.subr.bf16.mxu0 %v2185
        %2962 = vmatpush1.bf16.msra.mxu0 %v2184
        %2963 = vmatprep.subr.bf16.mxu0 %v2197
        %2964 = vmatpush1.bf16.msra.mxu0 %v2196
        %2965 = vmatprep.subr.bf16.mxu0 %v2209
        %2966 = vmatpush1.bf16.msra.mxu0 %v2208
        %2967 = vmatprep.subr.bf16.mxu0 %v2221
        %2968 = vmatpush1.bf16.msra.mxu0 %v2220
        %2969 = vmatprep.subr.bf16.mxu0 %v2233
        %2970 = vmatpush1.bf16.msra.mxu0 %v2232
        %2971 = vmatprep.subr.bf16.mxu0 %v2245
        %2972 = vmatpush1.bf16.msra.mxu0 %v2244
        %2973 = vmatprep.subr.bf16.mxu0 %v2257
        %2974 = vmatpush1.bf16.msra.mxu0 %v2256
        %2975 = vmatprep.subr.bf16.mxu0 %v2269
        %2976 = vmatpush1.bf16.msra.mxu0 %v2268
        %2977 = vmatprep.mubr.bf16.mxu0 %v289
        %2978 = vmatmul.mubr.bf16.gmra.mrb[0].mxu0 %v288
        %v2979 = vpop.f32.mrb[0].mxu0
        %v2980 = vadd.f32 %v2939, %v2979
        %v2981 = vpop.f32.mrb[0].mxu0
        %v2982 = vadd.f32 %v2941, %v2981
        %v2983 = vpop.f32.mrb[0].mxu0
        %v2984 = vpop.f32.mrb[0].mxu0
        %2985 = vdwg.mxu0
        %2986 = vmatprep.subr.bf16.mxu0 %v1899
        %2987 = vmatpush1.bf16.msra.mxu0 %v1898
        %2988 = vmatprep.subr.bf16.mxu0 %v1911
        %2989 = vmatpush1.bf16.msra.mxu0 %v1910
        %2990 = vmatprep.subr.bf16.mxu0 %v1923
        %2991 = vmatpush1.bf16.msra.mxu0 %v1922
        %2992 = vmatprep.subr.bf16.mxu0 %v1935
        %2993 = vmatpush1.bf16.msra.mxu0 %v1934
        %2994 = vmatprep.subr.bf16.mxu0 %v1947
        %2995 = vmatpush1.bf16.msra.mxu0 %v1946
        %2996 = vmatprep.subr.bf16.mxu0 %v1959
        %2997 = vmatpush1.bf16.msra.mxu0 %v1958
        %2998 = vmatprep.subr.bf16.mxu0 %v1971
        %2999 = vmatpush1.bf16.msra.mxu0 %v1970
        %3000 = vmatprep.subr.bf16.mxu0 %v1983
        %3001 = vmatpush1.bf16.msra.mxu0 %v1982
        %3002 = vmatprep.subr.bf16.mxu0 %v1995
        %3003 = vmatpush1.bf16.msra.mxu0 %v1994
        %3004 = vmatprep.subr.bf16.mxu0 %v2007
        %3005 = vmatpush1.bf16.msra.mxu0 %v2006
        %3006 = vmatprep.subr.bf16.mxu0 %v2019
        %3007 = vmatpush1.bf16.msra.mxu0 %v2018
        %3008 = vmatprep.subr.bf16.mxu0 %v2031
        %3009 = vmatpush1.bf16.msra.mxu0 %v2030
        %3010 = vmatprep.subr.bf16.mxu0 %v2043
        %3011 = vmatpush1.bf16.msra.mxu0 %v2042
        %3012 = vmatprep.subr.bf16.mxu0 %v2055
        %3013 = vmatpush1.bf16.msra.mxu0 %v2054
        %3014 = vmatprep.subr.bf16.mxu0 %v2067
        %3015 = vmatpush1.bf16.msra.mxu0 %v2066
        %3016 = vmatprep.subr.bf16.mxu0 %v2079
        %3017 = vmatpush1.bf16.msra.mxu0 %v2078
        %3018 = vmatprep.mubr.bf16.mxu0 %v287
        %3019 = vmatmul.mubr.bf16.gmra.mrb[0].mxu0 %v286
        %v3020 = vpop.f32.mrb[0].mxu0
        %v3021 = vadd.f32 %v713, %v3020
        %v3022 = vpop.f32.mrb[0].mxu0
        %v3023 = vadd.f32 %v717, %v3022
        %v3024 = vpop.f32.mrb[0].mxu0
        %v3025 = vpop.f32.mrb[0].mxu0
        %3026 = vdwg.mxu0
        %3027 = vmatprep.subr.bf16.mxu0 %v2091
        %3028 = vmatpush1.bf16.msra.mxu0 %v2090
        %3029 = vmatprep.subr.bf16.mxu0 %v2103
        %3030 = vmatpush1.bf16.msra.mxu0 %v2102
        %3031 = vmatprep.subr.bf16.mxu0 %v2115
        %3032 = vmatpush1.bf16.msra.mxu0 %v2114
        %3033 = vmatprep.subr.bf16.mxu0 %v2127
        %3034 = vmatpush1.bf16.msra.mxu0 %v2126
        %3035 = vmatprep.subr.bf16.mxu0 %v2139
        %3036 = vmatpush1.bf16.msra.mxu0 %v2138
        %3037 = vmatprep.subr.bf16.mxu0 %v2151
        %3038 = vmatpush1.bf16.msra.mxu0 %v2150
        %3039 = vmatprep.subr.bf16.mxu0 %v2163
        %3040 = vmatpush1.bf16.msra.mxu0 %v2162
        %3041 = vmatprep.subr.bf16.mxu0 %v2175
        %3042 = vmatpush1.bf16.msra.mxu0 %v2174
        %3043 = vmatprep.subr.bf16.mxu0 %v2187
        %3044 = vmatpush1.bf16.msra.mxu0 %v2186
        %3045 = vmatprep.subr.bf16.mxu0 %v2199
        %3046 = vmatpush1.bf16.msra.mxu0 %v2198
        %3047 = vmatprep.subr.bf16.mxu0 %v2211
        %3048 = vmatpush1.bf16.msra.mxu0 %v2210
        %3049 = vmatprep.subr.bf16.mxu0 %v2223
        %3050 = vmatpush1.bf16.msra.mxu0 %v2222
        %3051 = vmatprep.subr.bf16.mxu0 %v2235
        %3052 = vmatpush1.bf16.msra.mxu0 %v2234
        %3053 = vmatprep.subr.bf16.mxu0 %v2247
        %3054 = vmatpush1.bf16.msra.mxu0 %v2246
        %3055 = vmatprep.subr.bf16.mxu0 %v2259
        %3056 = vmatpush1.bf16.msra.mxu0 %v2258
        %3057 = vmatprep.subr.bf16.mxu0 %v2271
        %3058 = vmatpush1.bf16.msra.mxu0 %v2270
        %3059 = vmatprep.mubr.bf16.mxu0 %v289
        %3060 = vmatmul.mubr.bf16.gmra.mrb[0].mxu0 %v288
        %v3061 = vpop.f32.mrb[0].mxu0
        %v3062 = vadd.f32 %v3021, %v3061
        %v3063 = vpop.f32.mrb[0].mxu0
        %v3064 = vadd.f32 %v3023, %v3063
        %v3065 = vpop.f32.mrb[0].mxu0
        %v3066 = vpop.f32.mrb[0].mxu0
        %3067 = vdwg.mxu0
        %3068 = vmatprep.subr.bf16.mxu0 %v1901
        %3069 = vmatpush1.bf16.msra.mxu0 %v1900
        %3070 = vmatprep.subr.bf16.mxu0 %v1913
        %3071 = vmatpush1.bf16.msra.mxu0 %v1912
        %3072 = vmatprep.subr.bf16.mxu0 %v1925
        %3073 = vmatpush1.bf16.msra.mxu0 %v1924
        %3074 = vmatprep.subr.bf16.mxu0 %v1937
        %3075 = vmatpush1.bf16.msra.mxu0 %v1936
        %3076 = vmatprep.subr.bf16.mxu0 %v1949
        %3077 = vmatpush1.bf16.msra.mxu0 %v1948
        %3078 = vmatprep.subr.bf16.mxu0 %v1961
        %3079 = vmatpush1.bf16.msra.mxu0 %v1960
        %3080 = vmatprep.subr.bf16.mxu0 %v1973
        %3081 = vmatpush1.bf16.msra.mxu0 %v1972
        %3082 = vmatprep.subr.bf16.mxu0 %v1985
        %3083 = vmatpush1.bf16.msra.mxu0 %v1984
        %3084 = vmatprep.subr.bf16.mxu0 %v1997
        %3085 = vmatpush1.bf16.msra.mxu0 %v1996
        %3086 = vmatprep.subr.bf16.mxu0 %v2009
        %3087 = vmatpush1.bf16.msra.mxu0 %v2008
        %3088 = vmatprep.subr.bf16.mxu0 %v2021
        %3089 = vmatpush1.bf16.msra.mxu0 %v2020
        %3090 = vmatprep.subr.bf16.mxu0 %v2033
        %3091 = vmatpush1.bf16.msra.mxu0 %v2032
        %3092 = vmatprep.subr.bf16.mxu0 %v2045
        %3093 = vmatpush1.bf16.msra.mxu0 %v2044
        %3094 = vmatprep.subr.bf16.mxu0 %v2057
        %3095 = vmatpush1.bf16.msra.mxu0 %v2056
        %3096 = vmatprep.subr.bf16.mxu0 %v2069
        %3097 = vmatpush1.bf16.msra.mxu0 %v2068
        %3098 = vmatprep.subr.bf16.mxu0 %v2081
        %3099 = vmatpush1.bf16.msra.mxu0 %v2080
        %3100 = vmatprep.mubr.bf16.mxu0 %v287
        %3101 = vmatmul.mubr.bf16.gmra.mrb[0].mxu0 %v286
        %v3102 = vpop.f32.mrb[0].mxu0
        %v3103 = vadd.f32 %v721, %v3102
        %v3104 = vpop.f32.mrb[0].mxu0
        %v3105 = vadd.f32 %v725, %v3104
        %v3106 = vpop.f32.mrb[0].mxu0
        %v3107 = vpop.f32.mrb[0].mxu0
        %3108 = vdwg.mxu0
        %3109 = vmatprep.subr.bf16.mxu0 %v2093
        %3110 = vmatpush1.bf16.msra.mxu0 %v2092
        %3111 = vmatprep.subr.bf16.mxu0 %v2105
        %3112 = vmatpush1.bf16.msra.mxu0 %v2104
        %3113 = vmatprep.subr.bf16.mxu0 %v2117
        %3114 = vmatpush1.bf16.msra.mxu0 %v2116
        %3115 = vmatprep.subr.bf16.mxu0 %v2129
        %3116 = vmatpush1.bf16.msra.mxu0 %v2128
        %3117 = vmatprep.subr.bf16.mxu0 %v2141
        %3118 = vmatpush1.bf16.msra.mxu0 %v2140
        %3119 = vmatprep.subr.bf16.mxu0 %v2153
        %3120 = vmatpush1.bf16.msra.mxu0 %v2152
        %3121 = vmatprep.subr.bf16.mxu0 %v2165
        %3122 = vmatpush1.bf16.msra.mxu0 %v2164
        %3123 = vmatprep.subr.bf16.mxu0 %v2177
        %3124 = vmatpush1.bf16.msra.mxu0 %v2176
        %3125 = vmatprep.subr.bf16.mxu0 %v2189
        %3126 = vmatpush1.bf16.msra.mxu0 %v2188
        %3127 = vmatprep.subr.bf16.mxu0 %v2201
        %3128 = vmatpush1.bf16.msra.mxu0 %v2200
        %3129 = vmatprep.subr.bf16.mxu0 %v2213
        %3130 = vmatpush1.bf16.msra.mxu0 %v2212
        %3131 = vmatprep.subr.bf16.mxu0 %v2225
        %3132 = vmatpush1.bf16.msra.mxu0 %v2224
        %3133 = vmatprep.subr.bf16.mxu0 %v2237
        %3134 = vmatpush1.bf16.msra.mxu0 %v2236
        %3135 = vmatprep.subr.bf16.mxu0 %v2249
        %3136 = vmatpush1.bf16.msra.mxu0 %v2248
        %3137 = vmatprep.subr.bf16.mxu0 %v2261
        %3138 = vmatpush1.bf16.msra.mxu0 %v2260
        %3139 = vmatprep.subr.bf16.mxu0 %v2273
        %3140 = vmatpush1.bf16.msra.mxu0 %v2272
        %3141 = vmatprep.mubr.bf16.mxu0 %v289
        %3142 = vmatmul.mubr.bf16.gmra.mrb[0].mxu0 %v288
        %v3143 = vpop.f32.mrb[0].mxu0
        %v3144 = vadd.f32 %v3103, %v3143
        %v3145 = vpop.f32.mrb[0].mxu0
        %v3146 = vadd.f32 %v3105, %v3145
        %v3147 = vpop.f32.mrb[0].mxu0
        %v3148 = vpop.f32.mrb[0].mxu0
        %3149 = vdwg.mxu0
        %v3150 = vpack.c.bf16 %v2734, %v2734
        %v3151 = vpack.c.bf16 %v2736, %v2736
        %v3152 = vpack.c.bf16 %v2816, %v2816
        %v3153 = vpack.c.bf16 %v2818, %v2818
        %v3154 = vpack.c.bf16 %v2898, %v2898
        %v3155 = vpack.c.bf16 %v2900, %v2900
        %v3156 = vpack.c.bf16 %v2980, %v2980
        %v3157 = vpack.c.bf16 %v2982, %v2982
        %v3158 = vpack.c.bf16 %v3062, %v3062
        %v3159 = vpack.c.bf16 %v3064, %v3064
        %v3160 = vpack.c.bf16 %v3144, %v3144
        %v3161 = vpack.c.bf16 %v3146, %v3146
        %3162 = vmatprep.subr.bf16.mxu0 0
        %3163 = vmatpush1.bf16.xpose.msra.mxu0 %v3154
        %3164 = vmatprep.subr.bf16.mxu0 0
        %3165 = vmatpush1.bf16.xpose.msra.mxu0 0
        %3166 = vmatprep.subr.bf16.mxu0 0
        %3167 = vmatpush1.bf16.xpose.msra.mxu0 0
        %3168 = vmatprep.subr.bf16.mxu0 0
        %3169 = vmatpush1.bf16.xpose.msra.mxu0 0
        %3170 = vmatprep.subr.bf16.mxu0 0
        %3171 = vmatpush1.bf16.xpose.msra.mxu0 0
        %3172 = vmatprep.subr.bf16.mxu0 0
        %3173 = vmatpush1.bf16.xpose.msra.mxu0 0
        %3174 = vmatprep.subr.bf16.mxu0 0
        %3175 = vmatpush1.bf16.xpose.msra.mxu0 0
        %3176 = vmatprep.subr.bf16.mxu0 0
        %3177 = vmatpush1.bf16.xpose.msra.mxu0 0
        %3178 = vmatprep.subr.bf16.mxu0 0
        %3179 = vmatpush1.bf16.xpose.msra.mxu0 0
        %3180 = vmatprep.subr.bf16.mxu0 0
        %3181 = vmatpush1.bf16.xpose.msra.mxu0 0
        %3182 = vmatprep.subr.bf16.mxu0 0
        %3183 = vmatpush1.bf16.xpose.msra.mxu0 0
        %3184 = vmatprep.subr.bf16.mxu0 0
        %3185 = vmatpush1.bf16.xpose.msra.mxu0 0
        %3186 = vmatprep.subr.bf16.mxu0 0
        %3187 = vmatpush1.bf16.xpose.msra.mxu0 0
        %3188 = vmatprep.subr.bf16.mxu0 0
        %3189 = vmatpush1.bf16.xpose.msra.mxu0 0
        %3190 = vmatprep.subr.bf16.mxu0 0
        %3191 = vmatpush1.bf16.xpose.msra.mxu0 0
        %3192 = vmatprep.subr.bf16.mxu0 0
        %3193 = vmatpush1.bf16.xpose.msra.mxu0 0
        %3194 = vmatprep.mubr.bf16.mxu0 0
        %3195 = vmatmul.mubr.bf16.gmra.mrb[0].mxu0 %v3150
        %v3196 = vpop.f32.mrb[0].mxu0
        %v3197 = vadd.f32 0.0, %v3196
        %v3198 = vpop.f32.mrb[0].mxu0
        %v3199 = vpop.f32.mrb[0].mxu0
        %v3200 = vpop.f32.mrb[0].mxu0
        %3201 = vdwg.mxu0
        %v3202 = vld [vmem:[%s243] sm:$0xff]
        %v3203 = vadd.f32 %v3202, %v3197
        %vm3204 = vcmask 64512
        %v3205 = vsel %vm3204, %v3203, -inf
        %3206 = vmax.xlane.f32.xlu0 %v3205
        %v3207 = vpop.xlane.xlu0 %3206
        %v3208 = vsub.f32 %v3203, %v3207
        %v3209 = vmul.f32 %v3208, 1.442695
        %v3210 = vpow.pop %v3209
        %v3211 = vsel %vm3204, %v3210, 0.0
        %3212 = vadd.xlane.f32.xlu0 %v3211
        %v3213 = vpop.xlane.xlu0 %3212
        %v3214 = vrcp.pop %v3213
        %v3215 = vmul.f32 %v3210, %v3214
        %v3216 = vpack.c.bf16 %v3215, %v3215
        %v3218 = vsel %vm3204, %v3216, 0
        %vm3220 = vcmask 1043456
        %v3222 = vsel %vm3220, %v3158, 0
        %3224 = vmatprep.subr.bf16.mxu0 0
        %3225 = vmatpush1.bf16.msra.mxu0 %v3222
        %3226 = vmatprep.subr.bf16.mxu0 0
        %3227 = vmatpush1.bf16.msra.mxu0 0
        %3228 = vmatprep.subr.bf16.mxu0 0
        %3229 = vmatpush1.bf16.msra.mxu0 0
        %3230 = vmatprep.subr.bf16.mxu0 0
        %3231 = vmatpush1.bf16.msra.mxu0 0
        %3232 = vmatprep.subr.bf16.mxu0 0
        %3233 = vmatpush1.bf16.msra.mxu0 0
        %3234 = vmatprep.subr.bf16.mxu0 0
        %3235 = vmatpush1.bf16.msra.mxu0 0
        %3236 = vmatprep.subr.bf16.mxu0 0
        %3237 = vmatpush1.bf16.msra.mxu0 0
        %3238 = vmatprep.subr.bf16.mxu0 0
        %3239 = vmatpush1.bf16.msra.mxu0 0
        %3240 = vmatprep.subr.bf16.mxu0 0
        %3241 = vmatpush1.bf16.msra.mxu0 0
        %3242 = vmatprep.subr.bf16.mxu0 0
        %3243 = vmatpush1.bf16.msra.mxu0 0
        %3244 = vmatprep.subr.bf16.mxu0 0
        %3245 = vmatpush1.bf16.msra.mxu0 0
        %3246 = vmatprep.subr.bf16.mxu0 0
        %3247 = vmatpush1.bf16.msra.mxu0 0
        %3248 = vmatprep.subr.bf16.mxu0 0
        %3249 = vmatpush1.bf16.msra.mxu0 0
        %3250 = vmatprep.subr.bf16.mxu0 0
        %3251 = vmatpush1.bf16.msra.mxu0 0
        %3252 = vmatprep.subr.bf16.mxu0 0
        %3253 = vmatpush1.bf16.msra.mxu0 0
        %3254 = vmatprep.subr.bf16.mxu0 0
        %3255 = vmatpush1.bf16.msra.mxu0 0
        %3256 = vmatprep.mubr.bf16.mxu0 0
        %3257 = vmatmul.mubr.bf16.gmra.mrb[0].mxu0 %v3218
        %v3258 = vpop.f32.mrb[0].mxu0
        %v3259 = vadd.f32 %v282, %v3258
        %v3260 = vpop.f32.mrb[0].mxu0
        %v3261 = vpop.f32.mrb[0].mxu0
        %v3262 = vpop.f32.mrb[0].mxu0
        %3263 = vdwg.mxu0
        %3264 = vst [vmem:[%s280] sm:$0xff] %v3259
        %3265 = vmatprep.subr.bf16.mxu0 0
        %3266 = vmatpush1.bf16.xpose.msra.mxu0 %v3155
        %3267 = vmatprep.subr.bf16.mxu0 0
        %3268 = vmatpush1.bf16.xpose.msra.mxu0 0
        %3269 = vmatprep.subr.bf16.mxu0 0
        %3270 = vmatpush1.bf16.xpose.msra.mxu0 0
        %3271 = vmatprep.subr.bf16.mxu0 0
        %3272 = vmatpush1.bf16.xpose.msra.mxu0 0
        %3273 = vmatprep.subr.bf16.mxu0 0
        %3274 = vmatpush1.bf16.xpose.msra.mxu0 0
        %3275 = vmatprep.subr.bf16.mxu0 0
        %3276 = vmatpush1.bf16.xpose.msra.mxu0 0
        %3277 = vmatprep.subr.bf16.mxu0 0
        %3278 = vmatpush1.bf16.xpose.msra.mxu0 0
        %3279 = vmatprep.subr.bf16.mxu0 0
        %3280 = vmatpush1.bf16.xpose.msra.mxu0 0
        %3281 = vmatprep.subr.bf16.mxu0 0
        %3282 = vmatpush1.bf16.xpose.msra.mxu0 0
        %3283 = vmatprep.subr.bf16.mxu0 0
        %3284 = vmatpush1.bf16.xpose.msra.mxu0 0
        %3285 = vmatprep.subr.bf16.mxu0 0
        %3286 = vmatpush1.bf16.xpose.msra.mxu0 0
        %3287 = vmatprep.subr.bf16.mxu0 0
        %3288 = vmatpush1.bf16.xpose.msra.mxu0 0
        %3289 = vmatprep.subr.bf16.mxu0 0
        %3290 = vmatpush1.bf16.xpose.msra.mxu0 0
        %3291 = vmatprep.subr.bf16.mxu0 0
        %3292 = vmatpush1.bf16.xpose.msra.mxu0 0
        %3293 = vmatprep.subr.bf16.mxu0 0
        %3294 = vmatpush1.bf16.xpose.msra.mxu0 0
        %3295 = vmatprep.subr.bf16.mxu0 0
        %3296 = vmatpush1.bf16.xpose.msra.mxu0 0
        %3297 = vmatprep.mubr.bf16.mxu0 0
        %3298 = vmatmul.mubr.bf16.gmra.mrb[0].mxu0 %v3151
        %v3299 = vpop.f32.mrb[0].mxu0
        %v3300 = vadd.f32 0.0, %v3299
        %v3301 = vpop.f32.mrb[0].mxu0
        %v3302 = vpop.f32.mrb[0].mxu0
        %v3303 = vpop.f32.mrb[0].mxu0
        %3304 = vdwg.mxu0
        %s3305 = scalar_lea.vmem %s243, 8 [#allocation5]
        %v3306 = vld [vmem:[%s3305] sm:$0xff]
        %v3307 = vadd.f32 %v3306, %v3300
        %v3308 = vsel %vm3204, %v3307, -inf
        %3309 = vmax.xlane.f32.xlu0 %v3308
        %v3310 = vpop.xlane.xlu0 %3309
        %v3311 = vsub.f32 %v3307, %v3310
        %v3312 = vmul.f32 %v3311, 1.442695
        %v3313 = vpow.pop %v3312
        %v3314 = vsel %vm3204, %v3313, 0.0
        %3315 = vadd.xlane.f32.xlu0 %v3314
        %v3316 = vpop.xlane.xlu0 %3315
        %v3317 = vrcp.pop %v3316
        %v3318 = vmul.f32 %v3313, %v3317
        %v3319 = vpack.c.bf16 %v3318, %v3318
        %v3321 = vsel %vm3204, %v3319, 0
        %v3324 = vsel %vm3220, %v3159, 0
        %3326 = vmatprep.subr.bf16.mxu0 0
        %3327 = vmatpush1.bf16.msra.mxu0 %v3324
        %3328 = vmatprep.subr.bf16.mxu0 0
        %3329 = vmatpush1.bf16.msra.mxu0 0
        %3330 = vmatprep.subr.bf16.mxu0 0
        %3331 = vmatpush1.bf16.msra.mxu0 0
        %3332 = vmatprep.subr.bf16.mxu0 0
        %3333 = vmatpush1.bf16.msra.mxu0 0
        %3334 = vmatprep.subr.bf16.mxu0 0
        %3335 = vmatpush1.bf16.msra.mxu0 0
        %3336 = vmatprep.subr.bf16.mxu0 0
        %3337 = vmatpush1.bf16.msra.mxu0 0
        %3338 = vmatprep.subr.bf16.mxu0 0
        %3339 = vmatpush1.bf16.msra.mxu0 0
        %3340 = vmatprep.subr.bf16.mxu0 0
        %3341 = vmatpush1.bf16.msra.mxu0 0
        %3342 = vmatprep.subr.bf16.mxu0 0
        %3343 = vmatpush1.bf16.msra.mxu0 0
        %3344 = vmatprep.subr.bf16.mxu0 0
        %3345 = vmatpush1.bf16.msra.mxu0 0
        %3346 = vmatprep.subr.bf16.mxu0 0
        %3347 = vmatpush1.bf16.msra.mxu0 0
        %3348 = vmatprep.subr.bf16.mxu0 0
        %3349 = vmatpush1.bf16.msra.mxu0 0
        %3350 = vmatprep.subr.bf16.mxu0 0
        %3351 = vmatpush1.bf16.msra.mxu0 0
        %3352 = vmatprep.subr.bf16.mxu0 0
        %3353 = vmatpush1.bf16.msra.mxu0 0
        %3354 = vmatprep.subr.bf16.mxu0 0
        %3355 = vmatpush1.bf16.msra.mxu0 0
        %3356 = vmatprep.subr.bf16.mxu0 0
        %3357 = vmatpush1.bf16.msra.mxu0 0
        %3358 = vmatprep.mubr.bf16.mxu0 0
        %3359 = vmatmul.mubr.bf16.gmra.mrb[0].mxu0 %v3321
        %v3360 = vpop.f32.mrb[0].mxu0
        %v3361 = vadd.f32 %v283, %v3360
        %v3362 = vpop.f32.mrb[0].mxu0
        %v3363 = vpop.f32.mrb[0].mxu0
        %v3364 = vpop.f32.mrb[0].mxu0
        %3365 = vdwg.mxu0
        %3366 = vst [vmem:[%s280 + $0x8] sm:$0xff] %v3361
        %3367 = vmatprep.subr.bf16.mxu0 0
        %3368 = vmatpush1.bf16.xpose.msra.mxu0 %v3156
        %3369 = vmatprep.subr.bf16.mxu0 0
        %3370 = vmatpush1.bf16.xpose.msra.mxu0 0
        %3371 = vmatprep.subr.bf16.mxu0 0
        %3372 = vmatpush1.bf16.xpose.msra.mxu0 0
        %3373 = vmatprep.subr.bf16.mxu0 0
        %3374 = vmatpush1.bf16.xpose.msra.mxu0 0
        %3375 = vmatprep.subr.bf16.mxu0 0
        %3376 = vmatpush1.bf16.xpose.msra.mxu0 0
        %3377 = vmatprep.subr.bf16.mxu0 0
        %3378 = vmatpush1.bf16.xpose.msra.mxu0 0
        %3379 = vmatprep.subr.bf16.mxu0 0
        %3380 = vmatpush1.bf16.xpose.msra.mxu0 0
        %3381 = vmatprep.subr.bf16.mxu0 0
        %3382 = vmatpush1.bf16.xpose.msra.mxu0 0
        %3383 = vmatprep.subr.bf16.mxu0 0
        %3384 = vmatpush1.bf16.xpose.msra.mxu0 0
        %3385 = vmatprep.subr.bf16.mxu0 0
        %3386 = vmatpush1.bf16.xpose.msra.mxu0 0
        %3387 = vmatprep.subr.bf16.mxu0 0
        %3388 = vmatpush1.bf16.xpose.msra.mxu0 0
        %3389 = vmatprep.subr.bf16.mxu0 0
        %3390 = vmatpush1.bf16.xpose.msra.mxu0 0
        %3391 = vmatprep.subr.bf16.mxu0 0
        %3392 = vmatpush1.bf16.xpose.msra.mxu0 0
        %3393 = vmatprep.subr.bf16.mxu0 0
        %3394 = vmatpush1.bf16.xpose.msra.mxu0 0
        %3395 = vmatprep.subr.bf16.mxu0 0
        %3396 = vmatpush1.bf16.xpose.msra.mxu0 0
        %3397 = vmatprep.subr.bf16.mxu0 0
        %3398 = vmatpush1.bf16.xpose.msra.mxu0 0
        %3399 = vmatprep.mubr.bf16.mxu0 0
        %3400 = vmatmul.mubr.bf16.gmra.mrb[0].mxu0 %v3152
        %v3401 = vpop.f32.mrb[0].mxu0
        %v3402 = vadd.f32 0.0, %v3401
        %v3403 = vpop.f32.mrb[0].mxu0
        %v3404 = vpop.f32.mrb[0].mxu0
        %v3405 = vpop.f32.mrb[0].mxu0
        %3406 = vdwg.mxu0
        %s3407 = scalar_lea.vmem %s243, 16 [#allocation5]
        %v3408 = vld [vmem:[%s3407] sm:$0xff]
        %v3409 = vadd.f32 %v3408, %v3402
        %v3410 = vsel %vm3204, %v3409, -inf
        %3411 = vmax.xlane.f32.xlu0 %v3410
        %v3412 = vpop.xlane.xlu0 %3411
        %v3413 = vsub.f32 %v3409, %v3412
        %v3414 = vmul.f32 %v3413, 1.442695
        %v3415 = vpow.pop %v3414
        %v3416 = vsel %vm3204, %v3415, 0.0
        %3417 = vadd.xlane.f32.xlu0 %v3416
        %v3418 = vpop.xlane.xlu0 %3417
        %v3419 = vrcp.pop %v3418
        %v3420 = vmul.f32 %v3415, %v3419
        %v3421 = vpack.c.bf16 %v3420, %v3420
        %v3423 = vsel %vm3204, %v3421, 0
        %v3426 = vsel %vm3220, %v3160, 0
        %3428 = vmatprep.subr.bf16.mxu0 0
        %3429 = vmatpush1.bf16.msra.mxu0 %v3426
        %3430 = vmatprep.subr.bf16.mxu0 0
        %3431 = vmatpush1.bf16.msra.mxu0 0
        %3432 = vmatprep.subr.bf16.mxu0 0
        %3433 = vmatpush1.bf16.msra.mxu0 0
        %3434 = vmatprep.subr.bf16.mxu0 0
        %3435 = vmatpush1.bf16.msra.mxu0 0
        %3436 = vmatprep.subr.bf16.mxu0 0
        %3437 = vmatpush1.bf16.msra.mxu0 0
        %3438 = vmatprep.subr.bf16.mxu0 0
        %3439 = vmatpush1.bf16.msra.mxu0 0
        %3440 = vmatprep.subr.bf16.mxu0 0
        %3441 = vmatpush1.bf16.msra.mxu0 0
        %3442 = vmatprep.subr.bf16.mxu0 0
        %3443 = vmatpush1.bf16.msra.mxu0 0
        %3444 = vmatprep.subr.bf16.mxu0 0
        %3445 = vmatpush1.bf16.msra.mxu0 0
        %3446 = vmatprep.subr.bf16.mxu0 0
        %3447 = vmatpush1.bf16.msra.mxu0 0
        %3448 = vmatprep.subr.bf16.mxu0 0
        %3449 = vmatpush1.bf16.msra.mxu0 0
        %3450 = vmatprep.subr.bf16.mxu0 0
        %3451 = vmatpush1.bf16.msra.mxu0 0
        %3452 = vmatprep.subr.bf16.mxu0 0
        %3453 = vmatpush1.bf16.msra.mxu0 0
        %3454 = vmatprep.subr.bf16.mxu0 0
        %3455 = vmatpush1.bf16.msra.mxu0 0
        %3456 = vmatprep.subr.bf16.mxu0 0
        %3457 = vmatpush1.bf16.msra.mxu0 0
        %3458 = vmatprep.subr.bf16.mxu0 0
        %3459 = vmatpush1.bf16.msra.mxu0 0
        %3460 = vmatprep.mubr.bf16.mxu0 0
        %3461 = vmatmul.mubr.bf16.gmra.mrb[0].mxu0 %v3423
        %v3462 = vpop.f32.mrb[0].mxu0
        %v3463 = vadd.f32 %v284, %v3462
        %v3464 = vpop.f32.mrb[0].mxu0
        %v3465 = vpop.f32.mrb[0].mxu0
        %v3466 = vpop.f32.mrb[0].mxu0
        %3467 = vdwg.mxu0
        %3468 = vst [vmem:[%s280 + $0x10] sm:$0xff] %v3463
        %3469 = vmatprep.subr.bf16.mxu0 0
        %3470 = vmatpush1.bf16.xpose.msra.mxu0 %v3157
        %3471 = vmatprep.subr.bf16.mxu0 0
        %3472 = vmatpush1.bf16.xpose.msra.mxu0 0
        %3473 = vmatprep.subr.bf16.mxu0 0
        %3474 = vmatpush1.bf16.xpose.msra.mxu0 0
        %3475 = vmatprep.subr.bf16.mxu0 0
        %3476 = vmatpush1.bf16.xpose.msra.mxu0 0
        %3477 = vmatprep.subr.bf16.mxu0 0
        %3478 = vmatpush1.bf16.xpose.msra.mxu0 0
        %3479 = vmatprep.subr.bf16.mxu0 0
        %3480 = vmatpush1.bf16.xpose.msra.mxu0 0
        %3481 = vmatprep.subr.bf16.mxu0 0
        %3482 = vmatpush1.bf16.xpose.msra.mxu0 0
        %3483 = vmatprep.subr.bf16.mxu0 0
        %3484 = vmatpush1.bf16.xpose.msra.mxu0 0
        %3485 = vmatprep.subr.bf16.mxu0 0
        %3486 = vmatpush1.bf16.xpose.msra.mxu0 0
        %3487 = vmatprep.subr.bf16.mxu0 0
        %3488 = vmatpush1.bf16.xpose.msra.mxu0 0
        %3489 = vmatprep.subr.bf16.mxu0 0
        %3490 = vmatpush1.bf16.xpose.msra.mxu0 0
        %3491 = vmatprep.subr.bf16.mxu0 0
        %3492 = vmatpush1.bf16.xpose.msra.mxu0 0
        %3493 = vmatprep.subr.bf16.mxu0 0
        %3494 = vmatpush1.bf16.xpose.msra.mxu0 0
        %3495 = vmatprep.subr.bf16.mxu0 0
        %3496 = vmatpush1.bf16.xpose.msra.mxu0 0
        %3497 = vmatprep.subr.bf16.mxu0 0
        %3498 = vmatpush1.bf16.xpose.msra.mxu0 0
        %3499 = vmatprep.subr.bf16.mxu0 0
        %3500 = vmatpush1.bf16.xpose.msra.mxu0 0
        %3501 = vmatprep.mubr.bf16.mxu0 0
        %3502 = vmatmul.mubr.bf16.gmra.mrb[0].mxu0 %v3153
        %v3503 = vpop.f32.mrb[0].mxu0
        %v3504 = vadd.f32 0.0, %v3503
        %v3505 = vpop.f32.mrb[0].mxu0
        %v3506 = vpop.f32.mrb[0].mxu0
        %v3507 = vpop.f32.mrb[0].mxu0
        %3508 = vdwg.mxu0
        %s3509 = scalar_lea.vmem %s243, 24 [#allocation5]
        %v3510 = vld [vmem:[%s3509] sm:$0xff]
        %v3511 = vadd.f32 %v3510, %v3504
        %v3512 = vsel %vm3204, %v3511, -inf
        %3513 = vmax.xlane.f32.xlu0 %v3512
        %v3514 = vpop.xlane.xlu0 %3513
        %v3515 = vsub.f32 %v3511, %v3514
        %v3516 = vmul.f32 %v3515, 1.442695
        %v3517 = vpow.pop %v3516
        %v3518 = vsel %vm3204, %v3517, 0.0
        %3519 = vadd.xlane.f32.xlu0 %v3518
        %v3520 = vpop.xlane.xlu0 %3519
        %v3521 = vrcp.pop %v3520
        %v3522 = vmul.f32 %v3517, %v3521
        %v3523 = vpack.c.bf16 %v3522, %v3522
        %v3525 = vsel %vm3204, %v3523, 0
        %v3528 = vsel %vm3220, %v3161, 0
        %3530 = vmatprep.subr.bf16.mxu0 0
        %3531 = vmatpush1.bf16.msra.mxu0 %v3528
        %3532 = vmatprep.subr.bf16.mxu0 0
        %3533 = vmatpush1.bf16.msra.mxu0 0
        %3534 = vmatprep.subr.bf16.mxu0 0
        %3535 = vmatpush1.bf16.msra.mxu0 0
        %3536 = vmatprep.subr.bf16.mxu0 0
        %3537 = vmatpush1.bf16.msra.mxu0 0
        %3538 = vmatprep.subr.bf16.mxu0 0
        %3539 = vmatpush1.bf16.msra.mxu0 0
        %3540 = vmatprep.subr.bf16.mxu0 0
        %3541 = vmatpush1.bf16.msra.mxu0 0
        %3542 = vmatprep.subr.bf16.mxu0 0
        %3543 = vmatpush1.bf16.msra.mxu0 0
        %3544 = vmatprep.subr.bf16.mxu0 0
        %3545 = vmatpush1.bf16.msra.mxu0 0
        %3546 = vmatprep.subr.bf16.mxu0 0
        %3547 = vmatpush1.bf16.msra.mxu0 0
        %3548 = vmatprep.subr.bf16.mxu0 0
        %3549 = vmatpush1.bf16.msra.mxu0 0
        %3550 = vmatprep.subr.bf16.mxu0 0
        %3551 = vmatpush1.bf16.msra.mxu0 0
        %3552 = vmatprep.subr.bf16.mxu0 0
        %3553 = vmatpush1.bf16.msra.mxu0 0
        %3554 = vmatprep.subr.bf16.mxu0 0
        %3555 = vmatpush1.bf16.msra.mxu0 0
        %3556 = vmatprep.subr.bf16.mxu0 0
        %3557 = vmatpush1.bf16.msra.mxu0 0
        %3558 = vmatprep.subr.bf16.mxu0 0
        %3559 = vmatpush1.bf16.msra.mxu0 0
        %3560 = vmatprep.subr.bf16.mxu0 0
        %3561 = vmatpush1.bf16.msra.mxu0 0
        %3562 = vmatprep.mubr.bf16.mxu0 0
        %3563 = vmatmul.mubr.bf16.gmra.mrb[0].mxu0 %v3525
        %v3564 = vpop.f32.mrb[0].mxu0
        %v3565 = vadd.f32 %v285, %v3564
        %v3566 = vpop.f32.mrb[0].mxu0
        %v3567 = vpop.f32.mrb[0].mxu0
        %v3568 = vpop.f32.mrb[0].mxu0
        %3569 = vdwg.mxu0
        %3570 = vst [vmem:[%s280 + $0x18] sm:$0xff] %v3565
        %s3571 = sand.u32 %s127, 1
        %s3572 = scalar_lea.sflag [#allocation4], %s3571
        %s3573 = sand.u32 %s127, 1
        %s3574 = smul.addr %s3573, 32
        %s3575 = scalar_lea.vmem [#allocation10], %s3574
        // Predicated region
        $region53: #{tpu_custom_call.1} parent=35 // pred_check
          %p3576 = pneg %p137
        $region54: #{tpu_custom_call.1} parent=35 // pred_check_branch
          %3578 = sbr.rel (%p3576) target = $region56
        $region55: #{tpu_custom_call.1} parent=35 // pred_region
          %s3580 = ssub.s32 512, 512
          %3581 = vsyncadd %s3572, %s3580
          %s3582 = smul.addr %s25, 4
          %s3583 = smul.addr %s3582, 128
          %s3584 = scalar_lea.hbm %s4, %s3583
          %s3586 = sshll.u32 %s3575, 4
          %s3587 = int_to_ptr.vmem [resolvable:$true] %s3586
          %3589 = dma.vmem_to_hbm [thread:$0]  %s3587, 512, %s3584, %s3572
        $region56: #{tpu_custom_call.1} parent=35 // pred_fallthru
          _
      $region36: #{tpu_custom_call.1} parent=5 // pred_fallthru
        _
      %p3590 = scmp.le.s32.totalorder 2, %s20
      // Predicated region
      $region57: #{tpu_custom_call.1} parent=5 // pred_check
        %p3591 = pneg %p3590
      $region58: #{tpu_custom_call.1} parent=5 // pred_check_branch
        %3593 = sbr.rel (%p3591) target = $region60
      $region59: #{tpu_custom_call.1} parent=5 // pred_region
        %s3594 = ssub.s32 %s20, 2
        // Predicated region
        $region61: #{tpu_custom_call.1} parent=59 // pred_check
          %p3595 = pneg %p143
        $region62: #{tpu_custom_call.1} parent=59 // pred_check_branch
          %3597 = sbr.rel (%p3595) target = $region64
        $region63: #{tpu_custom_call.1} parent=59 // pred_region
          %s3598 = sand.u32 %s128, 1
          %s3599 = scalar_lea.sflag [#allocation4], %s3598
          %s3600 = sand.u32 %s128, 1
          %s3601 = smul.addr %s3600, 32
          %s3602 = scalar_lea.vmem [#allocation10], %s3601
          %3603 = dma.done %s3599, 512
        $region64: #{tpu_custom_call.1} parent=59 // pred_fallthru
          _
      $region60: #{tpu_custom_call.1} parent=5 // pred_fallthru
        _
    $region6: #{tpu_custom_call.1} parent=1 // loop_footer
      %s24 = sadd.s32 1, %s20
    $region7: #{tpu_custom_call.1} parent=1 // loop_footer_branch
      %19 = sbr.rel target = $region3
    $region8: #{tpu_custom_call.1} parent=1 // loop_exit
      _
    %3604 = vsyncpa [#allocation3], 1
    %s3605 = scalar_lea.sflag [#allocation3], 1
    %3606 = vsyncpa %s3605, 1
    %3607 = vsyncpa [#allocation6], 1
    %s3608 = scalar_lea.sflag [#allocation6], 1
    %3609 = vsyncpa %s3608, 1
    %3610 = vsyncpa [#allocation9], 1
    %3611 = vsyncpa [#allocation4], 1
    %s3612 = scalar_lea.sflag [#allocation4], 1
    %3613 = vsyncpa %s3612, 1

</llo_original>
